<compile_context>
chip_gen: v5e
topology: v5e:2x2
jax: 0.10.0
libtpu: 0.0.40
codegen_flags: <defaults>
</compile_context>

<pallas_src>
import functools

import jax
import jax.numpy as jnp
from jax import lax
from jax.experimental import pallas as pl
from jax.experimental.pallas import tpu as pltpu


TM_MAX = 128       # M tile upper bound


def _round_up(a: int, b: int) -> int:
    return (a + b - 1) // b * b


# ----------------------------- Pallas kernel ------------------------------ #

def _fused_conv_kernel(p_ref, w1_ref, w2_ref, bias_ref, o_ref):
    """Fused  (patches @ W1^T) -> bf16 -> @ W2 + fused_bias  in one shot.

    p_ref   : (tm, K_pad)  bf16  im2col patch tile (K on lanes)
    w1_ref  : (64, K_pad)  bf16  conv1 weight, K lane-dense (A @ B^T on MXU)
    w2_ref  : (64, 256)    bf16  1x1-conv weight
    bias_ref: (1, 256)     f32   fused bias  b1 @ W2 + b2
    o_ref   : (tm, 256)    f32   lane-dense output tile (2 x 128 lanes)
    """
    # conv1 as a single full-K GEMM: contract the lane (K) dim of both operands.
    h = lax.dot_general(
        p_ref[...], w1_ref[...],
        dimension_numbers=(((1,), (1,)), ((), ())),
        preferred_element_type=jnp.float32,
    )                                                        # (tm, 64) f32
    # conv2 (1x1) + fused bias.
    o_ref[...] = (
        jnp.dot(h.astype(jnp.bfloat16), w2_ref[...],
                preferred_element_type=jnp.float32)
        + bias_ref[...]
    ).astype(o_ref.dtype)


def fused_conv_gemm(patches, w1, w2, bias, *, tm):
    """patches (M_pad, K_pad) bf16, w1 (64, K_pad) bf16, w2 (64, 256) bf16."""
    m_pad, k_pad = patches.shape
    oc1, k_pad2 = w1.shape
    oc2 = w2.shape[1]
    assert k_pad == k_pad2 and m_pad % tm == 0 and k_pad % 128 == 0
    grid = (m_pad // tm,)
    return pl.pallas_call(
        _fused_conv_kernel,
        out_shape=jax.ShapeDtypeStruct((m_pad, oc2), jnp.float32),
        grid_spec=pltpu.PrefetchScalarGridSpec(
            num_scalar_prefetch=0,
            grid=grid,
            in_specs=[
                pl.BlockSpec((tm, k_pad), lambda i: (i, 0)),    # patches
                # Constant-index blocks below: Pallas does not re-DMA a block
                # whose index is unchanged across grid steps.
                pl.BlockSpec((oc1, k_pad), lambda i: (0, 0)),   # W1 (64, K)
                pl.BlockSpec((oc1, oc2), lambda i: (0, 0)),     # W2 (64, 256)
                pl.BlockSpec((1, oc2), lambda i: (0, 0)),       # fused bias
            ],
            out_specs=pl.BlockSpec((tm, oc2), lambda i: (i, 0)),
        ),
        compiler_params=pltpu.CompilerParams(
            dimension_semantics=("parallel",),
            vmem_limit_bytes=32 * 1024 * 1024,   # full-K blocks @ TM=128 on v5e
        ),
    )(patches, w1, w2, bias)


# ------------------------------ model wrapper ------------------------------ #

def prepare_params(wa, ba, wb, bb):
    """One-time weight relayout, kept OUT of the per-call jit path.

    wa: (OC1, IC, KH, KW) conv1 weight -> (OC1, K_pad) bf16, K lane-dense,
        feature order (dh, dw, c) to match the patch builder below.
    wb: (OC2, OC1, 1, 1)  conv2 weight -> (OC1, OC2) bf16.
    Returns (W1, W2, fused_bias) with fused_bias = b1 @ W2 + b2 (f32).
    """
    oc1, ic, kh, kw = wa.shape
    k = kh * kw * ic
    k_pad = _round_up(k, 128)
    w1m = wa.transpose(0, 2, 3, 1).reshape(oc1, k)            # (OC1, KH*KW*C)
    w1m = jnp.pad(w1m, ((0, 0), (0, k_pad - k))).astype(jnp.bfloat16)
    oc2 = wb.shape[0]
    w2m = wb.reshape(oc2, oc1).T.astype(jnp.bfloat16)          # (OC1, OC2)
    bias = (ba.reshape(1, oc1).astype(jnp.float32)
            @ w2m.astype(jnp.float32)
            + bb.reshape(1, oc2).astype(jnp.float32))          # (1, OC2) f32
    return w1m, w2m, bias


def model_forward(x, w1m, w2m, bias, *, kh, kw):
    """x: (N, C, H, W) f32 -> (N, 256, OH, OW) f32 (matches the PyTorch module)."""
    n, c, h, w = x.shape
    oh, ow = h - kh + 1, w - kw + 1
    k = kh * kw * c
    k_pad = w1m.shape[1]

    # im2col as KH*KW shifted NHWC slices (pure, fusable data movement; no
    # one-hot identity filter conv).  Feature order (dh, dw, c), c innermost,
    # matching prepare_params.  The K zero-pad rides in the same concatenate.
    x_nhwc = x.transpose(0, 2, 3, 1).astype(jnp.bfloat16)      # (N, H, W, C)
    cols = [x_nhwc[:, dh:dh + oh, dw:dw + ow, :]
            for dh in range(kh) for dw in range(kw)]
    if k_pad > k:
        cols.append(jnp.zeros((n, oh, ow, k_pad - k), jnp.bfloat16))
    patches = jnp.concatenate(cols, axis=-1).reshape(n * oh * ow, k_pad)

    m = n * oh * ow
    tm = TM_MAX if m >= TM_MAX else _round_up(m, 8)
    m_pad = _round_up(m, tm)
    if m_pad > m:
        # Only the last partial M tile is padded; rows >= m are sliced off below.
        patches = jnp.pad(patches, ((0, m_pad - m), (0, 0)))

    out = fused_conv_gemm(patches, w1m, w2m, bias, tm=tm)       # (M_pad, 256)
    # Tiny relayout back to NCHW to preserve the module's output convention.
    return out[:m].reshape(n, oh, ow, -1).transpose(0, 3, 1, 2)


# ------------------------------ param init -------------------------------- #

def init_params(key):
    """PyTorch-style Conv2d default init (uniform +/- 1/sqrt(fan_in))."""
    k0, k1, k2, k3 = jax.random.split(key, 4)
    fan0 = 100 * 15 * 15
    bound0 = 1.0 / jnp.sqrt(fan0)
    wa = jax.random.uniform(k0, (64, 100, 15, 15), jnp.float32, -bound0, bound0)
    ba = jax.random.uniform(k1, (64,), jnp.float32, -bound0, bound0)
    fan1 = 64 * 1 * 1
    bound1 = 1.0 / jnp.sqrt(fan1)
    wb = jax.random.uniform(k2, (256, 64, 1, 1), jnp.float32, -bound1, bound1)
    bb = jax.random.uniform(k3, (256,), jnp.float32, -bound1, bound1)
    return wa, ba, wb, bb


# --------------------------------- main ------------------------------------ #

if __name__ == "__main__":
    key = jax.random.PRNGKey(0)
    kx, kp = jax.random.split(key)

    # Small shapes consistent with the module: channel dims fixed by the module
    # (100 -> 64 -> 256); batch=2, spatial 16x16 (>= kernel 15).
    x = jax.random.normal(kx, (2, 100, 16, 16), jnp.float32)
    wa, ba, wb, bb = init_params(kp)

    w1m, w2m, bias = prepare_params(wa, ba, wb, bb)   # one-time weight relayout
    fwd = jax.jit(functools.partial(model_forward, kh=15, kw=15))
    out = jax.block_until_ready(fwd(x, w1m, w2m, bias))
    assert out.shape == (2, 256, 2, 2), out.shape

    # Reference: XLA's native f32 convolutions with original weight layout.
    ref1 = lax.conv_general_dilated(
        x, wa, (1, 1), "VALID",
        dimension_numbers=("NCHW", "OIHW", "NCHW")) + ba.reshape(1, -1, 1, 1)
    ref2 = lax.conv_general_dilated(
        ref1, wb, (1, 1), "VALID",
        dimension_numbers=("NCHW", "OIHW", "NCHW")) + bb.reshape(1, -1, 1, 1)
    # bf16 activation/weight stream -> small numeric delta; covered by tol.
    assert jnp.allclose(out, ref2, rtol=2e-2, atol=2e-2), "mismatch vs reference conv"

    print("KERNEL_OK")
</pallas_src>

<mosaic_0001>
module attributes {stable_mosaic.version = 11 : i64} {
  func.func @_fused_conv_kernel(%arg0: i32, %arg1: memref<8x22528xbf16, #tpu.memory_space<vmem>>, %arg2: memref<64x22528xbf16, #tpu.memory_space<vmem>>, %arg3: memref<64x256xbf16, #tpu.memory_space<vmem>>, %arg4: memref<1x256xf32, #tpu.memory_space<vmem>>, %arg5: memref<8x256xf32, #tpu.memory_space<vmem>>) attributes {dimension_semantics = [#tpu.dimension_semantics<parallel>], iteration_bounds = array<i64: 1>, scalar_prefetch = 0 : i64, scratch_operands = 0 : i64, tpu.core_type = #tpu.core_type<tc>, window_params = [{transform_indices = @transform_0, window_bounds = array<i64: 8, 22528>}, {pipeline_mode = #tpu.pipeline_mode<synchronous>, transform_indices = @transform_1, window_bounds = array<i64: 64, 22528>}, {pipeline_mode = #tpu.pipeline_mode<synchronous>, transform_indices = @transform_2, window_bounds = array<i64: 64, 256>}, {pipeline_mode = #tpu.pipeline_mode<synchronous>, transform_indices = @transform_3, window_bounds = array<i64: 1, 256>}, {transform_indices = @transform_4, window_bounds = array<i64: 8, 256>}]} {
    %c0 = arith.constant 0 : index
    %c0_0 = arith.constant 0 : index
    %0 = vector.load %arg1[%c0, %c0_0] : memref<8x22528xbf16, #tpu.memory_space<vmem>>, vector<8x22528xbf16>
    %c0_1 = arith.constant 0 : index
    %c0_2 = arith.constant 0 : index
    %1 = vector.load %arg2[%c0_1, %c0_2] : memref<64x22528xbf16, #tpu.memory_space<vmem>>, vector<64x22528xbf16>
    %cst = arith.constant dense<0.000000e+00> : vector<8x64xf32>
    %2 = tpu.matmul %0, %1, %cst {dimension_numbers = #tpu.dot_dimension_numbers<[1], [1], [0], [0], [0, 0, 1, 0], [], []>} : vector<8x22528xbf16>, vector<64x22528xbf16>, vector<8x64xf32> -> vector<8x64xf32>
    %3 = arith.truncf %2 : vector<8x64xf32> to vector<8x64xbf16>
    %c0_3 = arith.constant 0 : index
    %c0_4 = arith.constant 0 : index
    %4 = vector.load %arg3[%c0_3, %c0_4] : memref<64x256xbf16, #tpu.memory_space<vmem>>, vector<64x256xbf16>
    %cst_5 = arith.constant dense<0.000000e+00> : vector<8x256xf32>
    %5 = tpu.matmul %3, %4, %cst_5 {dimension_numbers = #tpu.dot_dimension_numbers<[1], [0], [0], [1], [0, 0, 1, 1], [], []>} : vector<8x64xbf16>, vector<64x256xbf16>, vector<8x256xf32> -> vector<8x256xf32>
    %c0_6 = arith.constant 0 : index
    %c0_7 = arith.constant 0 : index
    %6 = vector.load %arg4[%c0_6, %c0_7] : memref<1x256xf32, #tpu.memory_space<vmem>>, vector<1x256xf32>
    %7 = vector.broadcast %6 : vector<1x256xf32> to vector<8x256xf32>
    %8 = arith.addf %5, %7 : vector<8x256xf32>
    %c0_8 = arith.constant 0 : index
    %c0_9 = arith.constant 0 : index
    %9 = vector.load %arg5[%c0_8, %c0_9] : memref<8x256xf32, #tpu.memory_space<vmem>>, vector<8x256xf32>
    tpu.vector_store %arg5[%c0_8, %c0_9], %8 {strides = array<i32>} : memref<8x256xf32, #tpu.memory_space<vmem>>, vector<8x256xf32>,
    return
  }
  func.func @transform_0(%arg0: i32) -> (i32, i32) {
    %c0_i32 = arith.constant 0 : i32
    %c0_i32_0 = arith.constant 0 : i32
    return %arg0, %c0_i32 : i32, i32
  }
  func.func @transform_1(%arg0: i32) -> (i32, i32) {
    %c0_i32 = arith.constant 0 : i32
    %c0_i32_0 = arith.constant 0 : i32
    %c0_i32_1 = arith.constant 0 : i32
    return %c0_i32, %c0_i32_0 : i32, i32
  }
  func.func @transform_2(%arg0: i32) -> (i32, i32) {
    %c0_i32 = arith.constant 0 : i32
    %c0_i32_0 = arith.constant 0 : i32
    %c0_i32_1 = arith.constant 0 : i32
    return %c0_i32, %c0_i32_0 : i32, i32
  }
  func.func @transform_3(%arg0: i32) -> (i32, i32) {
    %c0_i32 = arith.constant 0 : i32
    %c0_i32_0 = arith.constant 0 : i32
    %c0_i32_1 = arith.constant 0 : i32
    return %c0_i32, %c0_i32_0 : i32, i32
  }
  func.func @transform_4(%arg0: i32) -> (i32, i32) {
    %c0_i32 = arith.constant 0 : i32
    %c0_i32_0 = arith.constant 0 : i32
    return %arg0, %c0_i32 : i32, i32
  }
}

</mosaic_0001>

<llo_original>
// kernel: model_forward.1
$region0: #{model_forward.1}
  #allocation0 [shape = 'u32[]', space=smem, size = 0x4, offset = 0x4, fixed_abs, tag = 'smem constant byte address 0x4 - core index']
  #allocation1 [shape = 'u32[72,128]{1,0:T(1,128)}', space=vmem, size = 0x9000, scoped, tag = 'internal scratch']
  %s0 = inlined_call_operand.vmem [shape: bf16[8,22528], index: 0, kind: input, shape index: {}]
  %s1 = inlined_call_operand.vmem [shape: bf16[64,22528], index: 1, kind: input, shape index: {}]
  %s2 = inlined_call_operand.vmem [shape: bf16[64,256], index: 2, kind: input, shape index: {}]
  %s3 = inlined_call_operand.vmem [shape: f32[1,256], index: 3, kind: input, shape index: {}]
  %s4 = inlined_call_operand.vmem [shape: f32[8,256], index: 4, kind: output, shape index: {}]
  %s5 = sld [smem:[#allocation0]]
  $region26: #{model_forward.1} parent=0
    _
  %s7 = ssub.s32 1, %s5
  %s8 = scalar_select 0, %s7, %s5
  // Predicated region
  $region2: #{model_forward.1} parent=0 // pred_check
    _
  $region3: #{model_forward.1} parent=0 // pred_check_branch
    %10 = sbr.rel (0) target = $region5
  $region4: #{model_forward.1} parent=0 // pred_region
    _
  $region5: #{model_forward.1} parent=0 // pred_fallthru
    _
  // Predicated region
  $region6: #{model_forward.1} parent=0 // pred_check
    _
  $region7: #{model_forward.1} parent=0 // pred_check_branch
    %12 = sbr.rel (0) target = $region9
  $region8: #{model_forward.1} parent=0 // pred_region
    _
  $region9: #{model_forward.1} parent=0 // pred_fallthru
    _
  // Predicated region
  $region10: #{model_forward.1} parent=0 // pred_check
    _
  $region11: #{model_forward.1} parent=0 // pred_check_branch
    %14 = sbr.rel (0) target = $region13
  $region12: #{model_forward.1} parent=0 // pred_region
    _
  $region13: #{model_forward.1} parent=0 // pred_fallthru
    _
  // Predicated region
  $region14: #{model_forward.1} parent=0 // pred_check
    _
  $region15: #{model_forward.1} parent=0 // pred_check_branch
    %16 = sbr.rel (0) target = $region17
  $region16: #{model_forward.1} parent=0 // pred_region
    _
  $region17: #{model_forward.1} parent=0 // pred_fallthru
    _
  %v18 = vld [vmem:[%s0] sm:$0xff]
  %v19 = vld [vmem:[%s0 + $0x8] sm:$0xff]
  %v20 = vld [vmem:[%s0 + $0x10] sm:$0xff]
  %v21 = vld [vmem:[%s0 + $0x18] sm:$0xff]
  %v22 = vld [vmem:[%s0 + $0x20] sm:$0xff]
  %v23 = vld [vmem:[%s0 + $0x28] sm:$0xff]
  %v24 = vld [vmem:[%s0 + $0x30] sm:$0xff]
  %v25 = vld [vmem:[%s0 + $0x38] sm:$0xff]
  %v26 = vld [vmem:[%s0 + $0x40] sm:$0xff]
  %v27 = vld [vmem:[%s0 + $0x48] sm:$0xff]
  %v28 = vld [vmem:[%s0 + $0x50] sm:$0xff]
  %v29 = vld [vmem:[%s0 + $0x58] sm:$0xff]
  %v30 = vld [vmem:[%s0 + $0x60] sm:$0xff]
  %v31 = vld [vmem:[%s0 + $0x68] sm:$0xff]
  %v32 = vld [vmem:[%s0 + $0x70] sm:$0xff]
  %v33 = vld [vmem:[%s0 + $0x78] sm:$0xff]
  %v34 = vld [vmem:[%s0 + $0x80] sm:$0xff]
  %v35 = vld [vmem:[%s0 + $0x88] sm:$0xff]
  %v36 = vld [vmem:[%s0 + $0x90] sm:$0xff]
  %v37 = vld [vmem:[%s0 + $0x98] sm:$0xff]
  %v38 = vld [vmem:[%s0 + $0xa0] sm:$0xff]
  %v39 = vld [vmem:[%s0 + $0xa8] sm:$0xff]
  %v40 = vld [vmem:[%s0 + $0xb0] sm:$0xff]
  %v41 = vld [vmem:[%s0 + $0xb8] sm:$0xff]
  %v42 = vld [vmem:[%s0 + $0xc0] sm:$0xff]
  %v43 = vld [vmem:[%s0 + $0xc8] sm:$0xff]
  %v44 = vld [vmem:[%s0 + $0xd0] sm:$0xff]
  %v45 = vld [vmem:[%s0 + $0xd8] sm:$0xff]
  %v46 = vld [vmem:[%s0 + $0xe0] sm:$0xff]
  %v47 = vld [vmem:[%s0 + $0xe8] sm:$0xff]
  %v48 = vld [vmem:[%s0 + $0xf0] sm:$0xff]
  %v49 = vld [vmem:[%s0 + $0xf8] sm:$0xff]
  %v50 = vld [vmem:[%s0 + $0x100] sm:$0xff]
  %v51 = vld [vmem:[%s0 + $0x108] sm:$0xff]
  %v52 = vld [vmem:[%s0 + $0x110] sm:$0xff]
  %v53 = vld [vmem:[%s0 + $0x118] sm:$0xff]
  %v54 = vld [vmem:[%s0 + $0x120] sm:$0xff]
  %v55 = vld [vmem:[%s0 + $0x128] sm:$0xff]
  %v56 = vld [vmem:[%s0 + $0x130] sm:$0xff]
  %v57 = vld [vmem:[%s0 + $0x138] sm:$0xff]
  %v58 = vld [vmem:[%s0 + $0x140] sm:$0xff]
  %v59 = vld [vmem:[%s0 + $0x148] sm:$0xff]
  %v60 = vld [vmem:[%s0 + $0x150] sm:$0xff]
  %v61 = vld [vmem:[%s0 + $0x158] sm:$0xff]
  %v62 = vld [vmem:[%s0 + $0x160] sm:$0xff]
  %v63 = vld [vmem:[%s0 + $0x168] sm:$0xff]
  %v64 = vld [vmem:[%s0 + $0x170] sm:$0xff]
  %v65 = vld [vmem:[%s0 + $0x178] sm:$0xff]
  %v66 = vld [vmem:[%s0 + $0x180] sm:$0xff]
  %v67 = vld [vmem:[%s0 + $0x188] sm:$0xff]
  %v68 = vld [vmem:[%s0 + $0x190] sm:$0xff]
  %v69 = vld [vmem:[%s0 + $0x198] sm:$0xff]
  %v70 = vld [vmem:[%s0 + $0x1a0] sm:$0xff]
  %v71 = vld [vmem:[%s0 + $0x1a8] sm:$0xff]
  %v72 = vld [vmem:[%s0 + $0x1b0] sm:$0xff]
  %v73 = vld [vmem:[%s0 + $0x1b8] sm:$0xff]
  %v74 = vld [vmem:[%s0 + $0x1c0] sm:$0xff]
  %v75 = vld [vmem:[%s0 + $0x1c8] sm:$0xff]
  %v76 = vld [vmem:[%s0 + $0x1d0] sm:$0xff]
  %v77 = vld [vmem:[%s0 + $0x1d8] sm:$0xff]
  %v78 = vld [vmem:[%s0 + $0x1e0] sm:$0xff]
  %v79 = vld [vmem:[%s0 + $0x1e8] sm:$0xff]
  %v80 = vld [vmem:[%s0 + $0x1f0] sm:$0xff]
  %v81 = vld [vmem:[%s0 + $0x1f8] sm:$0xff]
  %v82 = vld [vmem:[%s0 + $0x200] sm:$0xff]
  %v83 = vld [vmem:[%s0 + $0x208] sm:$0xff]
  %v84 = vld [vmem:[%s0 + $0x210] sm:$0xff]
  %v85 = vld [vmem:[%s0 + $0x218] sm:$0xff]
  %v86 = vld [vmem:[%s0 + $0x220] sm:$0xff]
  %v87 = vld [vmem:[%s0 + $0x228] sm:$0xff]
  %v88 = vld [vmem:[%s0 + $0x230] sm:$0xff]
  %v89 = vld [vmem:[%s0 + $0x238] sm:$0xff]
  %v90 = vld [vmem:[%s0 + $0x240] sm:$0xff]
  %v91 = vld [vmem:[%s0 + $0x248] sm:$0xff]
  %v92 = vld [vmem:[%s0 + $0x250] sm:$0xff]
  %v93 = vld [vmem:[%s0 + $0x258] sm:$0xff]
  %v94 = vld [vmem:[%s0 + $0x260] sm:$0xff]
  %v95 = vld [vmem:[%s0 + $0x268] sm:$0xff]
  %v96 = vld [vmem:[%s0 + $0x270] sm:$0xff]
  %v97 = vld [vmem:[%s0 + $0x278] sm:$0xff]
  %v98 = vld [vmem:[%s0 + $0x280] sm:$0xff]
  %v99 = vld [vmem:[%s0 + $0x288] sm:$0xff]
  %v100 = vld [vmem:[%s0 + $0x290] sm:$0xff]
  %v101 = vld [vmem:[%s0 + $0x298] sm:$0xff]
  %v102 = vld [vmem:[%s0 + $0x2a0] sm:$0xff]
  %v103 = vld [vmem:[%s0 + $0x2a8] sm:$0xff]
  %v104 = vld [vmem:[%s0 + $0x2b0] sm:$0xff]
  %v105 = vld [vmem:[%s0 + $0x2b8] sm:$0xff]
  %v106 = vld [vmem:[%s1] sm:$0xff]
  %v107 = vld [vmem:[%s1 + $0x8] sm:$0xff]
  %v108 = vld [vmem:[%s1 + $0x10] sm:$0xff]
  %v109 = vld [vmem:[%s1 + $0x18] sm:$0xff]
  %v110 = vld [vmem:[%s1 + $0x20] sm:$0xff]
  %v111 = vld [vmem:[%s1 + $0x28] sm:$0xff]
  %v112 = vld [vmem:[%s1 + $0x30] sm:$0xff]
  %v113 = vld [vmem:[%s1 + $0x38] sm:$0xff]
  %v114 = vld [vmem:[%s1 + $0x40] sm:$0xff]
  %v115 = vld [vmem:[%s1 + $0x48] sm:$0xff]
  %v116 = vld [vmem:[%s1 + $0x50] sm:$0xff]
  %v117 = vld [vmem:[%s1 + $0x58] sm:$0xff]
  %v118 = vld [vmem:[%s1 + $0x60] sm:$0xff]
  %v119 = vld [vmem:[%s1 + $0x68] sm:$0xff]
  %v120 = vld [vmem:[%s1 + $0x70] sm:$0xff]
  %v121 = vld [vmem:[%s1 + $0x78] sm:$0xff]
  %v122 = vld [vmem:[%s1 + $0x80] sm:$0xff]
  %v123 = vld [vmem:[%s1 + $0x88] sm:$0xff]
  %v124 = vld [vmem:[%s1 + $0x90] sm:$0xff]
  %v125 = vld [vmem:[%s1 + $0x98] sm:$0xff]
  %v126 = vld [vmem:[%s1 + $0xa0] sm:$0xff]
  %v127 = vld [vmem:[%s1 + $0xa8] sm:$0xff]
  %v128 = vld [vmem:[%s1 + $0xb0] sm:$0xff]
  %v129 = vld [vmem:[%s1 + $0xb8] sm:$0xff]
  %v130 = vld [vmem:[%s1 + $0xc0] sm:$0xff]
  %v131 = vld [vmem:[%s1 + $0xc8] sm:$0xff]
  %v132 = vld [vmem:[%s1 + $0xd0] sm:$0xff]
  %v133 = vld [vmem:[%s1 + $0xd8] sm:$0xff]
  %v134 = vld [vmem:[%s1 + $0xe0] sm:$0xff]
  %v135 = vld [vmem:[%s1 + $0xe8] sm:$0xff]
  %v136 = vld [vmem:[%s1 + $0xf0] sm:$0xff]
  %v137 = vld [vmem:[%s1 + $0xf8] sm:$0xff]
  %v138 = vld [vmem:[%s1 + $0x100] sm:$0xff]
  %v139 = vld [vmem:[%s1 + $0x108] sm:$0xff]
  %v140 = vld [vmem:[%s1 + $0x110] sm:$0xff]
  %v141 = vld [vmem:[%s1 + $0x118] sm:$0xff]
  %v142 = vld [vmem:[%s1 + $0x120] sm:$0xff]
  %v143 = vld [vmem:[%s1 + $0x128] sm:$0xff]
  %v144 = vld [vmem:[%s1 + $0x130] sm:$0xff]
  %v145 = vld [vmem:[%s1 + $0x138] sm:$0xff]
  %v146 = vld [vmem:[%s1 + $0x140] sm:$0xff]
  %v147 = vld [vmem:[%s1 + $0x148] sm:$0xff]
  %v148 = vld [vmem:[%s1 + $0x150] sm:$0xff]
  %v149 = vld [vmem:[%s1 + $0x158] sm:$0xff]
  %v150 = vld [vmem:[%s1 + $0x160] sm:$0xff]
  %v151 = vld [vmem:[%s1 + $0x168] sm:$0xff]
  %v152 = vld [vmem:[%s1 + $0x170] sm:$0xff]
  %v153 = vld [vmem:[%s1 + $0x178] sm:$0xff]
  %v154 = vld [vmem:[%s1 + $0x180] sm:$0xff]
  %v155 = vld [vmem:[%s1 + $0x188] sm:$0xff]
  %v156 = vld [vmem:[%s1 + $0x190] sm:$0xff]
  %v157 = vld [vmem:[%s1 + $0x198] sm:$0xff]
  %v158 = vld [vmem:[%s1 + $0x1a0] sm:$0xff]
  %v159 = vld [vmem:[%s1 + $0x1a8] sm:$0xff]
  %v160 = vld [vmem:[%s1 + $0x1b0] sm:$0xff]
  %v161 = vld [vmem:[%s1 + $0x1b8] sm:$0xff]
  %v162 = vld [vmem:[%s1 + $0x1c0] sm:$0xff]
  %v163 = vld [vmem:[%s1 + $0x1c8] sm:$0xff]
  %v164 = vld [vmem:[%s1 + $0x1d0] sm:$0xff]
  %v165 = vld [vmem:[%s1 + $0x1d8] sm:$0xff]
  %v166 = vld [vmem:[%s1 + $0x1e0] sm:$0xff]
  %v167 = vld [vmem:[%s1 + $0x1e8] sm:$0xff]
  %v168 = vld [vmem:[%s1 + $0x1f0] sm:$0xff]
  %v169 = vld [vmem:[%s1 + $0x1f8] sm:$0xff]
  %v170 = vld [vmem:[%s1 + $0x200] sm:$0xff]
  %v171 = vld [vmem:[%s1 + $0x208] sm:$0xff]
  %v172 = vld [vmem:[%s1 + $0x210] sm:$0xff]
  %v173 = vld [vmem:[%s1 + $0x218] sm:$0xff]
  %v174 = vld [vmem:[%s1 + $0x220] sm:$0xff]
  %v175 = vld [vmem:[%s1 + $0x228] sm:$0xff]
  %v176 = vld [vmem:[%s1 + $0x230] sm:$0xff]
  %v177 = vld [vmem:[%s1 + $0x238] sm:$0xff]
  %v178 = vld [vmem:[%s1 + $0x240] sm:$0xff]
  %v179 = vld [vmem:[%s1 + $0x248] sm:$0xff]
  %v180 = vld [vmem:[%s1 + $0x250] sm:$0xff]
  %v181 = vld [vmem:[%s1 + $0x258] sm:$0xff]
  %v182 = vld [vmem:[%s1 + $0x260] sm:$0xff]
  %v183 = vld [vmem:[%s1 + $0x268] sm:$0xff]
  %v184 = vld [vmem:[%s1 + $0x270] sm:$0xff]
  %v185 = vld [vmem:[%s1 + $0x278] sm:$0xff]
  %v186 = vld [vmem:[%s1 + $0x280] sm:$0xff]
  %v187 = vld [vmem:[%s1 + $0x288] sm:$0xff]
  %v188 = vld [vmem:[%s1 + $0x290] sm:$0xff]
  %v189 = vld [vmem:[%s1 + $0x298] sm:$0xff]
  %v190 = vld [vmem:[%s1 + $0x2a0] sm:$0xff]
  %v191 = vld [vmem:[%s1 + $0x2a8] sm:$0xff]
  %v192 = vld [vmem:[%s1 + $0x2b0] sm:$0xff]
  %v193 = vld [vmem:[%s1 + $0x2b8] sm:$0xff]
  %v194 = vld [vmem:[%s1 + $0x2c0] sm:$0xff]
  %v195 = vld [vmem:[%s1 + $0x2c8] sm:$0xff]
  %v196 = vld [vmem:[%s1 + $0x2d0] sm:$0xff]
  %v197 = vld [vmem:[%s1 + $0x2d8] sm:$0xff]
  %v198 = vld [vmem:[%s1 + $0x2e0] sm:$0xff]
  %v199 = vld [vmem:[%s1 + $0x2e8] sm:$0xff]
  %v200 = vld [vmem:[%s1 + $0x2f0] sm:$0xff]
  %v201 = vld [vmem:[%s1 + $0x2f8] sm:$0xff]
  %v202 = vld [vmem:[%s1 + $0x300] sm:$0xff]
  %v203 = vld [vmem:[%s1 + $0x308] sm:$0xff]
  %v204 = vld [vmem:[%s1 + $0x310] sm:$0xff]
  %v205 = vld [vmem:[%s1 + $0x318] sm:$0xff]
  %v206 = vld [vmem:[%s1 + $0x320] sm:$0xff]
  %v207 = vld [vmem:[%s1 + $0x328] sm:$0xff]
  %v208 = vld [vmem:[%s1 + $0x330] sm:$0xff]
  %v209 = vld [vmem:[%s1 + $0x338] sm:$0xff]
  %v210 = vld [vmem:[%s1 + $0x340] sm:$0xff]
  %v211 = vld [vmem:[%s1 + $0x348] sm:$0xff]
  %v212 = vld [vmem:[%s1 + $0x350] sm:$0xff]
  %v213 = vld [vmem:[%s1 + $0x358] sm:$0xff]
  %v214 = vld [vmem:[%s1 + $0x360] sm:$0xff]
  %v215 = vld [vmem:[%s1 + $0x368] sm:$0xff]
  %v216 = vld [vmem:[%s1 + $0x370] sm:$0xff]
  %v217 = vld [vmem:[%s1 + $0x378] sm:$0xff]
  %v218 = vld [vmem:[%s1 + $0x380] sm:$0xff]
  %v219 = vld [vmem:[%s1 + $0x388] sm:$0xff]
  %v220 = vld [vmem:[%s1 + $0x390] sm:$0xff]
  %v221 = vld [vmem:[%s1 + $0x398] sm:$0xff]
  %v222 = vld [vmem:[%s1 + $0x3a0] sm:$0xff]
  %v223 = vld [vmem:[%s1 + $0x3a8] sm:$0xff]
  %v224 = vld [vmem:[%s1 + $0x3b0] sm:$0xff]
  %v225 = vld [vmem:[%s1 + $0x3b8] sm:$0xff]
  %v226 = vld [vmem:[%s1 + $0x3c0] sm:$0xff]
  %v227 = vld [vmem:[%s1 + $0x3c8] sm:$0xff]
  %v228 = vld [vmem:[%s1 + $0x3d0] sm:$0xff]
  %v229 = vld [vmem:[%s1 + $0x3d8] sm:$0xff]
  %v230 = vld [vmem:[%s1 + $0x3e0] sm:$0xff]
  %v231 = vld [vmem:[%s1 + $0x3e8] sm:$0xff]
  %v232 = vld [vmem:[%s1 + $0x3f0] sm:$0xff]
  %v233 = vld [vmem:[%s1 + $0x3f8] sm:$0xff]
  %v234 = vld [vmem:[%s1 + $0x400] sm:$0xff]
  %v235 = vld [vmem:[%s1 + $0x408] sm:$0xff]
  %v236 = vld [vmem:[%s1 + $0x410] sm:$0xff]
  %v237 = vld [vmem:[%s1 + $0x418] sm:$0xff]
  %v238 = vld [vmem:[%s1 + $0x420] sm:$0xff]
  %v239 = vld [vmem:[%s1 + $0x428] sm:$0xff]
  %v240 = vld [vmem:[%s1 + $0x430] sm:$0xff]
  %v241 = vld [vmem:[%s1 + $0x438] sm:$0xff]
  %v242 = vld [vmem:[%s1 + $0x440] sm:$0xff]
  %v243 = vld [vmem:[%s1 + $0x448] sm:$0xff]
  %v244 = vld [vmem:[%s1 + $0x450] sm:$0xff]
  %v245 = vld [vmem:[%s1 + $0x458] sm:$0xff]
  %v246 = vld [vmem:[%s1 + $0x460] sm:$0xff]
  %v247 = vld [vmem:[%s1 + $0x468] sm:$0xff]
  %v248 = vld [vmem:[%s1 + $0x470] sm:$0xff]
  %v249 = vld [vmem:[%s1 + $0x478] sm:$0xff]
  %v250 = vld [vmem:[%s1 + $0x480] sm:$0xff]
  %v251 = vld [vmem:[%s1 + $0x488] sm:$0xff]
  %v252 = vld [vmem:[%s1 + $0x490] sm:$0xff]
  %v253 = vld [vmem:[%s1 + $0x498] sm:$0xff]
  %v254 = vld [vmem:[%s1 + $0x4a0] sm:$0xff]
  %v255 = vld [vmem:[%s1 + $0x4a8] sm:$0xff]
  %v256 = vld [vmem:[%s1 + $0x4b0] sm:$0xff]
  %v257 = vld [vmem:[%s1 + $0x4b8] sm:$0xff]
  %v258 = vld [vmem:[%s1 + $0x4c0] sm:$0xff]
  %v259 = vld [vmem:[%s1 + $0x4c8] sm:$0xff]
  %v260 = vld [vmem:[%s1 + $0x4d0] sm:$0xff]
  %v261 = vld [vmem:[%s1 + $0x4d8] sm:$0xff]
  %v262 = vld [vmem:[%s1 + $0x4e0] sm:$0xff]
  %v263 = vld [vmem:[%s1 + $0x4e8] sm:$0xff]
  %v264 = vld [vmem:[%s1 + $0x4f0] sm:$0xff]
  %v265 = vld [vmem:[%s1 + $0x4f8] sm:$0xff]
  %v266 = vld [vmem:[%s1 + $0x500] sm:$0xff]
  %v267 = vld [vmem:[%s1 + $0x508] sm:$0xff]
  %v268 = vld [vmem:[%s1 + $0x510] sm:$0xff]
  %v269 = vld [vmem:[%s1 + $0x518] sm:$0xff]
  %v270 = vld [vmem:[%s1 + $0x520] sm:$0xff]
  %v271 = vld [vmem:[%s1 + $0x528] sm:$0xff]
  %v272 = vld [vmem:[%s1 + $0x530] sm:$0xff]
  %v273 = vld [vmem:[%s1 + $0x538] sm:$0xff]
  %v274 = vld [vmem:[%s1 + $0x540] sm:$0xff]
  %v275 = vld [vmem:[%s1 + $0x548] sm:$0xff]
  %v276 = vld [vmem:[%s1 + $0x550] sm:$0xff]
  %v277 = vld [vmem:[%s1 + $0x558] sm:$0xff]
  %v278 = vld [vmem:[%s1 + $0x560] sm:$0xff]
  %v279 = vld [vmem:[%s1 + $0x568] sm:$0xff]
  %v280 = vld [vmem:[%s1 + $0x570] sm:$0xff]
  %v281 = vld [vmem:[%s1 + $0x578] sm:$0xff]
  %v282 = vld [vmem:[%s1 + $0x580] sm:$0xff]
  %v283 = vld [vmem:[%s1 + $0x588] sm:$0xff]
  %v284 = vld [vmem:[%s1 + $0x590] sm:$0xff]
  %v285 = vld [vmem:[%s1 + $0x598] sm:$0xff]
  %v286 = vld [vmem:[%s1 + $0x5a0] sm:$0xff]
  %v287 = vld [vmem:[%s1 + $0x5a8] sm:$0xff]
  %v288 = vld [vmem:[%s1 + $0x5b0] sm:$0xff]
  %v289 = vld [vmem:[%s1 + $0x5b8] sm:$0xff]
  %v290 = vld [vmem:[%s1 + $0x5c0] sm:$0xff]
  %v291 = vld [vmem:[%s1 + $0x5c8] sm:$0xff]
  %v292 = vld [vmem:[%s1 + $0x5d0] sm:$0xff]
  %v293 = vld [vmem:[%s1 + $0x5d8] sm:$0xff]
  %v294 = vld [vmem:[%s1 + $0x5e0] sm:$0xff]
  %v295 = vld [vmem:[%s1 + $0x5e8] sm:$0xff]
  %v296 = vld [vmem:[%s1 + $0x5f0] sm:$0xff]
  %v297 = vld [vmem:[%s1 + $0x5f8] sm:$0xff]
  %v298 = vld [vmem:[%s1 + $0x600] sm:$0xff]
  %v299 = vld [vmem:[%s1 + $0x608] sm:$0xff]
  %v300 = vld [vmem:[%s1 + $0x610] sm:$0xff]
  %v301 = vld [vmem:[%s1 + $0x618] sm:$0xff]
  %v302 = vld [vmem:[%s1 + $0x620] sm:$0xff]
  %v303 = vld [vmem:[%s1 + $0x628] sm:$0xff]
  %v304 = vld [vmem:[%s1 + $0x630] sm:$0xff]
  %v305 = vld [vmem:[%s1 + $0x638] sm:$0xff]
  %v306 = vld [vmem:[%s1 + $0x640] sm:$0xff]
  %v307 = vld [vmem:[%s1 + $0x648] sm:$0xff]
  %v308 = vld [vmem:[%s1 + $0x650] sm:$0xff]
  %v309 = vld [vmem:[%s1 + $0x658] sm:$0xff]
  %v310 = vld [vmem:[%s1 + $0x660] sm:$0xff]
  %v311 = vld [vmem:[%s1 + $0x668] sm:$0xff]
  %v312 = vld [vmem:[%s1 + $0x670] sm:$0xff]
  %v313 = vld [vmem:[%s1 + $0x678] sm:$0xff]
  %v314 = vld [vmem:[%s1 + $0x680] sm:$0xff]
  %v315 = vld [vmem:[%s1 + $0x688] sm:$0xff]
  %v316 = vld [vmem:[%s1 + $0x690] sm:$0xff]
  %v317 = vld [vmem:[%s1 + $0x698] sm:$0xff]
  %v318 = vld [vmem:[%s1 + $0x6a0] sm:$0xff]
  %v319 = vld [vmem:[%s1 + $0x6a8] sm:$0xff]
  %v320 = vld [vmem:[%s1 + $0x6b0] sm:$0xff]
  %v321 = vld [vmem:[%s1 + $0x6b8] sm:$0xff]
  %v322 = vld [vmem:[%s1 + $0x6c0] sm:$0xff]
  %v323 = vld [vmem:[%s1 + $0x6c8] sm:$0xff]
  %v324 = vld [vmem:[%s1 + $0x6d0] sm:$0xff]
  %v325 = vld [vmem:[%s1 + $0x6d8] sm:$0xff]
  %v326 = vld [vmem:[%s1 + $0x6e0] sm:$0xff]
  %v327 = vld [vmem:[%s1 + $0x6e8] sm:$0xff]
  %v328 = vld [vmem:[%s1 + $0x6f0] sm:$0xff]
  %v329 = vld [vmem:[%s1 + $0x6f8] sm:$0xff]
  %v330 = vld [vmem:[%s1 + $0x700] sm:$0xff]
  %v331 = vld [vmem:[%s1 + $0x708] sm:$0xff]
  %v332 = vld [vmem:[%s1 + $0x710] sm:$0xff]
  %v333 = vld [vmem:[%s1 + $0x718] sm:$0xff]
  %v334 = vld [vmem:[%s1 + $0x720] sm:$0xff]
  %v335 = vld [vmem:[%s1 + $0x728] sm:$0xff]
  %v336 = vld [vmem:[%s1 + $0x730] sm:$0xff]
  %v337 = vld [vmem:[%s1 + $0x738] sm:$0xff]
  %v338 = vld [vmem:[%s1 + $0x740] sm:$0xff]
  %v339 = vld [vmem:[%s1 + $0x748] sm:$0xff]
  %v340 = vld [vmem:[%s1 + $0x750] sm:$0xff]
  %v341 = vld [vmem:[%s1 + $0x758] sm:$0xff]
  %v342 = vld [vmem:[%s1 + $0x760] sm:$0xff]
  %v343 = vld [vmem:[%s1 + $0x768] sm:$0xff]
  %v344 = vld [vmem:[%s1 + $0x770] sm:$0xff]
  %v345 = vld [vmem:[%s1 + $0x778] sm:$0xff]
  %v346 = vld [vmem:[%s1 + $0x780] sm:$0xff]
  %v347 = vld [vmem:[%s1 + $0x788] sm:$0xff]
  %v348 = vld [vmem:[%s1 + $0x790] sm:$0xff]
  %v349 = vld [vmem:[%s1 + $0x798] sm:$0xff]
  %v350 = vld [vmem:[%s1 + $0x7a0] sm:$0xff]
  %v351 = vld [vmem:[%s1 + $0x7a8] sm:$0xff]
  %v352 = vld [vmem:[%s1 + $0x7b0] sm:$0xff]
  %v353 = vld [vmem:[%s1 + $0x7b8] sm:$0xff]
  %v354 = vld [vmem:[%s1 + $0x7c0] sm:$0xff]
  %v355 = vld [vmem:[%s1 + $0x7c8] sm:$0xff]
  %v356 = vld [vmem:[%s1 + $0x7d0] sm:$0xff]
  %v357 = vld [vmem:[%s1 + $0x7d8] sm:$0xff]
  %v358 = vld [vmem:[%s1 + $0x7e0] sm:$0xff]
  %v359 = vld [vmem:[%s1 + $0x7e8] sm:$0xff]
  %v360 = vld [vmem:[%s1 + $0x7f0] sm:$0xff]
  %v361 = vld [vmem:[%s1 + $0x7f8] sm:$0xff]
  %v362 = vld [vmem:[%s1 + $0x800] sm:$0xff]
  %v363 = vld [vmem:[%s1 + $0x808] sm:$0xff]
  %v364 = vld [vmem:[%s1 + $0x810] sm:$0xff]
  %v365 = vld [vmem:[%s1 + $0x818] sm:$0xff]
  %v366 = vld [vmem:[%s1 + $0x820] sm:$0xff]
  %v367 = vld [vmem:[%s1 + $0x828] sm:$0xff]
  %v368 = vld [vmem:[%s1 + $0x830] sm:$0xff]
  %v369 = vld [vmem:[%s1 + $0x838] sm:$0xff]
  %v370 = vld [vmem:[%s1 + $0x840] sm:$0xff]
  %v371 = vld [vmem:[%s1 + $0x848] sm:$0xff]
  %v372 = vld [vmem:[%s1 + $0x850] sm:$0xff]
  %v373 = vld [vmem:[%s1 + $0x858] sm:$0xff]
  %v374 = vld [vmem:[%s1 + $0x860] sm:$0xff]
  %v375 = vld [vmem:[%s1 + $0x868] sm:$0xff]
  %v376 = vld [vmem:[%s1 + $0x870] sm:$0xff]
  %v377 = vld [vmem:[%s1 + $0x878] sm:$0xff]
  %v378 = vld [vmem:[%s1 + $0x880] sm:$0xff]
  %v379 = vld [vmem:[%s1 + $0x888] sm:$0xff]
  %v380 = vld [vmem:[%s1 + $0x890] sm:$0xff]
  %v381 = vld [vmem:[%s1 + $0x898] sm:$0xff]
  %v382 = vld [vmem:[%s1 + $0x8a0] sm:$0xff]
  %v383 = vld [vmem:[%s1 + $0x8a8] sm:$0xff]
  %v384 = vld [vmem:[%s1 + $0x8b0] sm:$0xff]
  %v385 = vld [vmem:[%s1 + $0x8b8] sm:$0xff]
  %v386 = vld [vmem:[%s1 + $0x8c0] sm:$0xff]
  %v387 = vld [vmem:[%s1 + $0x8c8] sm:$0xff]
  %v388 = vld [vmem:[%s1 + $0x8d0] sm:$0xff]
  %v389 = vld [vmem:[%s1 + $0x8d8] sm:$0xff]
  %v390 = vld [vmem:[%s1 + $0x8e0] sm:$0xff]
  %v391 = vld [vmem:[%s1 + $0x8e8] sm:$0xff]
  %v392 = vld [vmem:[%s1 + $0x8f0] sm:$0xff]
  %v393 = vld [vmem:[%s1 + $0x8f8] sm:$0xff]
  %v394 = vld [vmem:[%s1 + $0x900] sm:$0xff]
  %v395 = vld [vmem:[%s1 + $0x908] sm:$0xff]
  %v396 = vld [vmem:[%s1 + $0x910] sm:$0xff]
  %v397 = vld [vmem:[%s1 + $0x918] sm:$0xff]
  %v398 = vld [vmem:[%s1 + $0x920] sm:$0xff]
  %v399 = vld [vmem:[%s1 + $0x928] sm:$0xff]
  %v400 = vld [vmem:[%s1 + $0x930] sm:$0xff]
  %v401 = vld [vmem:[%s1 + $0x938] sm:$0xff]
  %v402 = vld [vmem:[%s1 + $0x940] sm:$0xff]
  %v403 = vld [vmem:[%s1 + $0x948] sm:$0xff]
  %v404 = vld [vmem:[%s1 + $0x950] sm:$0xff]
  %v405 = vld [vmem:[%s1 + $0x958] sm:$0xff]
  %v406 = vld [vmem:[%s1 + $0x960] sm:$0xff]
  %v407 = vld [vmem:[%s1 + $0x968] sm:$0xff]
  %v408 = vld [vmem:[%s1 + $0x970] sm:$0xff]
  %v409 = vld [vmem:[%s1 + $0x978] sm:$0xff]
  %v410 = vld [vmem:[%s1 + $0x980] sm:$0xff]
  %v411 = vld [vmem:[%s1 + $0x988] sm:$0xff]
  %v412 = vld [vmem:[%s1 + $0x990] sm:$0xff]
  %v413 = vld [vmem:[%s1 + $0x998] sm:$0xff]
  %v414 = vld [vmem:[%s1 + $0x9a0] sm:$0xff]
  %v415 = vld [vmem:[%s1 + $0x9a8] sm:$0xff]
  %v416 = vld [vmem:[%s1 + $0x9b0] sm:$0xff]
  %v417 = vld [vmem:[%s1 + $0x9b8] sm:$0xff]
  %v418 = vld [vmem:[%s1 + $0x9c0] sm:$0xff]
  %v419 = vld [vmem:[%s1 + $0x9c8] sm:$0xff]
  %v420 = vld [vmem:[%s1 + $0x9d0] sm:$0xff]
  %v421 = vld [vmem:[%s1 + $0x9d8] sm:$0xff]
  %v422 = vld [vmem:[%s1 + $0x9e0] sm:$0xff]
  %v423 = vld [vmem:[%s1 + $0x9e8] sm:$0xff]
  %v424 = vld [vmem:[%s1 + $0x9f0] sm:$0xff]
  %v425 = vld [vmem:[%s1 + $0x9f8] sm:$0xff]
  %v426 = vld [vmem:[%s1 + $0xa00] sm:$0xff]
  %v427 = vld [vmem:[%s1 + $0xa08] sm:$0xff]
  %v428 = vld [vmem:[%s1 + $0xa10] sm:$0xff]
  %v429 = vld [vmem:[%s1 + $0xa18] sm:$0xff]
  %v430 = vld [vmem:[%s1 + $0xa20] sm:$0xff]
  %v431 = vld [vmem:[%s1 + $0xa28] sm:$0xff]
  %v432 = vld [vmem:[%s1 + $0xa30] sm:$0xff]
  %v433 = vld [vmem:[%s1 + $0xa38] sm:$0xff]
  %v434 = vld [vmem:[%s1 + $0xa40] sm:$0xff]
  %v435 = vld [vmem:[%s1 + $0xa48] sm:$0xff]
  %v436 = vld [vmem:[%s1 + $0xa50] sm:$0xff]
  %v437 = vld [vmem:[%s1 + $0xa58] sm:$0xff]
  %v438 = vld [vmem:[%s1 + $0xa60] sm:$0xff]
  %v439 = vld [vmem:[%s1 + $0xa68] sm:$0xff]
  %v440 = vld [vmem:[%s1 + $0xa70] sm:$0xff]
  %v441 = vld [vmem:[%s1 + $0xa78] sm:$0xff]
  %v442 = vld [vmem:[%s1 + $0xa80] sm:$0xff]
  %v443 = vld [vmem:[%s1 + $0xa88] sm:$0xff]
  %v444 = vld [vmem:[%s1 + $0xa90] sm:$0xff]
  %v445 = vld [vmem:[%s1 + $0xa98] sm:$0xff]
  %v446 = vld [vmem:[%s1 + $0xaa0] sm:$0xff]
  %v447 = vld [vmem:[%s1 + $0xaa8] sm:$0xff]
  %v448 = vld [vmem:[%s1 + $0xab0] sm:$0xff]
  %v449 = vld [vmem:[%s1 + $0xab8] sm:$0xff]
  %v450 = vld [vmem:[%s1 + $0xac0] sm:$0xff]
  %v451 = vld [vmem:[%s1 + $0xac8] sm:$0xff]
  %v452 = vld [vmem:[%s1 + $0xad0] sm:$0xff]
  %v453 = vld [vmem:[%s1 + $0xad8] sm:$0xff]
  %v454 = vld [vmem:[%s1 + $0xae0] sm:$0xff]
  %v455 = vld [vmem:[%s1 + $0xae8] sm:$0xff]
  %v456 = vld [vmem:[%s1 + $0xaf0] sm:$0xff]
  %v457 = vld [vmem:[%s1 + $0xaf8] sm:$0xff]
  %v458 = vld [vmem:[%s1 + $0xb00] sm:$0xff]
  %v459 = vld [vmem:[%s1 + $0xb08] sm:$0xff]
  %v460 = vld [vmem:[%s1 + $0xb10] sm:$0xff]
  %v461 = vld [vmem:[%s1 + $0xb18] sm:$0xff]
  %v462 = vld [vmem:[%s1 + $0xb20] sm:$0xff]
  %v463 = vld [vmem:[%s1 + $0xb28] sm:$0xff]
  %v464 = vld [vmem:[%s1 + $0xb30] sm:$0xff]
  %v465 = vld [vmem:[%s1 + $0xb38] sm:$0xff]
  %v466 = vld [vmem:[%s1 + $0xb40] sm:$0xff]
  %v467 = vld [vmem:[%s1 + $0xb48] sm:$0xff]
  %v468 = vld [vmem:[%s1 + $0xb50] sm:$0xff]
  %v469 = vld [vmem:[%s1 + $0xb58] sm:$0xff]
  %v470 = vld [vmem:[%s1 + $0xb60] sm:$0xff]
  %v471 = vld [vmem:[%s1 + $0xb68] sm:$0xff]
  %v472 = vld [vmem:[%s1 + $0xb70] sm:$0xff]
  %v473 = vld [vmem:[%s1 + $0xb78] sm:$0xff]
  %v474 = vld [vmem:[%s1 + $0xb80] sm:$0xff]
  %v475 = vld [vmem:[%s1 + $0xb88] sm:$0xff]
  %v476 = vld [vmem:[%s1 + $0xb90] sm:$0xff]
  %v477 = vld [vmem:[%s1 + $0xb98] sm:$0xff]
  %v478 = vld [vmem:[%s1 + $0xba0] sm:$0xff]
  %v479 = vld [vmem:[%s1 + $0xba8] sm:$0xff]
  %v480 = vld [vmem:[%s1 + $0xbb0] sm:$0xff]
  %v481 = vld [vmem:[%s1 + $0xbb8] sm:$0xff]
  %v482 = vld [vmem:[%s1 + $0xbc0] sm:$0xff]
  %v483 = vld [vmem:[%s1 + $0xbc8] sm:$0xff]
  %v484 = vld [vmem:[%s1 + $0xbd0] sm:$0xff]
  %v485 = vld [vmem:[%s1 + $0xbd8] sm:$0xff]
  %v486 = vld [vmem:[%s1 + $0xbe0] sm:$0xff]
  %v487 = vld [vmem:[%s1 + $0xbe8] sm:$0xff]
  %v488 = vld [vmem:[%s1 + $0xbf0] sm:$0xff]
  %v489 = vld [vmem:[%s1 + $0xbf8] sm:$0xff]
  %v490 = vld [vmem:[%s1 + $0xc00] sm:$0xff]
  %v491 = vld [vmem:[%s1 + $0xc08] sm:$0xff]
  %v492 = vld [vmem:[%s1 + $0xc10] sm:$0xff]
  %v493 = vld [vmem:[%s1 + $0xc18] sm:$0xff]
  %v494 = vld [vmem:[%s1 + $0xc20] sm:$0xff]
  %v495 = vld [vmem:[%s1 + $0xc28] sm:$0xff]
  %v496 = vld [vmem:[%s1 + $0xc30] sm:$0xff]
  %v497 = vld [vmem:[%s1 + $0xc38] sm:$0xff]
  %v498 = vld [vmem:[%s1 + $0xc40] sm:$0xff]
  %v499 = vld [vmem:[%s1 + $0xc48] sm:$0xff]
  %v500 = vld [vmem:[%s1 + $0xc50] sm:$0xff]
  %v501 = vld [vmem:[%s1 + $0xc58] sm:$0xff]
  %v502 = vld [vmem:[%s1 + $0xc60] sm:$0xff]
  %v503 = vld [vmem:[%s1 + $0xc68] sm:$0xff]
  %v504 = vld [vmem:[%s1 + $0xc70] sm:$0xff]
  %v505 = vld [vmem:[%s1 + $0xc78] sm:$0xff]
  %v506 = vld [vmem:[%s1 + $0xc80] sm:$0xff]
  %v507 = vld [vmem:[%s1 + $0xc88] sm:$0xff]
  %v508 = vld [vmem:[%s1 + $0xc90] sm:$0xff]
  %v509 = vld [vmem:[%s1 + $0xc98] sm:$0xff]
  %v510 = vld [vmem:[%s1 + $0xca0] sm:$0xff]
  %v511 = vld [vmem:[%s1 + $0xca8] sm:$0xff]
  %v512 = vld [vmem:[%s1 + $0xcb0] sm:$0xff]
  %v513 = vld [vmem:[%s1 + $0xcb8] sm:$0xff]
  %v514 = vld [vmem:[%s1 + $0xcc0] sm:$0xff]
  %v515 = vld [vmem:[%s1 + $0xcc8] sm:$0xff]
  %v516 = vld [vmem:[%s1 + $0xcd0] sm:$0xff]
  %v517 = vld [vmem:[%s1 + $0xcd8] sm:$0xff]
  %v518 = vld [vmem:[%s1 + $0xce0] sm:$0xff]
  %v519 = vld [vmem:[%s1 + $0xce8] sm:$0xff]
  %v520 = vld [vmem:[%s1 + $0xcf0] sm:$0xff]
  %v521 = vld [vmem:[%s1 + $0xcf8] sm:$0xff]
  %v522 = vld [vmem:[%s1 + $0xd00] sm:$0xff]
  %v523 = vld [vmem:[%s1 + $0xd08] sm:$0xff]
  %v524 = vld [vmem:[%s1 + $0xd10] sm:$0xff]
  %v525 = vld [vmem:[%s1 + $0xd18] sm:$0xff]
  %v526 = vld [vmem:[%s1 + $0xd20] sm:$0xff]
  %v527 = vld [vmem:[%s1 + $0xd28] sm:$0xff]
  %v528 = vld [vmem:[%s1 + $0xd30] sm:$0xff]
  %v529 = vld [vmem:[%s1 + $0xd38] sm:$0xff]
  %v530 = vld [vmem:[%s1 + $0xd40] sm:$0xff]
  %v531 = vld [vmem:[%s1 + $0xd48] sm:$0xff]
  %v532 = vld [vmem:[%s1 + $0xd50] sm:$0xff]
  %v533 = vld [vmem:[%s1 + $0xd58] sm:$0xff]
  %v534 = vld [vmem:[%s1 + $0xd60] sm:$0xff]
  %v535 = vld [vmem:[%s1 + $0xd68] sm:$0xff]
  %v536 = vld [vmem:[%s1 + $0xd70] sm:$0xff]
  %v537 = vld [vmem:[%s1 + $0xd78] sm:$0xff]
  %v538 = vld [vmem:[%s1 + $0xd80] sm:$0xff]
  %v539 = vld [vmem:[%s1 + $0xd88] sm:$0xff]
  %v540 = vld [vmem:[%s1 + $0xd90] sm:$0xff]
  %v541 = vld [vmem:[%s1 + $0xd98] sm:$0xff]
  %v542 = vld [vmem:[%s1 + $0xda0] sm:$0xff]
  %v543 = vld [vmem:[%s1 + $0xda8] sm:$0xff]
  %v544 = vld [vmem:[%s1 + $0xdb0] sm:$0xff]
  %v545 = vld [vmem:[%s1 + $0xdb8] sm:$0xff]
  %v546 = vld [vmem:[%s1 + $0xdc0] sm:$0xff]
  %v547 = vld [vmem:[%s1 + $0xdc8] sm:$0xff]
  %v548 = vld [vmem:[%s1 + $0xdd0] sm:$0xff]
  %v549 = vld [vmem:[%s1 + $0xdd8] sm:$0xff]
  %v550 = vld [vmem:[%s1 + $0xde0] sm:$0xff]
  %v551 = vld [vmem:[%s1 + $0xde8] sm:$0xff]
  %v552 = vld [vmem:[%s1 + $0xdf0] sm:$0xff]
  %v553 = vld [vmem:[%s1 + $0xdf8] sm:$0xff]
  %v554 = vld [vmem:[%s1 + $0xe00] sm:$0xff]
  %v555 = vld [vmem:[%s1 + $0xe08] sm:$0xff]
  %v556 = vld [vmem:[%s1 + $0xe10] sm:$0xff]
  %v557 = vld [vmem:[%s1 + $0xe18] sm:$0xff]
  %v558 = vld [vmem:[%s1 + $0xe20] sm:$0xff]
  %v559 = vld [vmem:[%s1 + $0xe28] sm:$0xff]
  %v560 = vld [vmem:[%s1 + $0xe30] sm:$0xff]
  %v561 = vld [vmem:[%s1 + $0xe38] sm:$0xff]
  %v562 = vld [vmem:[%s1 + $0xe40] sm:$0xff]
  %v563 = vld [vmem:[%s1 + $0xe48] sm:$0xff]
  %v564 = vld [vmem:[%s1 + $0xe50] sm:$0xff]
  %v565 = vld [vmem:[%s1 + $0xe58] sm:$0xff]
  %v566 = vld [vmem:[%s1 + $0xe60] sm:$0xff]
  %v567 = vld [vmem:[%s1 + $0xe68] sm:$0xff]
  %v568 = vld [vmem:[%s1 + $0xe70] sm:$0xff]
  %v569 = vld [vmem:[%s1 + $0xe78] sm:$0xff]
  %v570 = vld [vmem:[%s1 + $0xe80] sm:$0xff]
  %v571 = vld [vmem:[%s1 + $0xe88] sm:$0xff]
  %v572 = vld [vmem:[%s1 + $0xe90] sm:$0xff]
  %v573 = vld [vmem:[%s1 + $0xe98] sm:$0xff]
  %v574 = vld [vmem:[%s1 + $0xea0] sm:$0xff]
  %v575 = vld [vmem:[%s1 + $0xea8] sm:$0xff]
  %v576 = vld [vmem:[%s1 + $0xeb0] sm:$0xff]
  %v577 = vld [vmem:[%s1 + $0xeb8] sm:$0xff]
  %v578 = vld [vmem:[%s1 + $0xec0] sm:$0xff]
  %v579 = vld [vmem:[%s1 + $0xec8] sm:$0xff]
  %v580 = vld [vmem:[%s1 + $0xed0] sm:$0xff]
  %v581 = vld [vmem:[%s1 + $0xed8] sm:$0xff]
  %v582 = vld [vmem:[%s1 + $0xee0] sm:$0xff]
  %v583 = vld [vmem:[%s1 + $0xee8] sm:$0xff]
  %v584 = vld [vmem:[%s1 + $0xef0] sm:$0xff]
  %v585 = vld [vmem:[%s1 + $0xef8] sm:$0xff]
  %v586 = vld [vmem:[%s1 + $0xf00] sm:$0xff]
  %v587 = vld [vmem:[%s1 + $0xf08] sm:$0xff]
  %v588 = vld [vmem:[%s1 + $0xf10] sm:$0xff]
  %v589 = vld [vmem:[%s1 + $0xf18] sm:$0xff]
  %v590 = vld [vmem:[%s1 + $0xf20] sm:$0xff]
  %v591 = vld [vmem:[%s1 + $0xf28] sm:$0xff]
  %v592 = vld [vmem:[%s1 + $0xf30] sm:$0xff]
  %v593 = vld [vmem:[%s1 + $0xf38] sm:$0xff]
  %v594 = vld [vmem:[%s1 + $0xf40] sm:$0xff]
  %v595 = vld [vmem:[%s1 + $0xf48] sm:$0xff]
  %v596 = vld [vmem:[%s1 + $0xf50] sm:$0xff]
  %v597 = vld [vmem:[%s1 + $0xf58] sm:$0xff]
  %v598 = vld [vmem:[%s1 + $0xf60] sm:$0xff]
  %v599 = vld [vmem:[%s1 + $0xf68] sm:$0xff]
  %v600 = vld [vmem:[%s1 + $0xf70] sm:$0xff]
  %v601 = vld [vmem:[%s1 + $0xf78] sm:$0xff]
  %v602 = vld [vmem:[%s1 + $0xf80] sm:$0xff]
  %v603 = vld [vmem:[%s1 + $0xf88] sm:$0xff]
  %v604 = vld [vmem:[%s1 + $0xf90] sm:$0xff]
  %v605 = vld [vmem:[%s1 + $0xf98] sm:$0xff]
  %v606 = vld [vmem:[%s1 + $0xfa0] sm:$0xff]
  %v607 = vld [vmem:[%s1 + $0xfa8] sm:$0xff]
  %v608 = vld [vmem:[%s1 + $0xfb0] sm:$0xff]
  %v609 = vld [vmem:[%s1 + $0xfb8] sm:$0xff]
  %v610 = vld [vmem:[%s1 + $0xfc0] sm:$0xff]
  %v611 = vld [vmem:[%s1 + $0xfc8] sm:$0xff]
  %v612 = vld [vmem:[%s1 + $0xfd0] sm:$0xff]
  %v613 = vld [vmem:[%s1 + $0xfd8] sm:$0xff]
  %v614 = vld [vmem:[%s1 + $0xfe0] sm:$0xff]
  %v615 = vld [vmem:[%s1 + $0xfe8] sm:$0xff]
  %v616 = vld [vmem:[%s1 + $0xff0] sm:$0xff]
  %v617 = vld [vmem:[%s1 + $0xff8] sm:$0xff]
  %v618 = vld [vmem:[%s1 + $0x1000] sm:$0xff]
  %v619 = vld [vmem:[%s1 + $0x1008] sm:$0xff]
  %v620 = vld [vmem:[%s1 + $0x1010] sm:$0xff]
  %v621 = vld [vmem:[%s1 + $0x1018] sm:$0xff]
  %v622 = vld [vmem:[%s1 + $0x1020] sm:$0xff]
  %v623 = vld [vmem:[%s1 + $0x1028] sm:$0xff]
  %v624 = vld [vmem:[%s1 + $0x1030] sm:$0xff]
  %v625 = vld [vmem:[%s1 + $0x1038] sm:$0xff]
  %v626 = vld [vmem:[%s1 + $0x1040] sm:$0xff]
  %v627 = vld [vmem:[%s1 + $0x1048] sm:$0xff]
  %v628 = vld [vmem:[%s1 + $0x1050] sm:$0xff]
  %v629 = vld [vmem:[%s1 + $0x1058] sm:$0xff]
  %v630 = vld [vmem:[%s1 + $0x1060] sm:$0xff]
  %v631 = vld [vmem:[%s1 + $0x1068] sm:$0xff]
  %v632 = vld [vmem:[%s1 + $0x1070] sm:$0xff]
  %v633 = vld [vmem:[%s1 + $0x1078] sm:$0xff]
  %v634 = vld [vmem:[%s1 + $0x1080] sm:$0xff]
  %v635 = vld [vmem:[%s1 + $0x1088] sm:$0xff]
  %v636 = vld [vmem:[%s1 + $0x1090] sm:$0xff]
  %v637 = vld [vmem:[%s1 + $0x1098] sm:$0xff]
  %v638 = vld [vmem:[%s1 + $0x10a0] sm:$0xff]
  %v639 = vld [vmem:[%s1 + $0x10a8] sm:$0xff]
  %v640 = vld [vmem:[%s1 + $0x10b0] sm:$0xff]
  %v641 = vld [vmem:[%s1 + $0x10b8] sm:$0xff]
  %v642 = vld [vmem:[%s1 + $0x10c0] sm:$0xff]
  %v643 = vld [vmem:[%s1 + $0x10c8] sm:$0xff]
  %v644 = vld [vmem:[%s1 + $0x10d0] sm:$0xff]
  %v645 = vld [vmem:[%s1 + $0x10d8] sm:$0xff]
  %v646 = vld [vmem:[%s1 + $0x10e0] sm:$0xff]
  %v647 = vld [vmem:[%s1 + $0x10e8] sm:$0xff]
  %v648 = vld [vmem:[%s1 + $0x10f0] sm:$0xff]
  %v649 = vld [vmem:[%s1 + $0x10f8] sm:$0xff]
  %v650 = vld [vmem:[%s1 + $0x1100] sm:$0xff]
  %v651 = vld [vmem:[%s1 + $0x1108] sm:$0xff]
  %v652 = vld [vmem:[%s1 + $0x1110] sm:$0xff]
  %v653 = vld [vmem:[%s1 + $0x1118] sm:$0xff]
  %v654 = vld [vmem:[%s1 + $0x1120] sm:$0xff]
  %v655 = vld [vmem:[%s1 + $0x1128] sm:$0xff]
  %v656 = vld [vmem:[%s1 + $0x1130] sm:$0xff]
  %v657 = vld [vmem:[%s1 + $0x1138] sm:$0xff]
  %v658 = vld [vmem:[%s1 + $0x1140] sm:$0xff]
  %v659 = vld [vmem:[%s1 + $0x1148] sm:$0xff]
  %v660 = vld [vmem:[%s1 + $0x1150] sm:$0xff]
  %v661 = vld [vmem:[%s1 + $0x1158] sm:$0xff]
  %v662 = vld [vmem:[%s1 + $0x1160] sm:$0xff]
  %v663 = vld [vmem:[%s1 + $0x1168] sm:$0xff]
  %v664 = vld [vmem:[%s1 + $0x1170] sm:$0xff]
  %v665 = vld [vmem:[%s1 + $0x1178] sm:$0xff]
  %v666 = vld [vmem:[%s1 + $0x1180] sm:$0xff]
  %v667 = vld [vmem:[%s1 + $0x1188] sm:$0xff]
  %v668 = vld [vmem:[%s1 + $0x1190] sm:$0xff]
  %v669 = vld [vmem:[%s1 + $0x1198] sm:$0xff]
  %v670 = vld [vmem:[%s1 + $0x11a0] sm:$0xff]
  %v671 = vld [vmem:[%s1 + $0x11a8] sm:$0xff]
  %v672 = vld [vmem:[%s1 + $0x11b0] sm:$0xff]
  %v673 = vld [vmem:[%s1 + $0x11b8] sm:$0xff]
  %v674 = vld [vmem:[%s1 + $0x11c0] sm:$0xff]
  %v675 = vld [vmem:[%s1 + $0x11c8] sm:$0xff]
  %v676 = vld [vmem:[%s1 + $0x11d0] sm:$0xff]
  %v677 = vld [vmem:[%s1 + $0x11d8] sm:$0xff]
  %v678 = vld [vmem:[%s1 + $0x11e0] sm:$0xff]
  %v679 = vld [vmem:[%s1 + $0x11e8] sm:$0xff]
  %v680 = vld [vmem:[%s1 + $0x11f0] sm:$0xff]
  %v681 = vld [vmem:[%s1 + $0x11f8] sm:$0xff]
  %v682 = vld [vmem:[%s1 + $0x1200] sm:$0xff]
  %v683 = vld [vmem:[%s1 + $0x1208] sm:$0xff]
  %v684 = vld [vmem:[%s1 + $0x1210] sm:$0xff]
  %v685 = vld [vmem:[%s1 + $0x1218] sm:$0xff]
  %v686 = vld [vmem:[%s1 + $0x1220] sm:$0xff]
  %v687 = vld [vmem:[%s1 + $0x1228] sm:$0xff]
  %v688 = vld [vmem:[%s1 + $0x1230] sm:$0xff]
  %v689 = vld [vmem:[%s1 + $0x1238] sm:$0xff]
  %v690 = vld [vmem:[%s1 + $0x1240] sm:$0xff]
  %v691 = vld [vmem:[%s1 + $0x1248] sm:$0xff]
  %v692 = vld [vmem:[%s1 + $0x1250] sm:$0xff]
  %v693 = vld [vmem:[%s1 + $0x1258] sm:$0xff]
  %v694 = vld [vmem:[%s1 + $0x1260] sm:$0xff]
  %v695 = vld [vmem:[%s1 + $0x1268] sm:$0xff]
  %v696 = vld [vmem:[%s1 + $0x1270] sm:$0xff]
  %v697 = vld [vmem:[%s1 + $0x1278] sm:$0xff]
  %v698 = vld [vmem:[%s1 + $0x1280] sm:$0xff]
  %v699 = vld [vmem:[%s1 + $0x1288] sm:$0xff]
  %v700 = vld [vmem:[%s1 + $0x1290] sm:$0xff]
  %v701 = vld [vmem:[%s1 + $0x1298] sm:$0xff]
  %v702 = vld [vmem:[%s1 + $0x12a0] sm:$0xff]
  %v703 = vld [vmem:[%s1 + $0x12a8] sm:$0xff]
  %v704 = vld [vmem:[%s1 + $0x12b0] sm:$0xff]
  %v705 = vld [vmem:[%s1 + $0x12b8] sm:$0xff]
  %v706 = vld [vmem:[%s1 + $0x12c0] sm:$0xff]
  %v707 = vld [vmem:[%s1 + $0x12c8] sm:$0xff]
  %v708 = vld [vmem:[%s1 + $0x12d0] sm:$0xff]
  %v709 = vld [vmem:[%s1 + $0x12d8] sm:$0xff]
  %v710 = vld [vmem:[%s1 + $0x12e0] sm:$0xff]
  %v711 = vld [vmem:[%s1 + $0x12e8] sm:$0xff]
  %v712 = vld [vmem:[%s1 + $0x12f0] sm:$0xff]
  %v713 = vld [vmem:[%s1 + $0x12f8] sm:$0xff]
  %v714 = vld [vmem:[%s1 + $0x1300] sm:$0xff]
  %v715 = vld [vmem:[%s1 + $0x1308] sm:$0xff]
  %v716 = vld [vmem:[%s1 + $0x1310] sm:$0xff]
  %v717 = vld [vmem:[%s1 + $0x1318] sm:$0xff]
  %v718 = vld [vmem:[%s1 + $0x1320] sm:$0xff]
  %v719 = vld [vmem:[%s1 + $0x1328] sm:$0xff]
  %v720 = vld [vmem:[%s1 + $0x1330] sm:$0xff]
  %v721 = vld [vmem:[%s1 + $0x1338] sm:$0xff]
  %v722 = vld [vmem:[%s1 + $0x1340] sm:$0xff]
  %v723 = vld [vmem:[%s1 + $0x1348] sm:$0xff]
  %v724 = vld [vmem:[%s1 + $0x1350] sm:$0xff]
  %v725 = vld [vmem:[%s1 + $0x1358] sm:$0xff]
  %v726 = vld [vmem:[%s1 + $0x1360] sm:$0xff]
  %v727 = vld [vmem:[%s1 + $0x1368] sm:$0xff]
  %v728 = vld [vmem:[%s1 + $0x1370] sm:$0xff]
  %v729 = vld [vmem:[%s1 + $0x1378] sm:$0xff]
  %v730 = vld [vmem:[%s1 + $0x1380] sm:$0xff]
  %v731 = vld [vmem:[%s1 + $0x1388] sm:$0xff]
  %v732 = vld [vmem:[%s1 + $0x1390] sm:$0xff]
  %v733 = vld [vmem:[%s1 + $0x1398] sm:$0xff]
  %v734 = vld [vmem:[%s1 + $0x13a0] sm:$0xff]
  %v735 = vld [vmem:[%s1 + $0x13a8] sm:$0xff]
  %v736 = vld [vmem:[%s1 + $0x13b0] sm:$0xff]
  %v737 = vld [vmem:[%s1 + $0x13b8] sm:$0xff]
  %v738 = vld [vmem:[%s1 + $0x13c0] sm:$0xff]
  %v739 = vld [vmem:[%s1 + $0x13c8] sm:$0xff]
  %v740 = vld [vmem:[%s1 + $0x13d0] sm:$0xff]
  %v741 = vld [vmem:[%s1 + $0x13d8] sm:$0xff]
  %v742 = vld [vmem:[%s1 + $0x13e0] sm:$0xff]
  %v743 = vld [vmem:[%s1 + $0x13e8] sm:$0xff]
  %v744 = vld [vmem:[%s1 + $0x13f0] sm:$0xff]
  %v745 = vld [vmem:[%s1 + $0x13f8] sm:$0xff]
  %v746 = vld [vmem:[%s1 + $0x1400] sm:$0xff]
  %v747 = vld [vmem:[%s1 + $0x1408] sm:$0xff]
  %v748 = vld [vmem:[%s1 + $0x1410] sm:$0xff]
  %v749 = vld [vmem:[%s1 + $0x1418] sm:$0xff]
  %v750 = vld [vmem:[%s1 + $0x1420] sm:$0xff]
  %v751 = vld [vmem:[%s1 + $0x1428] sm:$0xff]
  %v752 = vld [vmem:[%s1 + $0x1430] sm:$0xff]
  %v753 = vld [vmem:[%s1 + $0x1438] sm:$0xff]
  %v754 = vld [vmem:[%s1 + $0x1440] sm:$0xff]
  %v755 = vld [vmem:[%s1 + $0x1448] sm:$0xff]
  %v756 = vld [vmem:[%s1 + $0x1450] sm:$0xff]
  %v757 = vld [vmem:[%s1 + $0x1458] sm:$0xff]
  %v758 = vld [vmem:[%s1 + $0x1460] sm:$0xff]
  %v759 = vld [vmem:[%s1 + $0x1468] sm:$0xff]
  %v760 = vld [vmem:[%s1 + $0x1470] sm:$0xff]
  %v761 = vld [vmem:[%s1 + $0x1478] sm:$0xff]
  %v762 = vld [vmem:[%s1 + $0x1480] sm:$0xff]
  %v763 = vld [vmem:[%s1 + $0x1488] sm:$0xff]
  %v764 = vld [vmem:[%s1 + $0x1490] sm:$0xff]
  %v765 = vld [vmem:[%s1 + $0x1498] sm:$0xff]
  %v766 = vld [vmem:[%s1 + $0x14a0] sm:$0xff]
  %v767 = vld [vmem:[%s1 + $0x14a8] sm:$0xff]
  %v768 = vld [vmem:[%s1 + $0x14b0] sm:$0xff]
  %v769 = vld [vmem:[%s1 + $0x14b8] sm:$0xff]
  %v770 = vld [vmem:[%s1 + $0x14c0] sm:$0xff]
  %v771 = vld [vmem:[%s1 + $0x14c8] sm:$0xff]
  %v772 = vld [vmem:[%s1 + $0x14d0] sm:$0xff]
  %v773 = vld [vmem:[%s1 + $0x14d8] sm:$0xff]
  %v774 = vld [vmem:[%s1 + $0x14e0] sm:$0xff]
  %v775 = vld [vmem:[%s1 + $0x14e8] sm:$0xff]
  %v776 = vld [vmem:[%s1 + $0x14f0] sm:$0xff]
  %v777 = vld [vmem:[%s1 + $0x14f8] sm:$0xff]
  %v778 = vld [vmem:[%s1 + $0x1500] sm:$0xff]
  %v779 = vld [vmem:[%s1 + $0x1508] sm:$0xff]
  %v780 = vld [vmem:[%s1 + $0x1510] sm:$0xff]
  %v781 = vld [vmem:[%s1 + $0x1518] sm:$0xff]
  %v782 = vld [vmem:[%s1 + $0x1520] sm:$0xff]
  %v783 = vld [vmem:[%s1 + $0x1528] sm:$0xff]
  %v784 = vld [vmem:[%s1 + $0x1530] sm:$0xff]
  %v785 = vld [vmem:[%s1 + $0x1538] sm:$0xff]
  %v786 = vld [vmem:[%s1 + $0x1540] sm:$0xff]
  %v787 = vld [vmem:[%s1 + $0x1548] sm:$0xff]
  %v788 = vld [vmem:[%s1 + $0x1550] sm:$0xff]
  %v789 = vld [vmem:[%s1 + $0x1558] sm:$0xff]
  %v790 = vld [vmem:[%s1 + $0x1560] sm:$0xff]
  %v791 = vld [vmem:[%s1 + $0x1568] sm:$0xff]
  %v792 = vld [vmem:[%s1 + $0x1570] sm:$0xff]
  %v793 = vld [vmem:[%s1 + $0x1578] sm:$0xff]
  %v794 = vld [vmem:[%s1 + $0x1580] sm:$0xff]
  %v795 = vld [vmem:[%s1 + $0x1588] sm:$0xff]
  %v796 = vld [vmem:[%s1 + $0x1590] sm:$0xff]
  %v797 = vld [vmem:[%s1 + $0x1598] sm:$0xff]
  %v798 = vld [vmem:[%s1 + $0x15a0] sm:$0xff]
  %v799 = vld [vmem:[%s1 + $0x15a8] sm:$0xff]
  %v800 = vld [vmem:[%s1 + $0x15b0] sm:$0xff]
  %v801 = vld [vmem:[%s1 + $0x15b8] sm:$0xff]
  %v802 = vld [vmem:[%s1 + $0x15c0] sm:$0xff]
  %v803 = vld [vmem:[%s1 + $0x15c8] sm:$0xff]
  %v804 = vld [vmem:[%s1 + $0x15d0] sm:$0xff]
  %v805 = vld [vmem:[%s1 + $0x15d8] sm:$0xff]
  %v806 = vld [vmem:[%s1 + $0x15e0] sm:$0xff]
  %v807 = vld [vmem:[%s1 + $0x15e8] sm:$0xff]
  %v808 = vld [vmem:[%s1 + $0x15f0] sm:$0xff]
  %v809 = vld [vmem:[%s1 + $0x15f8] sm:$0xff]
  %v898 = vunpack.c.l.b16 %v18
  %v899 = vunpack.c.h.b16 %v18
  %v900 = vunpack.c.l.b16 %v19
  %v901 = vunpack.c.h.b16 %v19
  %v902 = vunpack.c.l.b16 %v20
  %v903 = vunpack.c.h.b16 %v20
  %v904 = vunpack.c.l.b16 %v21
  %v905 = vunpack.c.h.b16 %v21
  %v906 = vunpack.c.l.b16 %v22
  %v907 = vunpack.c.h.b16 %v22
  %v908 = vunpack.c.l.b16 %v23
  %v909 = vunpack.c.h.b16 %v23
  %v910 = vunpack.c.l.b16 %v24
  %v911 = vunpack.c.h.b16 %v24
  %v912 = vunpack.c.l.b16 %v25
  %v913 = vunpack.c.h.b16 %v25
  %v914 = vunpack.c.l.b16 %v26
  %v915 = vunpack.c.h.b16 %v26
  %v916 = vunpack.c.l.b16 %v27
  %v917 = vunpack.c.h.b16 %v27
  %v918 = vunpack.c.l.b16 %v28
  %v919 = vunpack.c.h.b16 %v28
  %v920 = vunpack.c.l.b16 %v29
  %v921 = vunpack.c.h.b16 %v29
  %v922 = vunpack.c.l.b16 %v30
  %v923 = vunpack.c.h.b16 %v30
  %v924 = vunpack.c.l.b16 %v31
  %v925 = vunpack.c.h.b16 %v31
  %v926 = vunpack.c.l.b16 %v32
  %v927 = vunpack.c.h.b16 %v32
  %v928 = vunpack.c.l.b16 %v33
  %v929 = vunpack.c.h.b16 %v33
  %v930 = vunpack.c.l.b16 %v34
  %v931 = vunpack.c.h.b16 %v34
  %v932 = vunpack.c.l.b16 %v35
  %v933 = vunpack.c.h.b16 %v35
  %v934 = vunpack.c.l.b16 %v36
  %v935 = vunpack.c.h.b16 %v36
  %v936 = vunpack.c.l.b16 %v37
  %v937 = vunpack.c.h.b16 %v37
  %v938 = vunpack.c.l.b16 %v38
  %v939 = vunpack.c.h.b16 %v38
  %v940 = vunpack.c.l.b16 %v39
  %v941 = vunpack.c.h.b16 %v39
  %v942 = vunpack.c.l.b16 %v40
  %v943 = vunpack.c.h.b16 %v40
  %v944 = vunpack.c.l.b16 %v41
  %v945 = vunpack.c.h.b16 %v41
  %v946 = vunpack.c.l.b16 %v42
  %v947 = vunpack.c.h.b16 %v42
  %v948 = vunpack.c.l.b16 %v43
  %v949 = vunpack.c.h.b16 %v43
  %v950 = vunpack.c.l.b16 %v44
  %v951 = vunpack.c.h.b16 %v44
  %v952 = vunpack.c.l.b16 %v45
  %v953 = vunpack.c.h.b16 %v45
  %v954 = vunpack.c.l.b16 %v46
  %v955 = vunpack.c.h.b16 %v46
  %v956 = vunpack.c.l.b16 %v47
  %v957 = vunpack.c.h.b16 %v47
  %v958 = vunpack.c.l.b16 %v48
  %v959 = vunpack.c.h.b16 %v48
  %v960 = vunpack.c.l.b16 %v49
  %v961 = vunpack.c.h.b16 %v49
  %v962 = vunpack.c.l.b16 %v50
  %v963 = vunpack.c.h.b16 %v50
  %v964 = vunpack.c.l.b16 %v51
  %v965 = vunpack.c.h.b16 %v51
  %v966 = vunpack.c.l.b16 %v52
  %v967 = vunpack.c.h.b16 %v52
  %v968 = vunpack.c.l.b16 %v53
  %v969 = vunpack.c.h.b16 %v53
  %v970 = vunpack.c.l.b16 %v54
  %v971 = vunpack.c.h.b16 %v54
  %v972 = vunpack.c.l.b16 %v55
  %v973 = vunpack.c.h.b16 %v55
  %v974 = vunpack.c.l.b16 %v56
  %v975 = vunpack.c.h.b16 %v56
  %v976 = vunpack.c.l.b16 %v57
  %v977 = vunpack.c.h.b16 %v57
  %v978 = vunpack.c.l.b16 %v58
  %v979 = vunpack.c.h.b16 %v58
  %v980 = vunpack.c.l.b16 %v59
  %v981 = vunpack.c.h.b16 %v59
  %v982 = vunpack.c.l.b16 %v60
  %v983 = vunpack.c.h.b16 %v60
  %v984 = vunpack.c.l.b16 %v61
  %v985 = vunpack.c.h.b16 %v61
  %v986 = vunpack.c.l.b16 %v62
  %v987 = vunpack.c.h.b16 %v62
  %v988 = vunpack.c.l.b16 %v63
  %v989 = vunpack.c.h.b16 %v63
  %v990 = vunpack.c.l.b16 %v64
  %v991 = vunpack.c.h.b16 %v64
  %v992 = vunpack.c.l.b16 %v65
  %v993 = vunpack.c.h.b16 %v65
  %v994 = vunpack.c.l.b16 %v66
  %v995 = vunpack.c.h.b16 %v66
  %v996 = vunpack.c.l.b16 %v67
  %v997 = vunpack.c.h.b16 %v67
  %v998 = vunpack.c.l.b16 %v68
  %v999 = vunpack.c.h.b16 %v68
  %v1000 = vunpack.c.l.b16 %v69
  %v1001 = vunpack.c.h.b16 %v69
  %v1002 = vunpack.c.l.b16 %v70
  %v1003 = vunpack.c.h.b16 %v70
  %v1004 = vunpack.c.l.b16 %v71
  %v1005 = vunpack.c.h.b16 %v71
  %v1006 = vunpack.c.l.b16 %v72
  %v1007 = vunpack.c.h.b16 %v72
  %v1008 = vunpack.c.l.b16 %v73
  %v1009 = vunpack.c.h.b16 %v73
  %v1010 = vunpack.c.l.b16 %v74
  %v1011 = vunpack.c.h.b16 %v74
  %v1012 = vunpack.c.l.b16 %v75
  %v1013 = vunpack.c.h.b16 %v75
  %v1014 = vunpack.c.l.b16 %v76
  %v1015 = vunpack.c.h.b16 %v76
  %v1016 = vunpack.c.l.b16 %v77
  %v1017 = vunpack.c.h.b16 %v77
  %v1018 = vunpack.c.l.b16 %v78
  %v1019 = vunpack.c.h.b16 %v78
  %v1020 = vunpack.c.l.b16 %v79
  %v1021 = vunpack.c.h.b16 %v79
  %v1022 = vunpack.c.l.b16 %v80
  %v1023 = vunpack.c.h.b16 %v80
  %v1024 = vunpack.c.l.b16 %v81
  %v1025 = vunpack.c.h.b16 %v81
  %v1026 = vunpack.c.l.b16 %v82
  %v1027 = vunpack.c.h.b16 %v82
  %v1028 = vunpack.c.l.b16 %v83
  %v1029 = vunpack.c.h.b16 %v83
  %v1030 = vunpack.c.l.b16 %v84
  %v1031 = vunpack.c.h.b16 %v84
  %v1032 = vunpack.c.l.b16 %v85
  %v1033 = vunpack.c.h.b16 %v85
  %v1034 = vunpack.c.l.b16 %v86
  %v1035 = vunpack.c.h.b16 %v86
  %v1036 = vunpack.c.l.b16 %v87
  %v1037 = vunpack.c.h.b16 %v87
  %v1038 = vunpack.c.l.b16 %v88
  %v1039 = vunpack.c.h.b16 %v88
  %v1040 = vunpack.c.l.b16 %v89
  %v1041 = vunpack.c.h.b16 %v89
  %v1042 = vunpack.c.l.b16 %v90
  %v1043 = vunpack.c.h.b16 %v90
  %v1044 = vunpack.c.l.b16 %v91
  %v1045 = vunpack.c.h.b16 %v91
  %v1046 = vunpack.c.l.b16 %v92
  %v1047 = vunpack.c.h.b16 %v92
  %v1048 = vunpack.c.l.b16 %v93
  %v1049 = vunpack.c.h.b16 %v93
  %v1050 = vunpack.c.l.b16 %v94
  %v1051 = vunpack.c.h.b16 %v94
  %v1052 = vunpack.c.l.b16 %v95
  %v1053 = vunpack.c.h.b16 %v95
  %v1054 = vunpack.c.l.b16 %v96
  %v1055 = vunpack.c.h.b16 %v96
  %v1056 = vunpack.c.l.b16 %v97
  %v1057 = vunpack.c.h.b16 %v97
  %v1058 = vunpack.c.l.b16 %v98
  %v1059 = vunpack.c.h.b16 %v98
  %v1060 = vunpack.c.l.b16 %v99
  %v1061 = vunpack.c.h.b16 %v99
  %v1062 = vunpack.c.l.b16 %v100
  %v1063 = vunpack.c.h.b16 %v100
  %v1064 = vunpack.c.l.b16 %v101
  %v1065 = vunpack.c.h.b16 %v101
  %v1066 = vunpack.c.l.b16 %v102
  %v1067 = vunpack.c.h.b16 %v102
  %v1068 = vunpack.c.l.b16 %v103
  %v1069 = vunpack.c.h.b16 %v103
  %v1070 = vunpack.c.l.b16 %v104
  %v1071 = vunpack.c.h.b16 %v104
  %v1072 = vunpack.c.l.b16 %v105
  %v1073 = vunpack.c.h.b16 %v105
  %v1074 = vpack.c.b16 %v898, %v898
  %v1075 = vpack.c.b16 %v899, %v899
  %v1076 = vpack.c.b16 %v900, %v900
  %v1077 = vpack.c.b16 %v901, %v901
  %v1078 = vpack.c.b16 %v902, %v902
  %v1079 = vpack.c.b16 %v903, %v903
  %v1080 = vpack.c.b16 %v904, %v904
  %v1081 = vpack.c.b16 %v905, %v905
  %v1082 = vpack.c.b16 %v906, %v906
  %v1083 = vpack.c.b16 %v907, %v907
  %v1084 = vpack.c.b16 %v908, %v908
  %v1085 = vpack.c.b16 %v909, %v909
  %v1086 = vpack.c.b16 %v910, %v910
  %v1087 = vpack.c.b16 %v911, %v911
  %v1088 = vpack.c.b16 %v912, %v912
  %v1089 = vpack.c.b16 %v913, %v913
  %v1090 = vpack.c.b16 %v914, %v914
  %v1091 = vpack.c.b16 %v915, %v915
  %v1092 = vpack.c.b16 %v916, %v916
  %v1093 = vpack.c.b16 %v917, %v917
  %v1094 = vpack.c.b16 %v918, %v918
  %v1095 = vpack.c.b16 %v919, %v919
  %v1096 = vpack.c.b16 %v920, %v920
  %v1097 = vpack.c.b16 %v921, %v921
  %v1098 = vpack.c.b16 %v922, %v922
  %v1099 = vpack.c.b16 %v923, %v923
  %v1100 = vpack.c.b16 %v924, %v924
  %v1101 = vpack.c.b16 %v925, %v925
  %v1102 = vpack.c.b16 %v926, %v926
  %v1103 = vpack.c.b16 %v927, %v927
  %v1104 = vpack.c.b16 %v928, %v928
  %v1105 = vpack.c.b16 %v929, %v929
  %v1106 = vpack.c.b16 %v930, %v930
  %v1107 = vpack.c.b16 %v931, %v931
  %v1108 = vpack.c.b16 %v932, %v932
  %v1109 = vpack.c.b16 %v933, %v933
  %v1110 = vpack.c.b16 %v934, %v934
  %v1111 = vpack.c.b16 %v935, %v935
  %v1112 = vpack.c.b16 %v936, %v936
  %v1113 = vpack.c.b16 %v937, %v937
  %v1114 = vpack.c.b16 %v938, %v938
  %v1115 = vpack.c.b16 %v939, %v939
  %v1116 = vpack.c.b16 %v940, %v940
  %v1117 = vpack.c.b16 %v941, %v941
  %v1118 = vpack.c.b16 %v942, %v942
  %v1119 = vpack.c.b16 %v943, %v943
  %v1120 = vpack.c.b16 %v944, %v944
  %v1121 = vpack.c.b16 %v945, %v945
  %v1122 = vpack.c.b16 %v946, %v946
  %v1123 = vpack.c.b16 %v947, %v947
  %v1124 = vpack.c.b16 %v948, %v948
  %v1125 = vpack.c.b16 %v949, %v949
  %v1126 = vpack.c.b16 %v950, %v950
  %v1127 = vpack.c.b16 %v951, %v951
  %v1128 = vpack.c.b16 %v952, %v952
  %v1129 = vpack.c.b16 %v953, %v953
  %v1130 = vpack.c.b16 %v954, %v954
  %v1131 = vpack.c.b16 %v955, %v955
  %v1132 = vpack.c.b16 %v956, %v956
  %v1133 = vpack.c.b16 %v957, %v957
  %v1134 = vpack.c.b16 %v958, %v958
  %v1135 = vpack.c.b16 %v959, %v959
  %v1136 = vpack.c.b16 %v960, %v960
  %v1137 = vpack.c.b16 %v961, %v961
  %v1138 = vpack.c.b16 %v962, %v962
  %v1139 = vpack.c.b16 %v963, %v963
  %v1140 = vpack.c.b16 %v964, %v964
  %v1141 = vpack.c.b16 %v965, %v965
  %v1142 = vpack.c.b16 %v966, %v966
  %v1143 = vpack.c.b16 %v967, %v967
  %v1144 = vpack.c.b16 %v968, %v968
  %v1145 = vpack.c.b16 %v969, %v969
  %v1146 = vpack.c.b16 %v970, %v970
  %v1147 = vpack.c.b16 %v971, %v971
  %v1148 = vpack.c.b16 %v972, %v972
  %v1149 = vpack.c.b16 %v973, %v973
  %v1150 = vpack.c.b16 %v974, %v974
  %v1151 = vpack.c.b16 %v975, %v975
  %v1152 = vpack.c.b16 %v976, %v976
  %v1153 = vpack.c.b16 %v977, %v977
  %v1154 = vpack.c.b16 %v978, %v978
  %v1155 = vpack.c.b16 %v979, %v979
  %v1156 = vpack.c.b16 %v980, %v980
  %v1157 = vpack.c.b16 %v981, %v981
  %v1158 = vpack.c.b16 %v982, %v982
  %v1159 = vpack.c.b16 %v983, %v983
  %v1160 = vpack.c.b16 %v984, %v984
  %v1161 = vpack.c.b16 %v985, %v985
  %v1162 = vpack.c.b16 %v986, %v986
  %v1163 = vpack.c.b16 %v987, %v987
  %v1164 = vpack.c.b16 %v988, %v988
  %v1165 = vpack.c.b16 %v989, %v989
  %v1166 = vpack.c.b16 %v990, %v990
  %v1167 = vpack.c.b16 %v991, %v991
  %v1168 = vpack.c.b16 %v992, %v992
  %v1169 = vpack.c.b16 %v993, %v993
  %v1170 = vpack.c.b16 %v994, %v994
  %v1171 = vpack.c.b16 %v995, %v995
  %v1172 = vpack.c.b16 %v996, %v996
  %v1173 = vpack.c.b16 %v997, %v997
  %v1174 = vpack.c.b16 %v998, %v998
  %v1175 = vpack.c.b16 %v999, %v999
  %v1176 = vpack.c.b16 %v1000, %v1000
  %v1177 = vpack.c.b16 %v1001, %v1001
  %v1178 = vpack.c.b16 %v1002, %v1002
  %v1179 = vpack.c.b16 %v1003, %v1003
  %v1180 = vpack.c.b16 %v1004, %v1004
  %v1181 = vpack.c.b16 %v1005, %v1005
  %v1182 = vpack.c.b16 %v1006, %v1006
  %v1183 = vpack.c.b16 %v1007, %v1007
  %v1184 = vpack.c.b16 %v1008, %v1008
  %v1185 = vpack.c.b16 %v1009, %v1009
  %v1186 = vpack.c.b16 %v1010, %v1010
  %v1187 = vpack.c.b16 %v1011, %v1011
  %v1188 = vpack.c.b16 %v1012, %v1012
  %v1189 = vpack.c.b16 %v1013, %v1013
  %v1190 = vpack.c.b16 %v1014, %v1014
  %v1191 = vpack.c.b16 %v1015, %v1015
  %v1192 = vpack.c.b16 %v1016, %v1016
  %v1193 = vpack.c.b16 %v1017, %v1017
  %v1194 = vpack.c.b16 %v1018, %v1018
  %v1195 = vpack.c.b16 %v1019, %v1019
  %v1196 = vpack.c.b16 %v1020, %v1020
  %v1197 = vpack.c.b16 %v1021, %v1021
  %v1198 = vpack.c.b16 %v1022, %v1022
  %v1199 = vpack.c.b16 %v1023, %v1023
  %v1200 = vpack.c.b16 %v1024, %v1024
  %v1201 = vpack.c.b16 %v1025, %v1025
  %v1202 = vpack.c.b16 %v1026, %v1026
  %v1203 = vpack.c.b16 %v1027, %v1027
  %v1204 = vpack.c.b16 %v1028, %v1028
  %v1205 = vpack.c.b16 %v1029, %v1029
  %v1206 = vpack.c.b16 %v1030, %v1030
  %v1207 = vpack.c.b16 %v1031, %v1031
  %v1208 = vpack.c.b16 %v1032, %v1032
  %v1209 = vpack.c.b16 %v1033, %v1033
  %v1210 = vpack.c.b16 %v1034, %v1034
  %v1211 = vpack.c.b16 %v1035, %v1035
  %v1212 = vpack.c.b16 %v1036, %v1036
  %v1213 = vpack.c.b16 %v1037, %v1037
  %v1214 = vpack.c.b16 %v1038, %v1038
  %v1215 = vpack.c.b16 %v1039, %v1039
  %v1216 = vpack.c.b16 %v1040, %v1040
  %v1217 = vpack.c.b16 %v1041, %v1041
  %v1218 = vpack.c.b16 %v1042, %v1042
  %v1219 = vpack.c.b16 %v1043, %v1043
  %v1220 = vpack.c.b16 %v1044, %v1044
  %v1221 = vpack.c.b16 %v1045, %v1045
  %v1222 = vpack.c.b16 %v1046, %v1046
  %v1223 = vpack.c.b16 %v1047, %v1047
  %v1224 = vpack.c.b16 %v1048, %v1048
  %v1225 = vpack.c.b16 %v1049, %v1049
  %v1226 = vpack.c.b16 %v1050, %v1050
  %v1227 = vpack.c.b16 %v1051, %v1051
  %v1228 = vpack.c.b16 %v1052, %v1052
  %v1229 = vpack.c.b16 %v1053, %v1053
  %v1230 = vpack.c.b16 %v1054, %v1054
  %v1231 = vpack.c.b16 %v1055, %v1055
  %v1232 = vpack.c.b16 %v1056, %v1056
  %v1233 = vpack.c.b16 %v1057, %v1057
  %v1234 = vpack.c.b16 %v1058, %v1058
  %v1235 = vpack.c.b16 %v1059, %v1059
  %v1236 = vpack.c.b16 %v1060, %v1060
  %v1237 = vpack.c.b16 %v1061, %v1061
  %v1238 = vpack.c.b16 %v1062, %v1062
  %v1239 = vpack.c.b16 %v1063, %v1063
  %v1240 = vpack.c.b16 %v1064, %v1064
  %v1241 = vpack.c.b16 %v1065, %v1065
  %v1242 = vpack.c.b16 %v1066, %v1066
  %v1243 = vpack.c.b16 %v1067, %v1067
  %v1244 = vpack.c.b16 %v1068, %v1068
  %v1245 = vpack.c.b16 %v1069, %v1069
  %v1246 = vpack.c.b16 %v1070, %v1070
  %v1247 = vpack.c.b16 %v1071, %v1071
  %v1248 = vpack.c.b16 %v1072, %v1072
  %v1249 = vpack.c.b16 %v1073, %v1073
  %v2130 = vunpack.c.l.b16 %v106
  %v2131 = vunpack.c.h.b16 %v106
  %v2132 = vunpack.c.l.b16 %v107
  %v2133 = vunpack.c.h.b16 %v107
  %v2134 = vunpack.c.l.b16 %v108
  %v2135 = vunpack.c.h.b16 %v108
  %v2136 = vunpack.c.l.b16 %v109
  %v2137 = vunpack.c.h.b16 %v109
  %v2138 = vunpack.c.l.b16 %v110
  %v2139 = vunpack.c.h.b16 %v110
  %v2140 = vunpack.c.l.b16 %v111
  %v2141 = vunpack.c.h.b16 %v111
  %v2142 = vunpack.c.l.b16 %v112
  %v2143 = vunpack.c.h.b16 %v112
  %v2144 = vunpack.c.l.b16 %v113
  %v2145 = vunpack.c.h.b16 %v113
  %v2146 = vunpack.c.l.b16 %v114
  %v2147 = vunpack.c.h.b16 %v114
  %v2148 = vunpack.c.l.b16 %v115
  %v2149 = vunpack.c.h.b16 %v115
  %v2150 = vunpack.c.l.b16 %v116
  %v2151 = vunpack.c.h.b16 %v116
  %v2152 = vunpack.c.l.b16 %v117
  %v2153 = vunpack.c.h.b16 %v117
  %v2154 = vunpack.c.l.b16 %v118
  %v2155 = vunpack.c.h.b16 %v118
  %v2156 = vunpack.c.l.b16 %v119
  %v2157 = vunpack.c.h.b16 %v119
  %v2158 = vunpack.c.l.b16 %v120
  %v2159 = vunpack.c.h.b16 %v120
  %v2160 = vunpack.c.l.b16 %v121
  %v2161 = vunpack.c.h.b16 %v121
  %v2162 = vunpack.c.l.b16 %v122
  %v2163 = vunpack.c.h.b16 %v122
  %v2164 = vunpack.c.l.b16 %v123
  %v2165 = vunpack.c.h.b16 %v123
  %v2166 = vunpack.c.l.b16 %v124
  %v2167 = vunpack.c.h.b16 %v124
  %v2168 = vunpack.c.l.b16 %v125
  %v2169 = vunpack.c.h.b16 %v125
  %v2170 = vunpack.c.l.b16 %v126
  %v2171 = vunpack.c.h.b16 %v126
  %v2172 = vunpack.c.l.b16 %v127
  %v2173 = vunpack.c.h.b16 %v127
  %v2174 = vunpack.c.l.b16 %v128
  %v2175 = vunpack.c.h.b16 %v128
  %v2176 = vunpack.c.l.b16 %v129
  %v2177 = vunpack.c.h.b16 %v129
  %v2178 = vunpack.c.l.b16 %v130
  %v2179 = vunpack.c.h.b16 %v130
  %v2180 = vunpack.c.l.b16 %v131
  %v2181 = vunpack.c.h.b16 %v131
  %v2182 = vunpack.c.l.b16 %v132
  %v2183 = vunpack.c.h.b16 %v132
  %v2184 = vunpack.c.l.b16 %v133
  %v2185 = vunpack.c.h.b16 %v133
  %v2186 = vunpack.c.l.b16 %v134
  %v2187 = vunpack.c.h.b16 %v134
  %v2188 = vunpack.c.l.b16 %v135
  %v2189 = vunpack.c.h.b16 %v135
  %v2190 = vunpack.c.l.b16 %v136
  %v2191 = vunpack.c.h.b16 %v136
  %v2192 = vunpack.c.l.b16 %v137
  %v2193 = vunpack.c.h.b16 %v137
  %v2194 = vunpack.c.l.b16 %v138
  %v2195 = vunpack.c.h.b16 %v138
  %v2196 = vunpack.c.l.b16 %v139
  %v2197 = vunpack.c.h.b16 %v139
  %v2198 = vunpack.c.l.b16 %v140
  %v2199 = vunpack.c.h.b16 %v140
  %v2200 = vunpack.c.l.b16 %v141
  %v2201 = vunpack.c.h.b16 %v141
  %v2202 = vunpack.c.l.b16 %v142
  %v2203 = vunpack.c.h.b16 %v142
  %v2204 = vunpack.c.l.b16 %v143
  %v2205 = vunpack.c.h.b16 %v143
  %v2206 = vunpack.c.l.b16 %v144
  %v2207 = vunpack.c.h.b16 %v144
  %v2208 = vunpack.c.l.b16 %v145
  %v2209 = vunpack.c.h.b16 %v145
  %v2210 = vunpack.c.l.b16 %v146
  %v2211 = vunpack.c.h.b16 %v146
  %v2212 = vunpack.c.l.b16 %v147
  %v2213 = vunpack.c.h.b16 %v147
  %v2214 = vunpack.c.l.b16 %v148
  %v2215 = vunpack.c.h.b16 %v148
  %v2216 = vunpack.c.l.b16 %v149
  %v2217 = vunpack.c.h.b16 %v149
  %v2218 = vunpack.c.l.b16 %v150
  %v2219 = vunpack.c.h.b16 %v150
  %v2220 = vunpack.c.l.b16 %v151
  %v2221 = vunpack.c.h.b16 %v151
  %v2222 = vunpack.c.l.b16 %v152
  %v2223 = vunpack.c.h.b16 %v152
  %v2224 = vunpack.c.l.b16 %v153
  %v2225 = vunpack.c.h.b16 %v153
  %v2226 = vunpack.c.l.b16 %v154
  %v2227 = vunpack.c.h.b16 %v154
  %v2228 = vunpack.c.l.b16 %v155
  %v2229 = vunpack.c.h.b16 %v155
  %v2230 = vunpack.c.l.b16 %v156
  %v2231 = vunpack.c.h.b16 %v156
  %v2232 = vunpack.c.l.b16 %v157
  %v2233 = vunpack.c.h.b16 %v157
  %v2234 = vunpack.c.l.b16 %v158
  %v2235 = vunpack.c.h.b16 %v158
  %v2236 = vunpack.c.l.b16 %v159
  %v2237 = vunpack.c.h.b16 %v159
  %v2238 = vunpack.c.l.b16 %v160
  %v2239 = vunpack.c.h.b16 %v160
  %v2240 = vunpack.c.l.b16 %v161
  %v2241 = vunpack.c.h.b16 %v161
  %v2242 = vunpack.c.l.b16 %v162
  %v2243 = vunpack.c.h.b16 %v162
  %v2244 = vunpack.c.l.b16 %v163
  %v2245 = vunpack.c.h.b16 %v163
  %v2246 = vunpack.c.l.b16 %v164
  %v2247 = vunpack.c.h.b16 %v164
  %v2248 = vunpack.c.l.b16 %v165
  %v2249 = vunpack.c.h.b16 %v165
  %v2250 = vunpack.c.l.b16 %v166
  %v2251 = vunpack.c.h.b16 %v166
  %v2252 = vunpack.c.l.b16 %v167
  %v2253 = vunpack.c.h.b16 %v167
  %v2254 = vunpack.c.l.b16 %v168
  %v2255 = vunpack.c.h.b16 %v168
  %v2256 = vunpack.c.l.b16 %v169
  %v2257 = vunpack.c.h.b16 %v169
  %v2258 = vunpack.c.l.b16 %v170
  %v2259 = vunpack.c.h.b16 %v170
  %v2260 = vunpack.c.l.b16 %v171
  %v2261 = vunpack.c.h.b16 %v171
  %v2262 = vunpack.c.l.b16 %v172
  %v2263 = vunpack.c.h.b16 %v172
  %v2264 = vunpack.c.l.b16 %v173
  %v2265 = vunpack.c.h.b16 %v173
  %v2266 = vunpack.c.l.b16 %v174
  %v2267 = vunpack.c.h.b16 %v174
  %v2268 = vunpack.c.l.b16 %v175
  %v2269 = vunpack.c.h.b16 %v175
  %v2270 = vunpack.c.l.b16 %v176
  %v2271 = vunpack.c.h.b16 %v176
  %v2272 = vunpack.c.l.b16 %v177
  %v2273 = vunpack.c.h.b16 %v177
  %v2274 = vunpack.c.l.b16 %v178
  %v2275 = vunpack.c.h.b16 %v178
  %v2276 = vunpack.c.l.b16 %v179
  %v2277 = vunpack.c.h.b16 %v179
  %v2278 = vunpack.c.l.b16 %v180
  %v2279 = vunpack.c.h.b16 %v180
  %v2280 = vunpack.c.l.b16 %v181
  %v2281 = vunpack.c.h.b16 %v181
  %v2282 = vunpack.c.l.b16 %v182
  %v2283 = vunpack.c.h.b16 %v182
  %v2284 = vunpack.c.l.b16 %v183
  %v2285 = vunpack.c.h.b16 %v183
  %v2286 = vunpack.c.l.b16 %v184
  %v2287 = vunpack.c.h.b16 %v184
  %v2288 = vunpack.c.l.b16 %v185
  %v2289 = vunpack.c.h.b16 %v185
  %v2290 = vunpack.c.l.b16 %v186
  %v2291 = vunpack.c.h.b16 %v186
  %v2292 = vunpack.c.l.b16 %v187
  %v2293 = vunpack.c.h.b16 %v187
  %v2294 = vunpack.c.l.b16 %v188
  %v2295 = vunpack.c.h.b16 %v188
  %v2296 = vunpack.c.l.b16 %v189
  %v2297 = vunpack.c.h.b16 %v189
  %v2298 = vunpack.c.l.b16 %v190
  %v2299 = vunpack.c.h.b16 %v190
  %v2300 = vunpack.c.l.b16 %v191
  %v2301 = vunpack.c.h.b16 %v191
  %v2302 = vunpack.c.l.b16 %v192
  %v2303 = vunpack.c.h.b16 %v192
  %v2304 = vunpack.c.l.b16 %v193
  %v2305 = vunpack.c.h.b16 %v193
  %v2306 = vunpack.c.l.b16 %v194
  %v2307 = vunpack.c.h.b16 %v194
  %v2308 = vunpack.c.l.b16 %v195
  %v2309 = vunpack.c.h.b16 %v195
  %v2310 = vunpack.c.l.b16 %v196
  %v2311 = vunpack.c.h.b16 %v196
  %v2312 = vunpack.c.l.b16 %v197
  %v2313 = vunpack.c.h.b16 %v197
  %v2314 = vunpack.c.l.b16 %v198
  %v2315 = vunpack.c.h.b16 %v198
  %v2316 = vunpack.c.l.b16 %v199
  %v2317 = vunpack.c.h.b16 %v199
  %v2318 = vunpack.c.l.b16 %v200
  %v2319 = vunpack.c.h.b16 %v200
  %v2320 = vunpack.c.l.b16 %v201
  %v2321 = vunpack.c.h.b16 %v201
  %v2322 = vunpack.c.l.b16 %v202
  %v2323 = vunpack.c.h.b16 %v202
  %v2324 = vunpack.c.l.b16 %v203
  %v2325 = vunpack.c.h.b16 %v203
  %v2326 = vunpack.c.l.b16 %v204
  %v2327 = vunpack.c.h.b16 %v204
  %v2328 = vunpack.c.l.b16 %v205
  %v2329 = vunpack.c.h.b16 %v205
  %v2330 = vunpack.c.l.b16 %v206
  %v2331 = vunpack.c.h.b16 %v206
  %v2332 = vunpack.c.l.b16 %v207
  %v2333 = vunpack.c.h.b16 %v207
  %v2334 = vunpack.c.l.b16 %v208
  %v2335 = vunpack.c.h.b16 %v208
  %v2336 = vunpack.c.l.b16 %v209
  %v2337 = vunpack.c.h.b16 %v209
  %v2338 = vunpack.c.l.b16 %v210
  %v2339 = vunpack.c.h.b16 %v210
  %v2340 = vunpack.c.l.b16 %v211
  %v2341 = vunpack.c.h.b16 %v211
  %v2342 = vunpack.c.l.b16 %v212
  %v2343 = vunpack.c.h.b16 %v212
  %v2344 = vunpack.c.l.b16 %v213
  %v2345 = vunpack.c.h.b16 %v213
  %v2346 = vunpack.c.l.b16 %v214
  %v2347 = vunpack.c.h.b16 %v214
  %v2348 = vunpack.c.l.b16 %v215
  %v2349 = vunpack.c.h.b16 %v215
  %v2350 = vunpack.c.l.b16 %v216
  %v2351 = vunpack.c.h.b16 %v216
  %v2352 = vunpack.c.l.b16 %v217
  %v2353 = vunpack.c.h.b16 %v217
  %v2354 = vunpack.c.l.b16 %v218
  %v2355 = vunpack.c.h.b16 %v218
  %v2356 = vunpack.c.l.b16 %v219
  %v2357 = vunpack.c.h.b16 %v219
  %v2358 = vunpack.c.l.b16 %v220
  %v2359 = vunpack.c.h.b16 %v220
  %v2360 = vunpack.c.l.b16 %v221
  %v2361 = vunpack.c.h.b16 %v221
  %v2362 = vunpack.c.l.b16 %v222
  %v2363 = vunpack.c.h.b16 %v222
  %v2364 = vunpack.c.l.b16 %v223
  %v2365 = vunpack.c.h.b16 %v223
  %v2366 = vunpack.c.l.b16 %v224
  %v2367 = vunpack.c.h.b16 %v224
  %v2368 = vunpack.c.l.b16 %v225
  %v2369 = vunpack.c.h.b16 %v225
  %v2370 = vunpack.c.l.b16 %v226
  %v2371 = vunpack.c.h.b16 %v226
  %v2372 = vunpack.c.l.b16 %v227
  %v2373 = vunpack.c.h.b16 %v227
  %v2374 = vunpack.c.l.b16 %v228
  %v2375 = vunpack.c.h.b16 %v228
  %v2376 = vunpack.c.l.b16 %v229
  %v2377 = vunpack.c.h.b16 %v229
  %v2378 = vunpack.c.l.b16 %v230
  %v2379 = vunpack.c.h.b16 %v230
  %v2380 = vunpack.c.l.b16 %v231
  %v2381 = vunpack.c.h.b16 %v231
  %v2382 = vunpack.c.l.b16 %v232
  %v2383 = vunpack.c.h.b16 %v232
  %v2384 = vunpack.c.l.b16 %v233
  %v2385 = vunpack.c.h.b16 %v233
  %v2386 = vunpack.c.l.b16 %v234
  %v2387 = vunpack.c.h.b16 %v234
  %v2388 = vunpack.c.l.b16 %v235
  %v2389 = vunpack.c.h.b16 %v235
  %v2390 = vunpack.c.l.b16 %v236
  %v2391 = vunpack.c.h.b16 %v236
  %v2392 = vunpack.c.l.b16 %v237
  %v2393 = vunpack.c.h.b16 %v237
  %v2394 = vunpack.c.l.b16 %v238
  %v2395 = vunpack.c.h.b16 %v238
  %v2396 = vunpack.c.l.b16 %v239
  %v2397 = vunpack.c.h.b16 %v239
  %v2398 = vunpack.c.l.b16 %v240
  %v2399 = vunpack.c.h.b16 %v240
  %v2400 = vunpack.c.l.b16 %v241
  %v2401 = vunpack.c.h.b16 %v241
  %v2402 = vunpack.c.l.b16 %v242
  %v2403 = vunpack.c.h.b16 %v242
  %v2404 = vunpack.c.l.b16 %v243
  %v2405 = vunpack.c.h.b16 %v243
  %v2406 = vunpack.c.l.b16 %v244
  %v2407 = vunpack.c.h.b16 %v244
  %v2408 = vunpack.c.l.b16 %v245
  %v2409 = vunpack.c.h.b16 %v245
  %v2410 = vunpack.c.l.b16 %v246
  %v2411 = vunpack.c.h.b16 %v246
  %v2412 = vunpack.c.l.b16 %v247
  %v2413 = vunpack.c.h.b16 %v247
  %v2414 = vunpack.c.l.b16 %v248
  %v2415 = vunpack.c.h.b16 %v248
  %v2416 = vunpack.c.l.b16 %v249
  %v2417 = vunpack.c.h.b16 %v249
  %v2418 = vunpack.c.l.b16 %v250
  %v2419 = vunpack.c.h.b16 %v250
  %v2420 = vunpack.c.l.b16 %v251
  %v2421 = vunpack.c.h.b16 %v251
  %v2422 = vunpack.c.l.b16 %v252
  %v2423 = vunpack.c.h.b16 %v252
  %v2424 = vunpack.c.l.b16 %v253
  %v2425 = vunpack.c.h.b16 %v253
  %v2426 = vunpack.c.l.b16 %v254
  %v2427 = vunpack.c.h.b16 %v254
  %v2428 = vunpack.c.l.b16 %v255
  %v2429 = vunpack.c.h.b16 %v255
  %v2430 = vunpack.c.l.b16 %v256
  %v2431 = vunpack.c.h.b16 %v256
  %v2432 = vunpack.c.l.b16 %v257
  %v2433 = vunpack.c.h.b16 %v257
  %v2434 = vunpack.c.l.b16 %v258
  %v2435 = vunpack.c.h.b16 %v258
  %v2436 = vunpack.c.l.b16 %v259
  %v2437 = vunpack.c.h.b16 %v259
  %v2438 = vunpack.c.l.b16 %v260
  %v2439 = vunpack.c.h.b16 %v260
  %v2440 = vunpack.c.l.b16 %v261
  %v2441 = vunpack.c.h.b16 %v261
  %v2442 = vunpack.c.l.b16 %v262
  %v2443 = vunpack.c.h.b16 %v262
  %v2444 = vunpack.c.l.b16 %v263
  %v2445 = vunpack.c.h.b16 %v263
  %v2446 = vunpack.c.l.b16 %v264
  %v2447 = vunpack.c.h.b16 %v264
  %v2448 = vunpack.c.l.b16 %v265
  %v2449 = vunpack.c.h.b16 %v265
  %v2450 = vunpack.c.l.b16 %v266
  %v2451 = vunpack.c.h.b16 %v266
  %v2452 = vunpack.c.l.b16 %v267
  %v2453 = vunpack.c.h.b16 %v267
  %v2454 = vunpack.c.l.b16 %v268
  %v2455 = vunpack.c.h.b16 %v268
  %v2456 = vunpack.c.l.b16 %v269
  %v2457 = vunpack.c.h.b16 %v269
  %v2458 = vunpack.c.l.b16 %v270
  %v2459 = vunpack.c.h.b16 %v270
  %v2460 = vunpack.c.l.b16 %v271
  %v2461 = vunpack.c.h.b16 %v271
  %v2462 = vunpack.c.l.b16 %v272
  %v2463 = vunpack.c.h.b16 %v272
  %v2464 = vunpack.c.l.b16 %v273
  %v2465 = vunpack.c.h.b16 %v273
  %v2466 = vunpack.c.l.b16 %v274
  %v2467 = vunpack.c.h.b16 %v274
  %v2468 = vunpack.c.l.b16 %v275
  %v2469 = vunpack.c.h.b16 %v275
  %v2470 = vunpack.c.l.b16 %v276
  %v2471 = vunpack.c.h.b16 %v276
  %v2472 = vunpack.c.l.b16 %v277
  %v2473 = vunpack.c.h.b16 %v277
  %v2474 = vunpack.c.l.b16 %v278
  %v2475 = vunpack.c.h.b16 %v278
  %v2476 = vunpack.c.l.b16 %v279
  %v2477 = vunpack.c.h.b16 %v279
  %v2478 = vunpack.c.l.b16 %v280
  %v2479 = vunpack.c.h.b16 %v280
  %v2480 = vunpack.c.l.b16 %v281
  %v2481 = vunpack.c.h.b16 %v281
  %v2482 = vunpack.c.l.b16 %v282
  %v2483 = vunpack.c.h.b16 %v282
  %v2484 = vunpack.c.l.b16 %v283
  %v2485 = vunpack.c.h.b16 %v283
  %v2486 = vunpack.c.l.b16 %v284
  %v2487 = vunpack.c.h.b16 %v284
  %v2488 = vunpack.c.l.b16 %v285
  %v2489 = vunpack.c.h.b16 %v285
  %v2490 = vunpack.c.l.b16 %v286
  %v2491 = vunpack.c.h.b16 %v286
  %v2492 = vunpack.c.l.b16 %v287
  %v2493 = vunpack.c.h.b16 %v287
  %v2494 = vunpack.c.l.b16 %v288
  %v2495 = vunpack.c.h.b16 %v288
  %v2496 = vunpack.c.l.b16 %v289
  %v2497 = vunpack.c.h.b16 %v289
  %v2498 = vunpack.c.l.b16 %v290
  %v2499 = vunpack.c.h.b16 %v290
  %v2500 = vunpack.c.l.b16 %v291
  %v2501 = vunpack.c.h.b16 %v291
  %v2502 = vunpack.c.l.b16 %v292
  %v2503 = vunpack.c.h.b16 %v292
  %v2504 = vunpack.c.l.b16 %v293
  %v2505 = vunpack.c.h.b16 %v293
  %v2506 = vunpack.c.l.b16 %v294
  %v2507 = vunpack.c.h.b16 %v294
  %v2508 = vunpack.c.l.b16 %v295
  %v2509 = vunpack.c.h.b16 %v295
  %v2510 = vunpack.c.l.b16 %v296
  %v2511 = vunpack.c.h.b16 %v296
  %v2512 = vunpack.c.l.b16 %v297
  %v2513 = vunpack.c.h.b16 %v297
  %v2514 = vunpack.c.l.b16 %v298
  %v2515 = vunpack.c.h.b16 %v298
  %v2516 = vunpack.c.l.b16 %v299
  %v2517 = vunpack.c.h.b16 %v299
  %v2518 = vunpack.c.l.b16 %v300
  %v2519 = vunpack.c.h.b16 %v300
  %v2520 = vunpack.c.l.b16 %v301
  %v2521 = vunpack.c.h.b16 %v301
  %v2522 = vunpack.c.l.b16 %v302
  %v2523 = vunpack.c.h.b16 %v302
  %v2524 = vunpack.c.l.b16 %v303
  %v2525 = vunpack.c.h.b16 %v303
  %v2526 = vunpack.c.l.b16 %v304
  %v2527 = vunpack.c.h.b16 %v304
  %v2528 = vunpack.c.l.b16 %v305
  %v2529 = vunpack.c.h.b16 %v305
  %v2530 = vunpack.c.l.b16 %v306
  %v2531 = vunpack.c.h.b16 %v306
  %v2532 = vunpack.c.l.b16 %v307
  %v2533 = vunpack.c.h.b16 %v307
  %v2534 = vunpack.c.l.b16 %v308
  %v2535 = vunpack.c.h.b16 %v308
  %v2536 = vunpack.c.l.b16 %v309
  %v2537 = vunpack.c.h.b16 %v309
  %v2538 = vunpack.c.l.b16 %v310
  %v2539 = vunpack.c.h.b16 %v310
  %v2540 = vunpack.c.l.b16 %v311
  %v2541 = vunpack.c.h.b16 %v311
  %v2542 = vunpack.c.l.b16 %v312
  %v2543 = vunpack.c.h.b16 %v312
  %v2544 = vunpack.c.l.b16 %v313
  %v2545 = vunpack.c.h.b16 %v313
  %v2546 = vunpack.c.l.b16 %v314
  %v2547 = vunpack.c.h.b16 %v314
  %v2548 = vunpack.c.l.b16 %v315
  %v2549 = vunpack.c.h.b16 %v315
  %v2550 = vunpack.c.l.b16 %v316
  %v2551 = vunpack.c.h.b16 %v316
  %v2552 = vunpack.c.l.b16 %v317
  %v2553 = vunpack.c.h.b16 %v317
  %v2554 = vunpack.c.l.b16 %v318
  %v2555 = vunpack.c.h.b16 %v318
  %v2556 = vunpack.c.l.b16 %v319
  %v2557 = vunpack.c.h.b16 %v319
  %v2558 = vunpack.c.l.b16 %v320
  %v2559 = vunpack.c.h.b16 %v320
  %v2560 = vunpack.c.l.b16 %v321
  %v2561 = vunpack.c.h.b16 %v321
  %v2562 = vunpack.c.l.b16 %v322
  %v2563 = vunpack.c.h.b16 %v322
  %v2564 = vunpack.c.l.b16 %v323
  %v2565 = vunpack.c.h.b16 %v323
  %v2566 = vunpack.c.l.b16 %v324
  %v2567 = vunpack.c.h.b16 %v324
  %v2568 = vunpack.c.l.b16 %v325
  %v2569 = vunpack.c.h.b16 %v325
  %v2570 = vunpack.c.l.b16 %v326
  %v2571 = vunpack.c.h.b16 %v326
  %v2572 = vunpack.c.l.b16 %v327
  %v2573 = vunpack.c.h.b16 %v327
  %v2574 = vunpack.c.l.b16 %v328
  %v2575 = vunpack.c.h.b16 %v328
  %v2576 = vunpack.c.l.b16 %v329
  %v2577 = vunpack.c.h.b16 %v329
  %v2578 = vunpack.c.l.b16 %v330
  %v2579 = vunpack.c.h.b16 %v330
  %v2580 = vunpack.c.l.b16 %v331
  %v2581 = vunpack.c.h.b16 %v331
  %v2582 = vunpack.c.l.b16 %v332
  %v2583 = vunpack.c.h.b16 %v332
  %v2584 = vunpack.c.l.b16 %v333
  %v2585 = vunpack.c.h.b16 %v333
  %v2586 = vunpack.c.l.b16 %v334
  %v2587 = vunpack.c.h.b16 %v334
  %v2588 = vunpack.c.l.b16 %v335
  %v2589 = vunpack.c.h.b16 %v335
  %v2590 = vunpack.c.l.b16 %v336
  %v2591 = vunpack.c.h.b16 %v336
  %v2592 = vunpack.c.l.b16 %v337
  %v2593 = vunpack.c.h.b16 %v337
  %v2594 = vunpack.c.l.b16 %v338
  %v2595 = vunpack.c.h.b16 %v338
  %v2596 = vunpack.c.l.b16 %v339
  %v2597 = vunpack.c.h.b16 %v339
  %v2598 = vunpack.c.l.b16 %v340
  %v2599 = vunpack.c.h.b16 %v340
  %v2600 = vunpack.c.l.b16 %v341
  %v2601 = vunpack.c.h.b16 %v341
  %v2602 = vunpack.c.l.b16 %v342
  %v2603 = vunpack.c.h.b16 %v342
  %v2604 = vunpack.c.l.b16 %v343
  %v2605 = vunpack.c.h.b16 %v343
  %v2606 = vunpack.c.l.b16 %v344
  %v2607 = vunpack.c.h.b16 %v344
  %v2608 = vunpack.c.l.b16 %v345
  %v2609 = vunpack.c.h.b16 %v345
  %v2610 = vunpack.c.l.b16 %v346
  %v2611 = vunpack.c.h.b16 %v346
  %v2612 = vunpack.c.l.b16 %v347
  %v2613 = vunpack.c.h.b16 %v347
  %v2614 = vunpack.c.l.b16 %v348
  %v2615 = vunpack.c.h.b16 %v348
  %v2616 = vunpack.c.l.b16 %v349
  %v2617 = vunpack.c.h.b16 %v349
  %v2618 = vunpack.c.l.b16 %v350
  %v2619 = vunpack.c.h.b16 %v350
  %v2620 = vunpack.c.l.b16 %v351
  %v2621 = vunpack.c.h.b16 %v351
  %v2622 = vunpack.c.l.b16 %v352
  %v2623 = vunpack.c.h.b16 %v352
  %v2624 = vunpack.c.l.b16 %v353
  %v2625 = vunpack.c.h.b16 %v353
  %v2626 = vunpack.c.l.b16 %v354
  %v2627 = vunpack.c.h.b16 %v354
  %v2628 = vunpack.c.l.b16 %v355
  %v2629 = vunpack.c.h.b16 %v355
  %v2630 = vunpack.c.l.b16 %v356
  %v2631 = vunpack.c.h.b16 %v356
  %v2632 = vunpack.c.l.b16 %v357
  %v2633 = vunpack.c.h.b16 %v357
  %v2634 = vunpack.c.l.b16 %v358
  %v2635 = vunpack.c.h.b16 %v358
  %v2636 = vunpack.c.l.b16 %v359
  %v2637 = vunpack.c.h.b16 %v359
  %v2638 = vunpack.c.l.b16 %v360
  %v2639 = vunpack.c.h.b16 %v360
  %v2640 = vunpack.c.l.b16 %v361
  %v2641 = vunpack.c.h.b16 %v361
  %v2642 = vunpack.c.l.b16 %v362
  %v2643 = vunpack.c.h.b16 %v362
  %v2644 = vunpack.c.l.b16 %v363
  %v2645 = vunpack.c.h.b16 %v363
  %v2646 = vunpack.c.l.b16 %v364
  %v2647 = vunpack.c.h.b16 %v364
  %v2648 = vunpack.c.l.b16 %v365
  %v2649 = vunpack.c.h.b16 %v365
  %v2650 = vunpack.c.l.b16 %v366
  %v2651 = vunpack.c.h.b16 %v366
  %v2652 = vunpack.c.l.b16 %v367
  %v2653 = vunpack.c.h.b16 %v367
  %v2654 = vunpack.c.l.b16 %v368
  %v2655 = vunpack.c.h.b16 %v368
  %v2656 = vunpack.c.l.b16 %v369
  %v2657 = vunpack.c.h.b16 %v369
  %v2658 = vunpack.c.l.b16 %v370
  %v2659 = vunpack.c.h.b16 %v370
  %v2660 = vunpack.c.l.b16 %v371
  %v2661 = vunpack.c.h.b16 %v371
  %v2662 = vunpack.c.l.b16 %v372
  %v2663 = vunpack.c.h.b16 %v372
  %v2664 = vunpack.c.l.b16 %v373
  %v2665 = vunpack.c.h.b16 %v373
  %v2666 = vunpack.c.l.b16 %v374
  %v2667 = vunpack.c.h.b16 %v374
  %v2668 = vunpack.c.l.b16 %v375
  %v2669 = vunpack.c.h.b16 %v375
  %v2670 = vunpack.c.l.b16 %v376
  %v2671 = vunpack.c.h.b16 %v376
  %v2672 = vunpack.c.l.b16 %v377
  %v2673 = vunpack.c.h.b16 %v377
  %v2674 = vunpack.c.l.b16 %v378
  %v2675 = vunpack.c.h.b16 %v378
  %v2676 = vunpack.c.l.b16 %v379
  %v2677 = vunpack.c.h.b16 %v379
  %v2678 = vunpack.c.l.b16 %v380
  %v2679 = vunpack.c.h.b16 %v380
  %v2680 = vunpack.c.l.b16 %v381
  %v2681 = vunpack.c.h.b16 %v381
  %v2682 = vunpack.c.l.b16 %v382
  %v2683 = vunpack.c.h.b16 %v382
  %v2684 = vunpack.c.l.b16 %v383
  %v2685 = vunpack.c.h.b16 %v383
  %v2686 = vunpack.c.l.b16 %v384
  %v2687 = vunpack.c.h.b16 %v384
  %v2688 = vunpack.c.l.b16 %v385
  %v2689 = vunpack.c.h.b16 %v385
  %v2690 = vunpack.c.l.b16 %v386
  %v2691 = vunpack.c.h.b16 %v386
  %v2692 = vunpack.c.l.b16 %v387
  %v2693 = vunpack.c.h.b16 %v387
  %v2694 = vunpack.c.l.b16 %v388
  %v2695 = vunpack.c.h.b16 %v388
  %v2696 = vunpack.c.l.b16 %v389
  %v2697 = vunpack.c.h.b16 %v389
  %v2698 = vunpack.c.l.b16 %v390
  %v2699 = vunpack.c.h.b16 %v390
  %v2700 = vunpack.c.l.b16 %v391
  %v2701 = vunpack.c.h.b16 %v391
  %v2702 = vunpack.c.l.b16 %v392
  %v2703 = vunpack.c.h.b16 %v392
  %v2704 = vunpack.c.l.b16 %v393
  %v2705 = vunpack.c.h.b16 %v393
  %v2706 = vunpack.c.l.b16 %v394
  %v2707 = vunpack.c.h.b16 %v394
  %v2708 = vunpack.c.l.b16 %v395
  %v2709 = vunpack.c.h.b16 %v395
  %v2710 = vunpack.c.l.b16 %v396
  %v2711 = vunpack.c.h.b16 %v396
  %v2712 = vunpack.c.l.b16 %v397
  %v2713 = vunpack.c.h.b16 %v397
  %v2714 = vunpack.c.l.b16 %v398
  %v2715 = vunpack.c.h.b16 %v398
  %v2716 = vunpack.c.l.b16 %v399
  %v2717 = vunpack.c.h.b16 %v399
  %v2718 = vunpack.c.l.b16 %v400
  %v2719 = vunpack.c.h.b16 %v400
  %v2720 = vunpack.c.l.b16 %v401
  %v2721 = vunpack.c.h.b16 %v401
  %v2722 = vunpack.c.l.b16 %v402
  %v2723 = vunpack.c.h.b16 %v402
  %v2724 = vunpack.c.l.b16 %v403
  %v2725 = vunpack.c.h.b16 %v403
  %v2726 = vunpack.c.l.b16 %v404
  %v2727 = vunpack.c.h.b16 %v404
  %v2728 = vunpack.c.l.b16 %v405
  %v2729 = vunpack.c.h.b16 %v405
  %v2730 = vunpack.c.l.b16 %v406
  %v2731 = vunpack.c.h.b16 %v406
  %v2732 = vunpack.c.l.b16 %v407
  %v2733 = vunpack.c.h.b16 %v407
  %v2734 = vunpack.c.l.b16 %v408
  %v2735 = vunpack.c.h.b16 %v408
  %v2736 = vunpack.c.l.b16 %v409
  %v2737 = vunpack.c.h.b16 %v409
  %v2738 = vunpack.c.l.b16 %v410
  %v2739 = vunpack.c.h.b16 %v410
  %v2740 = vunpack.c.l.b16 %v411
  %v2741 = vunpack.c.h.b16 %v411
  %v2742 = vunpack.c.l.b16 %v412
  %v2743 = vunpack.c.h.b16 %v412
  %v2744 = vunpack.c.l.b16 %v413
  %v2745 = vunpack.c.h.b16 %v413
  %v2746 = vunpack.c.l.b16 %v414
  %v2747 = vunpack.c.h.b16 %v414
  %v2748 = vunpack.c.l.b16 %v415
  %v2749 = vunpack.c.h.b16 %v415
  %v2750 = vunpack.c.l.b16 %v416
  %v2751 = vunpack.c.h.b16 %v416
  %v2752 = vunpack.c.l.b16 %v417
  %v2753 = vunpack.c.h.b16 %v417
  %v2754 = vunpack.c.l.b16 %v418
  %v2755 = vunpack.c.h.b16 %v418
  %v2756 = vunpack.c.l.b16 %v419
  %v2757 = vunpack.c.h.b16 %v419
  %v2758 = vunpack.c.l.b16 %v420
  %v2759 = vunpack.c.h.b16 %v420
  %v2760 = vunpack.c.l.b16 %v421
  %v2761 = vunpack.c.h.b16 %v421
  %v2762 = vunpack.c.l.b16 %v422
  %v2763 = vunpack.c.h.b16 %v422
  %v2764 = vunpack.c.l.b16 %v423
  %v2765 = vunpack.c.h.b16 %v423
  %v2766 = vunpack.c.l.b16 %v424
  %v2767 = vunpack.c.h.b16 %v424
  %v2768 = vunpack.c.l.b16 %v425
  %v2769 = vunpack.c.h.b16 %v425
  %v2770 = vunpack.c.l.b16 %v426
  %v2771 = vunpack.c.h.b16 %v426
  %v2772 = vunpack.c.l.b16 %v427
  %v2773 = vunpack.c.h.b16 %v427
  %v2774 = vunpack.c.l.b16 %v428
  %v2775 = vunpack.c.h.b16 %v428
  %v2776 = vunpack.c.l.b16 %v429
  %v2777 = vunpack.c.h.b16 %v429
  %v2778 = vunpack.c.l.b16 %v430
  %v2779 = vunpack.c.h.b16 %v430
  %v2780 = vunpack.c.l.b16 %v431
  %v2781 = vunpack.c.h.b16 %v431
  %v2782 = vunpack.c.l.b16 %v432
  %v2783 = vunpack.c.h.b16 %v432
  %v2784 = vunpack.c.l.b16 %v433
  %v2785 = vunpack.c.h.b16 %v433
  %v2786 = vunpack.c.l.b16 %v434
  %v2787 = vunpack.c.h.b16 %v434
  %v2788 = vunpack.c.l.b16 %v435
  %v2789 = vunpack.c.h.b16 %v435
  %v2790 = vunpack.c.l.b16 %v436
  %v2791 = vunpack.c.h.b16 %v436
  %v2792 = vunpack.c.l.b16 %v437
  %v2793 = vunpack.c.h.b16 %v437
  %v2794 = vunpack.c.l.b16 %v438
  %v2795 = vunpack.c.h.b16 %v438
  %v2796 = vunpack.c.l.b16 %v439
  %v2797 = vunpack.c.h.b16 %v439
  %v2798 = vunpack.c.l.b16 %v440
  %v2799 = vunpack.c.h.b16 %v440
  %v2800 = vunpack.c.l.b16 %v441
  %v2801 = vunpack.c.h.b16 %v441
  %v2802 = vunpack.c.l.b16 %v442
  %v2803 = vunpack.c.h.b16 %v442
  %v2804 = vunpack.c.l.b16 %v443
  %v2805 = vunpack.c.h.b16 %v443
  %v2806 = vunpack.c.l.b16 %v444
  %v2807 = vunpack.c.h.b16 %v444
  %v2808 = vunpack.c.l.b16 %v445
  %v2809 = vunpack.c.h.b16 %v445
  %v2810 = vunpack.c.l.b16 %v446
  %v2811 = vunpack.c.h.b16 %v446
  %v2812 = vunpack.c.l.b16 %v447
  %v2813 = vunpack.c.h.b16 %v447
  %v2814 = vunpack.c.l.b16 %v448
  %v2815 = vunpack.c.h.b16 %v448
  %v2816 = vunpack.c.l.b16 %v449
  %v2817 = vunpack.c.h.b16 %v449
  %v2818 = vunpack.c.l.b16 %v450
  %v2819 = vunpack.c.h.b16 %v450
  %v2820 = vunpack.c.l.b16 %v451
  %v2821 = vunpack.c.h.b16 %v451
  %v2822 = vunpack.c.l.b16 %v452
  %v2823 = vunpack.c.h.b16 %v452
  %v2824 = vunpack.c.l.b16 %v453
  %v2825 = vunpack.c.h.b16 %v453
  %v2826 = vunpack.c.l.b16 %v454
  %v2827 = vunpack.c.h.b16 %v454
  %v2828 = vunpack.c.l.b16 %v455
  %v2829 = vunpack.c.h.b16 %v455
  %v2830 = vunpack.c.l.b16 %v456
  %v2831 = vunpack.c.h.b16 %v456
  %v2832 = vunpack.c.l.b16 %v457
  %v2833 = vunpack.c.h.b16 %v457
  %v2834 = vunpack.c.l.b16 %v458
  %v2835 = vunpack.c.h.b16 %v458
  %v2836 = vunpack.c.l.b16 %v459
  %v2837 = vunpack.c.h.b16 %v459
  %v2838 = vunpack.c.l.b16 %v460
  %v2839 = vunpack.c.h.b16 %v460
  %v2840 = vunpack.c.l.b16 %v461
  %v2841 = vunpack.c.h.b16 %v461
  %v2842 = vunpack.c.l.b16 %v462
  %v2843 = vunpack.c.h.b16 %v462
  %v2844 = vunpack.c.l.b16 %v463
  %v2845 = vunpack.c.h.b16 %v463
  %v2846 = vunpack.c.l.b16 %v464
  %v2847 = vunpack.c.h.b16 %v464
  %v2848 = vunpack.c.l.b16 %v465
  %v2849 = vunpack.c.h.b16 %v465
  %v2850 = vunpack.c.l.b16 %v466
  %v2851 = vunpack.c.h.b16 %v466
  %v2852 = vunpack.c.l.b16 %v467
  %v2853 = vunpack.c.h.b16 %v467
  %v2854 = vunpack.c.l.b16 %v468
  %v2855 = vunpack.c.h.b16 %v468
  %v2856 = vunpack.c.l.b16 %v469
  %v2857 = vunpack.c.h.b16 %v469
  %v2858 = vunpack.c.l.b16 %v470
  %v2859 = vunpack.c.h.b16 %v470
  %v2860 = vunpack.c.l.b16 %v471
  %v2861 = vunpack.c.h.b16 %v471
  %v2862 = vunpack.c.l.b16 %v472
  %v2863 = vunpack.c.h.b16 %v472
  %v2864 = vunpack.c.l.b16 %v473
  %v2865 = vunpack.c.h.b16 %v473
  %v2866 = vunpack.c.l.b16 %v474
  %v2867 = vunpack.c.h.b16 %v474
  %v2868 = vunpack.c.l.b16 %v475
  %v2869 = vunpack.c.h.b16 %v475
  %v2870 = vunpack.c.l.b16 %v476
  %v2871 = vunpack.c.h.b16 %v476
  %v2872 = vunpack.c.l.b16 %v477
  %v2873 = vunpack.c.h.b16 %v477
  %v2874 = vunpack.c.l.b16 %v478
  %v2875 = vunpack.c.h.b16 %v478
  %v2876 = vunpack.c.l.b16 %v479
  %v2877 = vunpack.c.h.b16 %v479
  %v2878 = vunpack.c.l.b16 %v480
  %v2879 = vunpack.c.h.b16 %v480
  %v2880 = vunpack.c.l.b16 %v481
  %v2881 = vunpack.c.h.b16 %v481
  %v2882 = vunpack.c.l.b16 %v482
  %v2883 = vunpack.c.h.b16 %v482
  %v2884 = vunpack.c.l.b16 %v483
  %v2885 = vunpack.c.h.b16 %v483
  %v2886 = vunpack.c.l.b16 %v484
  %v2887 = vunpack.c.h.b16 %v484
  %v2888 = vunpack.c.l.b16 %v485
  %v2889 = vunpack.c.h.b16 %v485
  %v2890 = vunpack.c.l.b16 %v486
  %v2891 = vunpack.c.h.b16 %v486
  %v2892 = vunpack.c.l.b16 %v487
  %v2893 = vunpack.c.h.b16 %v487
  %v2894 = vunpack.c.l.b16 %v488
  %v2895 = vunpack.c.h.b16 %v488
  %v2896 = vunpack.c.l.b16 %v489
  %v2897 = vunpack.c.h.b16 %v489
  %v2898 = vunpack.c.l.b16 %v490
  %v2899 = vunpack.c.h.b16 %v490
  %v2900 = vunpack.c.l.b16 %v491
  %v2901 = vunpack.c.h.b16 %v491
  %v2902 = vunpack.c.l.b16 %v492
  %v2903 = vunpack.c.h.b16 %v492
  %v2904 = vunpack.c.l.b16 %v493
  %v2905 = vunpack.c.h.b16 %v493
  %v2906 = vunpack.c.l.b16 %v494
  %v2907 = vunpack.c.h.b16 %v494
  %v2908 = vunpack.c.l.b16 %v495
  %v2909 = vunpack.c.h.b16 %v495
  %v2910 = vunpack.c.l.b16 %v496
  %v2911 = vunpack.c.h.b16 %v496
  %v2912 = vunpack.c.l.b16 %v497
  %v2913 = vunpack.c.h.b16 %v497
  %v2914 = vunpack.c.l.b16 %v498
  %v2915 = vunpack.c.h.b16 %v498
  %v2916 = vunpack.c.l.b16 %v499
  %v2917 = vunpack.c.h.b16 %v499
  %v2918 = vunpack.c.l.b16 %v500
  %v2919 = vunpack.c.h.b16 %v500
  %v2920 = vunpack.c.l.b16 %v501
  %v2921 = vunpack.c.h.b16 %v501
  %v2922 = vunpack.c.l.b16 %v502
  %v2923 = vunpack.c.h.b16 %v502
  %v2924 = vunpack.c.l.b16 %v503
  %v2925 = vunpack.c.h.b16 %v503
  %v2926 = vunpack.c.l.b16 %v504
  %v2927 = vunpack.c.h.b16 %v504
  %v2928 = vunpack.c.l.b16 %v505
  %v2929 = vunpack.c.h.b16 %v505
  %v2930 = vunpack.c.l.b16 %v506
  %v2931 = vunpack.c.h.b16 %v506
  %v2932 = vunpack.c.l.b16 %v507
  %v2933 = vunpack.c.h.b16 %v507
  %v2934 = vunpack.c.l.b16 %v508
  %v2935 = vunpack.c.h.b16 %v508
  %v2936 = vunpack.c.l.b16 %v509
  %v2937 = vunpack.c.h.b16 %v509
  %v2938 = vunpack.c.l.b16 %v510
  %v2939 = vunpack.c.h.b16 %v510
  %v2940 = vunpack.c.l.b16 %v511
  %v2941 = vunpack.c.h.b16 %v511
  %v2942 = vunpack.c.l.b16 %v512
  %v2943 = vunpack.c.h.b16 %v512
  %v2944 = vunpack.c.l.b16 %v513
  %v2945 = vunpack.c.h.b16 %v513
  %v2946 = vunpack.c.l.b16 %v514
  %v2947 = vunpack.c.h.b16 %v514
  %v2948 = vunpack.c.l.b16 %v515
  %v2949 = vunpack.c.h.b16 %v515
  %v2950 = vunpack.c.l.b16 %v516
  %v2951 = vunpack.c.h.b16 %v516
  %v2952 = vunpack.c.l.b16 %v517
  %v2953 = vunpack.c.h.b16 %v517
  %v2954 = vunpack.c.l.b16 %v518
  %v2955 = vunpack.c.h.b16 %v518
  %v2956 = vunpack.c.l.b16 %v519
  %v2957 = vunpack.c.h.b16 %v519
  %v2958 = vunpack.c.l.b16 %v520
  %v2959 = vunpack.c.h.b16 %v520
  %v2960 = vunpack.c.l.b16 %v521
  %v2961 = vunpack.c.h.b16 %v521
  %v2962 = vunpack.c.l.b16 %v522
  %v2963 = vunpack.c.h.b16 %v522
  %v2964 = vunpack.c.l.b16 %v523
  %v2965 = vunpack.c.h.b16 %v523
  %v2966 = vunpack.c.l.b16 %v524
  %v2967 = vunpack.c.h.b16 %v524
  %v2968 = vunpack.c.l.b16 %v525
  %v2969 = vunpack.c.h.b16 %v525
  %v2970 = vunpack.c.l.b16 %v526
  %v2971 = vunpack.c.h.b16 %v526
  %v2972 = vunpack.c.l.b16 %v527
  %v2973 = vunpack.c.h.b16 %v527
  %v2974 = vunpack.c.l.b16 %v528
  %v2975 = vunpack.c.h.b16 %v528
  %v2976 = vunpack.c.l.b16 %v529
  %v2977 = vunpack.c.h.b16 %v529
  %v2978 = vunpack.c.l.b16 %v530
  %v2979 = vunpack.c.h.b16 %v530
  %v2980 = vunpack.c.l.b16 %v531
  %v2981 = vunpack.c.h.b16 %v531
  %v2982 = vunpack.c.l.b16 %v532
  %v2983 = vunpack.c.h.b16 %v532
  %v2984 = vunpack.c.l.b16 %v533
  %v2985 = vunpack.c.h.b16 %v533
  %v2986 = vunpack.c.l.b16 %v534
  %v2987 = vunpack.c.h.b16 %v534
  %v2988 = vunpack.c.l.b16 %v535
  %v2989 = vunpack.c.h.b16 %v535
  %v2990 = vunpack.c.l.b16 %v536
  %v2991 = vunpack.c.h.b16 %v536
  %v2992 = vunpack.c.l.b16 %v537
  %v2993 = vunpack.c.h.b16 %v537
  %v2994 = vunpack.c.l.b16 %v538
  %v2995 = vunpack.c.h.b16 %v538
  %v2996 = vunpack.c.l.b16 %v539
  %v2997 = vunpack.c.h.b16 %v539
  %v2998 = vunpack.c.l.b16 %v540
  %v2999 = vunpack.c.h.b16 %v540
  %v3000 = vunpack.c.l.b16 %v541
  %v3001 = vunpack.c.h.b16 %v541
  %v3002 = vunpack.c.l.b16 %v542
  %v3003 = vunpack.c.h.b16 %v542
  %v3004 = vunpack.c.l.b16 %v543
  %v3005 = vunpack.c.h.b16 %v543
  %v3006 = vunpack.c.l.b16 %v544
  %v3007 = vunpack.c.h.b16 %v544
  %v3008 = vunpack.c.l.b16 %v545
  %v3009 = vunpack.c.h.b16 %v545
  %v3010 = vunpack.c.l.b16 %v546
  %v3011 = vunpack.c.h.b16 %v546
  %v3012 = vunpack.c.l.b16 %v547
  %v3013 = vunpack.c.h.b16 %v547
  %v3014 = vunpack.c.l.b16 %v548
  %v3015 = vunpack.c.h.b16 %v548
  %v3016 = vunpack.c.l.b16 %v549
  %v3017 = vunpack.c.h.b16 %v549
  %v3018 = vunpack.c.l.b16 %v550
  %v3019 = vunpack.c.h.b16 %v550
  %v3020 = vunpack.c.l.b16 %v551
  %v3021 = vunpack.c.h.b16 %v551
  %v3022 = vunpack.c.l.b16 %v552
  %v3023 = vunpack.c.h.b16 %v552
  %v3024 = vunpack.c.l.b16 %v553
  %v3025 = vunpack.c.h.b16 %v553
  %v3026 = vunpack.c.l.b16 %v554
  %v3027 = vunpack.c.h.b16 %v554
  %v3028 = vunpack.c.l.b16 %v555
  %v3029 = vunpack.c.h.b16 %v555
  %v3030 = vunpack.c.l.b16 %v556
  %v3031 = vunpack.c.h.b16 %v556
  %v3032 = vunpack.c.l.b16 %v557
  %v3033 = vunpack.c.h.b16 %v557
  %v3034 = vunpack.c.l.b16 %v558
  %v3035 = vunpack.c.h.b16 %v558
  %v3036 = vunpack.c.l.b16 %v559
  %v3037 = vunpack.c.h.b16 %v559
  %v3038 = vunpack.c.l.b16 %v560
  %v3039 = vunpack.c.h.b16 %v560
  %v3040 = vunpack.c.l.b16 %v561
  %v3041 = vunpack.c.h.b16 %v561
  %v3042 = vunpack.c.l.b16 %v562
  %v3043 = vunpack.c.h.b16 %v562
  %v3044 = vunpack.c.l.b16 %v563
  %v3045 = vunpack.c.h.b16 %v563
  %v3046 = vunpack.c.l.b16 %v564
  %v3047 = vunpack.c.h.b16 %v564
  %v3048 = vunpack.c.l.b16 %v565
  %v3049 = vunpack.c.h.b16 %v565
  %v3050 = vunpack.c.l.b16 %v566
  %v3051 = vunpack.c.h.b16 %v566
  %v3052 = vunpack.c.l.b16 %v567
  %v3053 = vunpack.c.h.b16 %v567
  %v3054 = vunpack.c.l.b16 %v568
  %v3055 = vunpack.c.h.b16 %v568
  %v3056 = vunpack.c.l.b16 %v569
  %v3057 = vunpack.c.h.b16 %v569
  %v3058 = vunpack.c.l.b16 %v570
  %v3059 = vunpack.c.h.b16 %v570
  %v3060 = vunpack.c.l.b16 %v571
  %v3061 = vunpack.c.h.b16 %v571
  %v3062 = vunpack.c.l.b16 %v572
  %v3063 = vunpack.c.h.b16 %v572
  %v3064 = vunpack.c.l.b16 %v573
  %v3065 = vunpack.c.h.b16 %v573
  %v3066 = vunpack.c.l.b16 %v574
  %v3067 = vunpack.c.h.b16 %v574
  %v3068 = vunpack.c.l.b16 %v575
  %v3069 = vunpack.c.h.b16 %v575
  %v3070 = vunpack.c.l.b16 %v576
  %v3071 = vunpack.c.h.b16 %v576
  %v3072 = vunpack.c.l.b16 %v577
  %v3073 = vunpack.c.h.b16 %v577
  %v3074 = vunpack.c.l.b16 %v578
  %v3075 = vunpack.c.h.b16 %v578
  %v3076 = vunpack.c.l.b16 %v579
  %v3077 = vunpack.c.h.b16 %v579
  %v3078 = vunpack.c.l.b16 %v580
  %v3079 = vunpack.c.h.b16 %v580
  %v3080 = vunpack.c.l.b16 %v581
  %v3081 = vunpack.c.h.b16 %v581
  %v3082 = vunpack.c.l.b16 %v582
  %v3083 = vunpack.c.h.b16 %v582
  %v3084 = vunpack.c.l.b16 %v583
  %v3085 = vunpack.c.h.b16 %v583
  %v3086 = vunpack.c.l.b16 %v584
  %v3087 = vunpack.c.h.b16 %v584
  %v3088 = vunpack.c.l.b16 %v585
  %v3089 = vunpack.c.h.b16 %v585
  %v3090 = vunpack.c.l.b16 %v586
  %v3091 = vunpack.c.h.b16 %v586
  %v3092 = vunpack.c.l.b16 %v587
  %v3093 = vunpack.c.h.b16 %v587
  %v3094 = vunpack.c.l.b16 %v588
  %v3095 = vunpack.c.h.b16 %v588
  %v3096 = vunpack.c.l.b16 %v589
  %v3097 = vunpack.c.h.b16 %v589
  %v3098 = vunpack.c.l.b16 %v590
  %v3099 = vunpack.c.h.b16 %v590
  %v3100 = vunpack.c.l.b16 %v591
  %v3101 = vunpack.c.h.b16 %v591
  %v3102 = vunpack.c.l.b16 %v592
  %v3103 = vunpack.c.h.b16 %v592
  %v3104 = vunpack.c.l.b16 %v593
  %v3105 = vunpack.c.h.b16 %v593
  %v3106 = vunpack.c.l.b16 %v594
  %v3107 = vunpack.c.h.b16 %v594
  %v3108 = vunpack.c.l.b16 %v595
  %v3109 = vunpack.c.h.b16 %v595
  %v3110 = vunpack.c.l.b16 %v596
  %v3111 = vunpack.c.h.b16 %v596
  %v3112 = vunpack.c.l.b16 %v597
  %v3113 = vunpack.c.h.b16 %v597
  %v3114 = vunpack.c.l.b16 %v598
  %v3115 = vunpack.c.h.b16 %v598
  %v3116 = vunpack.c.l.b16 %v599
  %v3117 = vunpack.c.h.b16 %v599
  %v3118 = vunpack.c.l.b16 %v600
  %v3119 = vunpack.c.h.b16 %v600
  %v3120 = vunpack.c.l.b16 %v601
  %v3121 = vunpack.c.h.b16 %v601
  %v3122 = vunpack.c.l.b16 %v602
  %v3123 = vunpack.c.h.b16 %v602
  %v3124 = vunpack.c.l.b16 %v603
  %v3125 = vunpack.c.h.b16 %v603
  %v3126 = vunpack.c.l.b16 %v604
  %v3127 = vunpack.c.h.b16 %v604
  %v3128 = vunpack.c.l.b16 %v605
  %v3129 = vunpack.c.h.b16 %v605
  %v3130 = vunpack.c.l.b16 %v606
  %v3131 = vunpack.c.h.b16 %v606
  %v3132 = vunpack.c.l.b16 %v607
  %v3133 = vunpack.c.h.b16 %v607
  %v3134 = vunpack.c.l.b16 %v608
  %v3135 = vunpack.c.h.b16 %v608
  %v3136 = vunpack.c.l.b16 %v609
  %v3137 = vunpack.c.h.b16 %v609
  %v3138 = vunpack.c.l.b16 %v610
  %v3139 = vunpack.c.h.b16 %v610
  %v3140 = vunpack.c.l.b16 %v611
  %v3141 = vunpack.c.h.b16 %v611
  %v3142 = vunpack.c.l.b16 %v612
  %v3143 = vunpack.c.h.b16 %v612
  %v3144 = vunpack.c.l.b16 %v613
  %v3145 = vunpack.c.h.b16 %v613
  %v3146 = vunpack.c.l.b16 %v614
  %v3147 = vunpack.c.h.b16 %v614
  %v3148 = vunpack.c.l.b16 %v615
  %v3149 = vunpack.c.h.b16 %v615
  %v3150 = vunpack.c.l.b16 %v616
  %v3151 = vunpack.c.h.b16 %v616
  %v3152 = vunpack.c.l.b16 %v617
  %v3153 = vunpack.c.h.b16 %v617
  %v3154 = vunpack.c.l.b16 %v618
  %v3155 = vunpack.c.h.b16 %v618
  %v3156 = vunpack.c.l.b16 %v619
  %v3157 = vunpack.c.h.b16 %v619
  %v3158 = vunpack.c.l.b16 %v620
  %v3159 = vunpack.c.h.b16 %v620
  %v3160 = vunpack.c.l.b16 %v621
  %v3161 = vunpack.c.h.b16 %v621
  %v3162 = vunpack.c.l.b16 %v622
  %v3163 = vunpack.c.h.b16 %v622
  %v3164 = vunpack.c.l.b16 %v623
  %v3165 = vunpack.c.h.b16 %v623
  %v3166 = vunpack.c.l.b16 %v624
  %v3167 = vunpack.c.h.b16 %v624
  %v3168 = vunpack.c.l.b16 %v625
  %v3169 = vunpack.c.h.b16 %v625
  %v3170 = vunpack.c.l.b16 %v626
  %v3171 = vunpack.c.h.b16 %v626
  %v3172 = vunpack.c.l.b16 %v627
  %v3173 = vunpack.c.h.b16 %v627
  %v3174 = vunpack.c.l.b16 %v628
  %v3175 = vunpack.c.h.b16 %v628
  %v3176 = vunpack.c.l.b16 %v629
  %v3177 = vunpack.c.h.b16 %v629
  %v3178 = vunpack.c.l.b16 %v630
  %v3179 = vunpack.c.h.b16 %v630
  %v3180 = vunpack.c.l.b16 %v631
  %v3181 = vunpack.c.h.b16 %v631
  %v3182 = vunpack.c.l.b16 %v632
  %v3183 = vunpack.c.h.b16 %v632
  %v3184 = vunpack.c.l.b16 %v633
  %v3185 = vunpack.c.h.b16 %v633
  %v3186 = vunpack.c.l.b16 %v634
  %v3187 = vunpack.c.h.b16 %v634
  %v3188 = vunpack.c.l.b16 %v635
  %v3189 = vunpack.c.h.b16 %v635
  %v3190 = vunpack.c.l.b16 %v636
  %v3191 = vunpack.c.h.b16 %v636
  %v3192 = vunpack.c.l.b16 %v637
  %v3193 = vunpack.c.h.b16 %v637
  %v3194 = vunpack.c.l.b16 %v638
  %v3195 = vunpack.c.h.b16 %v638
  %v3196 = vunpack.c.l.b16 %v639
  %v3197 = vunpack.c.h.b16 %v639
  %v3198 = vunpack.c.l.b16 %v640
  %v3199 = vunpack.c.h.b16 %v640
  %v3200 = vunpack.c.l.b16 %v641
  %v3201 = vunpack.c.h.b16 %v641
  %v3202 = vunpack.c.l.b16 %v642
  %v3203 = vunpack.c.h.b16 %v642
  %v3204 = vunpack.c.l.b16 %v643
  %v3205 = vunpack.c.h.b16 %v643
  %v3206 = vunpack.c.l.b16 %v644
  %v3207 = vunpack.c.h.b16 %v644
  %v3208 = vunpack.c.l.b16 %v645
  %v3209 = vunpack.c.h.b16 %v645
  %v3210 = vunpack.c.l.b16 %v646
  %v3211 = vunpack.c.h.b16 %v646
  %v3212 = vunpack.c.l.b16 %v647
  %v3213 = vunpack.c.h.b16 %v647
  %v3214 = vunpack.c.l.b16 %v648
  %v3215 = vunpack.c.h.b16 %v648
  %v3216 = vunpack.c.l.b16 %v649
  %v3217 = vunpack.c.h.b16 %v649
  %v3218 = vunpack.c.l.b16 %v650
  %v3219 = vunpack.c.h.b16 %v650
  %v3220 = vunpack.c.l.b16 %v651
  %v3221 = vunpack.c.h.b16 %v651
  %v3222 = vunpack.c.l.b16 %v652
  %v3223 = vunpack.c.h.b16 %v652
  %v3224 = vunpack.c.l.b16 %v653
  %v3225 = vunpack.c.h.b16 %v653
  %v3226 = vunpack.c.l.b16 %v654
  %v3227 = vunpack.c.h.b16 %v654
  %v3228 = vunpack.c.l.b16 %v655
  %v3229 = vunpack.c.h.b16 %v655
  %v3230 = vunpack.c.l.b16 %v656
  %v3231 = vunpack.c.h.b16 %v656
  %v3232 = vunpack.c.l.b16 %v657
  %v3233 = vunpack.c.h.b16 %v657
  %v3234 = vunpack.c.l.b16 %v658
  %v3235 = vunpack.c.h.b16 %v658
  %v3236 = vunpack.c.l.b16 %v659
  %v3237 = vunpack.c.h.b16 %v659
  %v3238 = vunpack.c.l.b16 %v660
  %v3239 = vunpack.c.h.b16 %v660
  %v3240 = vunpack.c.l.b16 %v661
  %v3241 = vunpack.c.h.b16 %v661
  %v3242 = vunpack.c.l.b16 %v662
  %v3243 = vunpack.c.h.b16 %v662
  %v3244 = vunpack.c.l.b16 %v663
  %v3245 = vunpack.c.h.b16 %v663
  %v3246 = vunpack.c.l.b16 %v664
  %v3247 = vunpack.c.h.b16 %v664
  %v3248 = vunpack.c.l.b16 %v665
  %v3249 = vunpack.c.h.b16 %v665
  %v3250 = vunpack.c.l.b16 %v666
  %v3251 = vunpack.c.h.b16 %v666
  %v3252 = vunpack.c.l.b16 %v667
  %v3253 = vunpack.c.h.b16 %v667
  %v3254 = vunpack.c.l.b16 %v668
  %v3255 = vunpack.c.h.b16 %v668
  %v3256 = vunpack.c.l.b16 %v669
  %v3257 = vunpack.c.h.b16 %v669
  %v3258 = vunpack.c.l.b16 %v670
  %v3259 = vunpack.c.h.b16 %v670
  %v3260 = vunpack.c.l.b16 %v671
  %v3261 = vunpack.c.h.b16 %v671
  %v3262 = vunpack.c.l.b16 %v672
  %v3263 = vunpack.c.h.b16 %v672
  %v3264 = vunpack.c.l.b16 %v673
  %v3265 = vunpack.c.h.b16 %v673
  %v3266 = vunpack.c.l.b16 %v674
  %v3267 = vunpack.c.h.b16 %v674
  %v3268 = vunpack.c.l.b16 %v675
  %v3269 = vunpack.c.h.b16 %v675
  %v3270 = vunpack.c.l.b16 %v676
  %v3271 = vunpack.c.h.b16 %v676
  %v3272 = vunpack.c.l.b16 %v677
  %v3273 = vunpack.c.h.b16 %v677
  %v3274 = vunpack.c.l.b16 %v678
  %v3275 = vunpack.c.h.b16 %v678
  %v3276 = vunpack.c.l.b16 %v679
  %v3277 = vunpack.c.h.b16 %v679
  %v3278 = vunpack.c.l.b16 %v680
  %v3279 = vunpack.c.h.b16 %v680
  %v3280 = vunpack.c.l.b16 %v681
  %v3281 = vunpack.c.h.b16 %v681
  %v3282 = vunpack.c.l.b16 %v682
  %v3283 = vunpack.c.h.b16 %v682
  %v3284 = vunpack.c.l.b16 %v683
  %v3285 = vunpack.c.h.b16 %v683
  %v3286 = vunpack.c.l.b16 %v684
  %v3287 = vunpack.c.h.b16 %v684
  %v3288 = vunpack.c.l.b16 %v685
  %v3289 = vunpack.c.h.b16 %v685
  %v3290 = vunpack.c.l.b16 %v686
  %v3291 = vunpack.c.h.b16 %v686
  %v3292 = vunpack.c.l.b16 %v687
  %v3293 = vunpack.c.h.b16 %v687
  %v3294 = vunpack.c.l.b16 %v688
  %v3295 = vunpack.c.h.b16 %v688
  %v3296 = vunpack.c.l.b16 %v689
  %v3297 = vunpack.c.h.b16 %v689
  %v3298 = vunpack.c.l.b16 %v690
  %v3299 = vunpack.c.h.b16 %v690
  %v3300 = vunpack.c.l.b16 %v691
  %v3301 = vunpack.c.h.b16 %v691
  %v3302 = vunpack.c.l.b16 %v692
  %v3303 = vunpack.c.h.b16 %v692
  %v3304 = vunpack.c.l.b16 %v693
  %v3305 = vunpack.c.h.b16 %v693
  %v3306 = vunpack.c.l.b16 %v694
  %v3307 = vunpack.c.h.b16 %v694
  %v3308 = vunpack.c.l.b16 %v695
  %v3309 = vunpack.c.h.b16 %v695
  %v3310 = vunpack.c.l.b16 %v696
  %v3311 = vunpack.c.h.b16 %v696
  %v3312 = vunpack.c.l.b16 %v697
  %v3313 = vunpack.c.h.b16 %v697
  %v3314 = vunpack.c.l.b16 %v698
  %v3315 = vunpack.c.h.b16 %v698
  %v3316 = vunpack.c.l.b16 %v699
  %v3317 = vunpack.c.h.b16 %v699
  %v3318 = vunpack.c.l.b16 %v700
  %v3319 = vunpack.c.h.b16 %v700
  %v3320 = vunpack.c.l.b16 %v701
  %v3321 = vunpack.c.h.b16 %v701
  %v3322 = vunpack.c.l.b16 %v702
  %v3323 = vunpack.c.h.b16 %v702
  %v3324 = vunpack.c.l.b16 %v703
  %v3325 = vunpack.c.h.b16 %v703
  %v3326 = vunpack.c.l.b16 %v704
  %v3327 = vunpack.c.h.b16 %v704
  %v3328 = vunpack.c.l.b16 %v705
  %v3329 = vunpack.c.h.b16 %v705
  %v3330 = vunpack.c.l.b16 %v706
  %v3331 = vunpack.c.h.b16 %v706
  %v3332 = vunpack.c.l.b16 %v707
  %v3333 = vunpack.c.h.b16 %v707
  %v3334 = vunpack.c.l.b16 %v708
  %v3335 = vunpack.c.h.b16 %v708
  %v3336 = vunpack.c.l.b16 %v709
  %v3337 = vunpack.c.h.b16 %v709
  %v3338 = vunpack.c.l.b16 %v710
  %v3339 = vunpack.c.h.b16 %v710
  %v3340 = vunpack.c.l.b16 %v711
  %v3341 = vunpack.c.h.b16 %v711
  %v3342 = vunpack.c.l.b16 %v712
  %v3343 = vunpack.c.h.b16 %v712
  %v3344 = vunpack.c.l.b16 %v713
  %v3345 = vunpack.c.h.b16 %v713
  %v3346 = vunpack.c.l.b16 %v714
  %v3347 = vunpack.c.h.b16 %v714
  %v3348 = vunpack.c.l.b16 %v715
  %v3349 = vunpack.c.h.b16 %v715
  %v3350 = vunpack.c.l.b16 %v716
  %v3351 = vunpack.c.h.b16 %v716
  %v3352 = vunpack.c.l.b16 %v717
  %v3353 = vunpack.c.h.b16 %v717
  %v3354 = vunpack.c.l.b16 %v718
  %v3355 = vunpack.c.h.b16 %v718
  %v3356 = vunpack.c.l.b16 %v719
  %v3357 = vunpack.c.h.b16 %v719
  %v3358 = vunpack.c.l.b16 %v720
  %v3359 = vunpack.c.h.b16 %v720
  %v3360 = vunpack.c.l.b16 %v721
  %v3361 = vunpack.c.h.b16 %v721
  %v3362 = vunpack.c.l.b16 %v722
  %v3363 = vunpack.c.h.b16 %v722
  %v3364 = vunpack.c.l.b16 %v723
  %v3365 = vunpack.c.h.b16 %v723
  %v3366 = vunpack.c.l.b16 %v724
  %v3367 = vunpack.c.h.b16 %v724
  %v3368 = vunpack.c.l.b16 %v725
  %v3369 = vunpack.c.h.b16 %v725
  %v3370 = vunpack.c.l.b16 %v726
  %v3371 = vunpack.c.h.b16 %v726
  %v3372 = vunpack.c.l.b16 %v727
  %v3373 = vunpack.c.h.b16 %v727
  %v3374 = vunpack.c.l.b16 %v728
  %v3375 = vunpack.c.h.b16 %v728
  %v3376 = vunpack.c.l.b16 %v729
  %v3377 = vunpack.c.h.b16 %v729
  %v3378 = vunpack.c.l.b16 %v730
  %v3379 = vunpack.c.h.b16 %v730
  %v3380 = vunpack.c.l.b16 %v731
  %v3381 = vunpack.c.h.b16 %v731
  %v3382 = vunpack.c.l.b16 %v732
  %v3383 = vunpack.c.h.b16 %v732
  %v3384 = vunpack.c.l.b16 %v733
  %v3385 = vunpack.c.h.b16 %v733
  %v3386 = vunpack.c.l.b16 %v734
  %v3387 = vunpack.c.h.b16 %v734
  %v3388 = vunpack.c.l.b16 %v735
  %v3389 = vunpack.c.h.b16 %v735
  %v3390 = vunpack.c.l.b16 %v736
  %v3391 = vunpack.c.h.b16 %v736
  %v3392 = vunpack.c.l.b16 %v737
  %v3393 = vunpack.c.h.b16 %v737
  %v3394 = vunpack.c.l.b16 %v738
  %v3395 = vunpack.c.h.b16 %v738
  %v3396 = vunpack.c.l.b16 %v739
  %v3397 = vunpack.c.h.b16 %v739
  %v3398 = vunpack.c.l.b16 %v740
  %v3399 = vunpack.c.h.b16 %v740
  %v3400 = vunpack.c.l.b16 %v741
  %v3401 = vunpack.c.h.b16 %v741
  %v3402 = vunpack.c.l.b16 %v742
  %v3403 = vunpack.c.h.b16 %v742
  %v3404 = vunpack.c.l.b16 %v743
  %v3405 = vunpack.c.h.b16 %v743
  %v3406 = vunpack.c.l.b16 %v744
  %v3407 = vunpack.c.h.b16 %v744
  %v3408 = vunpack.c.l.b16 %v745
  %v3409 = vunpack.c.h.b16 %v745
  %v3410 = vunpack.c.l.b16 %v746
  %v3411 = vunpack.c.h.b16 %v746
  %v3412 = vunpack.c.l.b16 %v747
  %v3413 = vunpack.c.h.b16 %v747
  %v3414 = vunpack.c.l.b16 %v748
  %v3415 = vunpack.c.h.b16 %v748
  %v3416 = vunpack.c.l.b16 %v749
  %v3417 = vunpack.c.h.b16 %v749
  %v3418 = vunpack.c.l.b16 %v750
  %v3419 = vunpack.c.h.b16 %v750
  %v3420 = vunpack.c.l.b16 %v751
  %v3421 = vunpack.c.h.b16 %v751
  %v3422 = vunpack.c.l.b16 %v752
  %v3423 = vunpack.c.h.b16 %v752
  %v3424 = vunpack.c.l.b16 %v753
  %v3425 = vunpack.c.h.b16 %v753
  %v3426 = vunpack.c.l.b16 %v754
  %v3427 = vunpack.c.h.b16 %v754
  %v3428 = vunpack.c.l.b16 %v755
  %v3429 = vunpack.c.h.b16 %v755
  %v3430 = vunpack.c.l.b16 %v756
  %v3431 = vunpack.c.h.b16 %v756
  %v3432 = vunpack.c.l.b16 %v757
  %v3433 = vunpack.c.h.b16 %v757
  %v3434 = vunpack.c.l.b16 %v758
  %v3435 = vunpack.c.h.b16 %v758
  %v3436 = vunpack.c.l.b16 %v759
  %v3437 = vunpack.c.h.b16 %v759
  %v3438 = vunpack.c.l.b16 %v760
  %v3439 = vunpack.c.h.b16 %v760
  %v3440 = vunpack.c.l.b16 %v761
  %v3441 = vunpack.c.h.b16 %v761
  %v3442 = vunpack.c.l.b16 %v762
  %v3443 = vunpack.c.h.b16 %v762
  %v3444 = vunpack.c.l.b16 %v763
  %v3445 = vunpack.c.h.b16 %v763
  %v3446 = vunpack.c.l.b16 %v764
  %v3447 = vunpack.c.h.b16 %v764
  %v3448 = vunpack.c.l.b16 %v765
  %v3449 = vunpack.c.h.b16 %v765
  %v3450 = vunpack.c.l.b16 %v766
  %v3451 = vunpack.c.h.b16 %v766
  %v3452 = vunpack.c.l.b16 %v767
  %v3453 = vunpack.c.h.b16 %v767
  %v3454 = vunpack.c.l.b16 %v768
  %v3455 = vunpack.c.h.b16 %v768
  %v3456 = vunpack.c.l.b16 %v769
  %v3457 = vunpack.c.h.b16 %v769
  %v3458 = vunpack.c.l.b16 %v770
  %v3459 = vunpack.c.h.b16 %v770
  %v3460 = vunpack.c.l.b16 %v771
  %v3461 = vunpack.c.h.b16 %v771
  %v3462 = vunpack.c.l.b16 %v772
  %v3463 = vunpack.c.h.b16 %v772
  %v3464 = vunpack.c.l.b16 %v773
  %v3465 = vunpack.c.h.b16 %v773
  %v3466 = vunpack.c.l.b16 %v774
  %v3467 = vunpack.c.h.b16 %v774
  %v3468 = vunpack.c.l.b16 %v775
  %v3469 = vunpack.c.h.b16 %v775
  %v3470 = vunpack.c.l.b16 %v776
  %v3471 = vunpack.c.h.b16 %v776
  %v3472 = vunpack.c.l.b16 %v777
  %v3473 = vunpack.c.h.b16 %v777
  %v3474 = vunpack.c.l.b16 %v778
  %v3475 = vunpack.c.h.b16 %v778
  %v3476 = vunpack.c.l.b16 %v779
  %v3477 = vunpack.c.h.b16 %v779
  %v3478 = vunpack.c.l.b16 %v780
  %v3479 = vunpack.c.h.b16 %v780
  %v3480 = vunpack.c.l.b16 %v781
  %v3481 = vunpack.c.h.b16 %v781
  %v3482 = vunpack.c.l.b16 %v782
  %v3483 = vunpack.c.h.b16 %v782
  %v3484 = vunpack.c.l.b16 %v783
  %v3485 = vunpack.c.h.b16 %v783
  %v3486 = vunpack.c.l.b16 %v784
  %v3487 = vunpack.c.h.b16 %v784
  %v3488 = vunpack.c.l.b16 %v785
  %v3489 = vunpack.c.h.b16 %v785
  %v3490 = vunpack.c.l.b16 %v786
  %v3491 = vunpack.c.h.b16 %v786
  %v3492 = vunpack.c.l.b16 %v787
  %v3493 = vunpack.c.h.b16 %v787
  %v3494 = vunpack.c.l.b16 %v788
  %v3495 = vunpack.c.h.b16 %v788
  %v3496 = vunpack.c.l.b16 %v789
  %v3497 = vunpack.c.h.b16 %v789
  %v3498 = vunpack.c.l.b16 %v790
  %v3499 = vunpack.c.h.b16 %v790
  %v3500 = vunpack.c.l.b16 %v791
  %v3501 = vunpack.c.h.b16 %v791
  %v3502 = vunpack.c.l.b16 %v792
  %v3503 = vunpack.c.h.b16 %v792
  %v3504 = vunpack.c.l.b16 %v793
  %v3505 = vunpack.c.h.b16 %v793
  %v3506 = vunpack.c.l.b16 %v794
  %v3507 = vunpack.c.h.b16 %v794
  %v3508 = vunpack.c.l.b16 %v795
  %v3509 = vunpack.c.h.b16 %v795
  %v3510 = vunpack.c.l.b16 %v796
  %v3511 = vunpack.c.h.b16 %v796
  %v3512 = vunpack.c.l.b16 %v797
  %v3513 = vunpack.c.h.b16 %v797
  %v3514 = vunpack.c.l.b16 %v798
  %v3515 = vunpack.c.h.b16 %v798
  %v3516 = vunpack.c.l.b16 %v799
  %v3517 = vunpack.c.h.b16 %v799
  %v3518 = vunpack.c.l.b16 %v800
  %v3519 = vunpack.c.h.b16 %v800
  %v3520 = vunpack.c.l.b16 %v801
  %v3521 = vunpack.c.h.b16 %v801
  %v3522 = vunpack.c.l.b16 %v802
  %v3523 = vunpack.c.h.b16 %v802
  %v3524 = vunpack.c.l.b16 %v803
  %v3525 = vunpack.c.h.b16 %v803
  %v3526 = vunpack.c.l.b16 %v804
  %v3527 = vunpack.c.h.b16 %v804
  %v3528 = vunpack.c.l.b16 %v805
  %v3529 = vunpack.c.h.b16 %v805
  %v3530 = vunpack.c.l.b16 %v806
  %v3531 = vunpack.c.h.b16 %v806
  %v3532 = vunpack.c.l.b16 %v807
  %v3533 = vunpack.c.h.b16 %v807
  %v3534 = vunpack.c.l.b16 %v808
  %v3535 = vunpack.c.h.b16 %v808
  %v3536 = vunpack.c.l.b16 %v809
  %v3537 = vunpack.c.h.b16 %v809
  %v3538 = vpack.c.b16 %v2306, %v2130
  %v3539 = vpack.c.b16 %v2307, %v2131
  %v3540 = vpack.c.b16 %v2308, %v2132
  %v3541 = vpack.c.b16 %v2309, %v2133
  %v3542 = vpack.c.b16 %v2310, %v2134
  %v3543 = vpack.c.b16 %v2311, %v2135
  %v3544 = vpack.c.b16 %v2312, %v2136
  %v3545 = vpack.c.b16 %v2313, %v2137
  %v3546 = vpack.c.b16 %v2314, %v2138
  %v3547 = vpack.c.b16 %v2315, %v2139
  %v3548 = vpack.c.b16 %v2316, %v2140
  %v3549 = vpack.c.b16 %v2317, %v2141
  %v3550 = vpack.c.b16 %v2318, %v2142
  %v3551 = vpack.c.b16 %v2319, %v2143
  %v3552 = vpack.c.b16 %v2320, %v2144
  %v3553 = vpack.c.b16 %v2321, %v2145
  %v3554 = vpack.c.b16 %v2322, %v2146
  %v3555 = vpack.c.b16 %v2323, %v2147
  %v3556 = vpack.c.b16 %v2324, %v2148
  %v3557 = vpack.c.b16 %v2325, %v2149
  %v3558 = vpack.c.b16 %v2326, %v2150
  %v3559 = vpack.c.b16 %v2327, %v2151
  %v3560 = vpack.c.b16 %v2328, %v2152
  %v3561 = vpack.c.b16 %v2329, %v2153
  %v3562 = vpack.c.b16 %v2330, %v2154
  %v3563 = vpack.c.b16 %v2331, %v2155
  %v3564 = vpack.c.b16 %v2332, %v2156
  %v3565 = vpack.c.b16 %v2333, %v2157
  %v3566 = vpack.c.b16 %v2334, %v2158
  %v3567 = vpack.c.b16 %v2335, %v2159
  %v3568 = vpack.c.b16 %v2336, %v2160
  %v3569 = vpack.c.b16 %v2337, %v2161
  %v3570 = vpack.c.b16 %v2338, %v2162
  %v3571 = vpack.c.b16 %v2339, %v2163
  %v3572 = vpack.c.b16 %v2340, %v2164
  %v3573 = vpack.c.b16 %v2341, %v2165
  %v3574 = vpack.c.b16 %v2342, %v2166
  %v3575 = vpack.c.b16 %v2343, %v2167
  %v3576 = vpack.c.b16 %v2344, %v2168
  %v3577 = vpack.c.b16 %v2345, %v2169
  %v3578 = vpack.c.b16 %v2346, %v2170
  %v3579 = vpack.c.b16 %v2347, %v2171
  %v3580 = vpack.c.b16 %v2348, %v2172
  %v3581 = vpack.c.b16 %v2349, %v2173
  %v3582 = vpack.c.b16 %v2350, %v2174
  %v3583 = vpack.c.b16 %v2351, %v2175
  %v3584 = vpack.c.b16 %v2352, %v2176
  %v3585 = vpack.c.b16 %v2353, %v2177
  %v3586 = vpack.c.b16 %v2354, %v2178
  %v3587 = vpack.c.b16 %v2355, %v2179
  %v3588 = vpack.c.b16 %v2356, %v2180
  %v3589 = vpack.c.b16 %v2357, %v2181
  %v3590 = vpack.c.b16 %v2358, %v2182
  %v3591 = vpack.c.b16 %v2359, %v2183
  %v3592 = vpack.c.b16 %v2360, %v2184
  %v3593 = vpack.c.b16 %v2361, %v2185
  %v3594 = vpack.c.b16 %v2362, %v2186
  %v3595 = vpack.c.b16 %v2363, %v2187
  %v3596 = vpack.c.b16 %v2364, %v2188
  %v3597 = vpack.c.b16 %v2365, %v2189
  %v3598 = vpack.c.b16 %v2366, %v2190
  %v3599 = vpack.c.b16 %v2367, %v2191
  %v3600 = vpack.c.b16 %v2368, %v2192
  %v3601 = vpack.c.b16 %v2369, %v2193
  %v3602 = vpack.c.b16 %v2370, %v2194
  %v3603 = vpack.c.b16 %v2371, %v2195
  %v3604 = vpack.c.b16 %v2372, %v2196
  %v3605 = vpack.c.b16 %v2373, %v2197
  %v3606 = vpack.c.b16 %v2374, %v2198
  %v3607 = vpack.c.b16 %v2375, %v2199
  %v3608 = vpack.c.b16 %v2376, %v2200
  %v3609 = vpack.c.b16 %v2377, %v2201
  %v3610 = vpack.c.b16 %v2378, %v2202
  %v3611 = vpack.c.b16 %v2379, %v2203
  %v3612 = vpack.c.b16 %v2380, %v2204
  %v3613 = vpack.c.b16 %v2381, %v2205
  %v3614 = vpack.c.b16 %v2382, %v2206
  %v3615 = vpack.c.b16 %v2383, %v2207
  %v3616 = vpack.c.b16 %v2384, %v2208
  %v3617 = vpack.c.b16 %v2385, %v2209
  %v3618 = vpack.c.b16 %v2386, %v2210
  %v3619 = vpack.c.b16 %v2387, %v2211
  %v3620 = vpack.c.b16 %v2388, %v2212
  %v3621 = vpack.c.b16 %v2389, %v2213
  %v3622 = vpack.c.b16 %v2390, %v2214
  %v3623 = vpack.c.b16 %v2391, %v2215
  %v3624 = vpack.c.b16 %v2392, %v2216
  %v3625 = vpack.c.b16 %v2393, %v2217
  %v3626 = vpack.c.b16 %v2394, %v2218
  %v3627 = vpack.c.b16 %v2395, %v2219
  %v3628 = vpack.c.b16 %v2396, %v2220
  %v3629 = vpack.c.b16 %v2397, %v2221
  %v3630 = vpack.c.b16 %v2398, %v2222
  %v3631 = vpack.c.b16 %v2399, %v2223
  %v3632 = vpack.c.b16 %v2400, %v2224
  %v3633 = vpack.c.b16 %v2401, %v2225
  %v3634 = vpack.c.b16 %v2402, %v2226
  %v3635 = vpack.c.b16 %v2403, %v2227
  %v3636 = vpack.c.b16 %v2404, %v2228
  %v3637 = vpack.c.b16 %v2405, %v2229
  %v3638 = vpack.c.b16 %v2406, %v2230
  %v3639 = vpack.c.b16 %v2407, %v2231
  %v3640 = vpack.c.b16 %v2408, %v2232
  %v3641 = vpack.c.b16 %v2409, %v2233
  %v3642 = vpack.c.b16 %v2410, %v2234
  %v3643 = vpack.c.b16 %v2411, %v2235
  %v3644 = vpack.c.b16 %v2412, %v2236
  %v3645 = vpack.c.b16 %v2413, %v2237
  %v3646 = vpack.c.b16 %v2414, %v2238
  %v3647 = vpack.c.b16 %v2415, %v2239
  %v3648 = vpack.c.b16 %v2416, %v2240
  %v3649 = vpack.c.b16 %v2417, %v2241
  %v3650 = vpack.c.b16 %v2418, %v2242
  %v3651 = vpack.c.b16 %v2419, %v2243
  %v3652 = vpack.c.b16 %v2420, %v2244
  %v3653 = vpack.c.b16 %v2421, %v2245
  %v3654 = vpack.c.b16 %v2422, %v2246
  %v3655 = vpack.c.b16 %v2423, %v2247
  %v3656 = vpack.c.b16 %v2424, %v2248
  %v3657 = vpack.c.b16 %v2425, %v2249
  %v3658 = vpack.c.b16 %v2426, %v2250
  %v3659 = vpack.c.b16 %v2427, %v2251
  %v3660 = vpack.c.b16 %v2428, %v2252
  %v3661 = vpack.c.b16 %v2429, %v2253
  %v3662 = vpack.c.b16 %v2430, %v2254
  %v3663 = vpack.c.b16 %v2431, %v2255
  %v3664 = vpack.c.b16 %v2432, %v2256
  %v3665 = vpack.c.b16 %v2433, %v2257
  %v3666 = vpack.c.b16 %v2434, %v2258
  %v3667 = vpack.c.b16 %v2435, %v2259
  %v3668 = vpack.c.b16 %v2436, %v2260
  %v3669 = vpack.c.b16 %v2437, %v2261
  %v3670 = vpack.c.b16 %v2438, %v2262
  %v3671 = vpack.c.b16 %v2439, %v2263
  %v3672 = vpack.c.b16 %v2440, %v2264
  %v3673 = vpack.c.b16 %v2441, %v2265
  %v3674 = vpack.c.b16 %v2442, %v2266
  %v3675 = vpack.c.b16 %v2443, %v2267
  %v3676 = vpack.c.b16 %v2444, %v2268
  %v3677 = vpack.c.b16 %v2445, %v2269
  %v3678 = vpack.c.b16 %v2446, %v2270
  %v3679 = vpack.c.b16 %v2447, %v2271
  %v3680 = vpack.c.b16 %v2448, %v2272
  %v3681 = vpack.c.b16 %v2449, %v2273
  %v3682 = vpack.c.b16 %v2450, %v2274
  %v3683 = vpack.c.b16 %v2451, %v2275
  %v3684 = vpack.c.b16 %v2452, %v2276
  %v3685 = vpack.c.b16 %v2453, %v2277
  %v3686 = vpack.c.b16 %v2454, %v2278
  %v3687 = vpack.c.b16 %v2455, %v2279
  %v3688 = vpack.c.b16 %v2456, %v2280
  %v3689 = vpack.c.b16 %v2457, %v2281
  %v3690 = vpack.c.b16 %v2458, %v2282
  %v3691 = vpack.c.b16 %v2459, %v2283
  %v3692 = vpack.c.b16 %v2460, %v2284
  %v3693 = vpack.c.b16 %v2461, %v2285
  %v3694 = vpack.c.b16 %v2462, %v2286
  %v3695 = vpack.c.b16 %v2463, %v2287
  %v3696 = vpack.c.b16 %v2464, %v2288
  %v3697 = vpack.c.b16 %v2465, %v2289
  %v3698 = vpack.c.b16 %v2466, %v2290
  %v3699 = vpack.c.b16 %v2467, %v2291
  %v3700 = vpack.c.b16 %v2468, %v2292
  %v3701 = vpack.c.b16 %v2469, %v2293
  %v3702 = vpack.c.b16 %v2470, %v2294
  %v3703 = vpack.c.b16 %v2471, %v2295
  %v3704 = vpack.c.b16 %v2472, %v2296
  %v3705 = vpack.c.b16 %v2473, %v2297
  %v3706 = vpack.c.b16 %v2474, %v2298
  %v3707 = vpack.c.b16 %v2475, %v2299
  %v3708 = vpack.c.b16 %v2476, %v2300
  %v3709 = vpack.c.b16 %v2477, %v2301
  %v3710 = vpack.c.b16 %v2478, %v2302
  %v3711 = vpack.c.b16 %v2479, %v2303
  %v3712 = vpack.c.b16 %v2480, %v2304
  %v3713 = vpack.c.b16 %v2481, %v2305
  %v3714 = vpack.c.b16 %v2658, %v2482
  %v3715 = vpack.c.b16 %v2659, %v2483
  %v3716 = vpack.c.b16 %v2660, %v2484
  %v3717 = vpack.c.b16 %v2661, %v2485
  %v3718 = vpack.c.b16 %v2662, %v2486
  %v3719 = vpack.c.b16 %v2663, %v2487
  %v3720 = vpack.c.b16 %v2664, %v2488
  %v3721 = vpack.c.b16 %v2665, %v2489
  %v3722 = vpack.c.b16 %v2666, %v2490
  %v3723 = vpack.c.b16 %v2667, %v2491
  %v3724 = vpack.c.b16 %v2668, %v2492
  %v3725 = vpack.c.b16 %v2669, %v2493
  %v3726 = vpack.c.b16 %v2670, %v2494
  %v3727 = vpack.c.b16 %v2671, %v2495
  %v3728 = vpack.c.b16 %v2672, %v2496
  %v3729 = vpack.c.b16 %v2673, %v2497
  %v3730 = vpack.c.b16 %v2674, %v2498
  %v3731 = vpack.c.b16 %v2675, %v2499
  %v3732 = vpack.c.b16 %v2676, %v2500
  %v3733 = vpack.c.b16 %v2677, %v2501
  %v3734 = vpack.c.b16 %v2678, %v2502
  %v3735 = vpack.c.b16 %v2679, %v2503
  %v3736 = vpack.c.b16 %v2680, %v2504
  %v3737 = vpack.c.b16 %v2681, %v2505
  %v3738 = vpack.c.b16 %v2682, %v2506
  %v3739 = vpack.c.b16 %v2683, %v2507
  %v3740 = vpack.c.b16 %v2684, %v2508
  %v3741 = vpack.c.b16 %v2685, %v2509
  %v3742 = vpack.c.b16 %v2686, %v2510
  %v3743 = vpack.c.b16 %v2687, %v2511
  %v3744 = vpack.c.b16 %v2688, %v2512
  %v3745 = vpack.c.b16 %v2689, %v2513
  %v3746 = vpack.c.b16 %v2690, %v2514
  %v3747 = vpack.c.b16 %v2691, %v2515
  %v3748 = vpack.c.b16 %v2692, %v2516
  %v3749 = vpack.c.b16 %v2693, %v2517
  %v3750 = vpack.c.b16 %v2694, %v2518
  %v3751 = vpack.c.b16 %v2695, %v2519
  %v3752 = vpack.c.b16 %v2696, %v2520
  %v3753 = vpack.c.b16 %v2697, %v2521
  %v3754 = vpack.c.b16 %v2698, %v2522
  %v3755 = vpack.c.b16 %v2699, %v2523
  %v3756 = vpack.c.b16 %v2700, %v2524
  %v3757 = vpack.c.b16 %v2701, %v2525
  %v3758 = vpack.c.b16 %v2702, %v2526
  %v3759 = vpack.c.b16 %v2703, %v2527
  %v3760 = vpack.c.b16 %v2704, %v2528
  %v3761 = vpack.c.b16 %v2705, %v2529
  %v3762 = vpack.c.b16 %v2706, %v2530
  %v3763 = vpack.c.b16 %v2707, %v2531
  %v3764 = vpack.c.b16 %v2708, %v2532
  %v3765 = vpack.c.b16 %v2709, %v2533
  %v3766 = vpack.c.b16 %v2710, %v2534
  %v3767 = vpack.c.b16 %v2711, %v2535
  %v3768 = vpack.c.b16 %v2712, %v2536
  %v3769 = vpack.c.b16 %v2713, %v2537
  %v3770 = vpack.c.b16 %v2714, %v2538
  %v3771 = vpack.c.b16 %v2715, %v2539
  %v3772 = vpack.c.b16 %v2716, %v2540
  %v3773 = vpack.c.b16 %v2717, %v2541
  %v3774 = vpack.c.b16 %v2718, %v2542
  %v3775 = vpack.c.b16 %v2719, %v2543
  %v3776 = vpack.c.b16 %v2720, %v2544
  %v3777 = vpack.c.b16 %v2721, %v2545
  %v3778 = vpack.c.b16 %v2722, %v2546
  %v3779 = vpack.c.b16 %v2723, %v2547
  %v3780 = vpack.c.b16 %v2724, %v2548
  %v3781 = vpack.c.b16 %v2725, %v2549
  %v3782 = vpack.c.b16 %v2726, %v2550
  %v3783 = vpack.c.b16 %v2727, %v2551
  %v3784 = vpack.c.b16 %v2728, %v2552
  %v3785 = vpack.c.b16 %v2729, %v2553
  %v3786 = vpack.c.b16 %v2730, %v2554
  %v3787 = vpack.c.b16 %v2731, %v2555
  %v3788 = vpack.c.b16 %v2732, %v2556
  %v3789 = vpack.c.b16 %v2733, %v2557
  %v3790 = vpack.c.b16 %v2734, %v2558
  %v3791 = vpack.c.b16 %v2735, %v2559
  %v3792 = vpack.c.b16 %v2736, %v2560
  %v3793 = vpack.c.b16 %v2737, %v2561
  %v3794 = vpack.c.b16 %v2738, %v2562
  %v3795 = vpack.c.b16 %v2739, %v2563
  %v3796 = vpack.c.b16 %v2740, %v2564
  %v3797 = vpack.c.b16 %v2741, %v2565
  %v3798 = vpack.c.b16 %v2742, %v2566
  %v3799 = vpack.c.b16 %v2743, %v2567
  %v3800 = vpack.c.b16 %v2744, %v2568
  %v3801 = vpack.c.b16 %v2745, %v2569
  %v3802 = vpack.c.b16 %v2746, %v2570
  %v3803 = vpack.c.b16 %v2747, %v2571
  %v3804 = vpack.c.b16 %v2748, %v2572
  %v3805 = vpack.c.b16 %v2749, %v2573
  %v3806 = vpack.c.b16 %v2750, %v2574
  %v3807 = vpack.c.b16 %v2751, %v2575
  %v3808 = vpack.c.b16 %v2752, %v2576
  %v3809 = vpack.c.b16 %v2753, %v2577
  %v3810 = vpack.c.b16 %v2754, %v2578
  %v3811 = vpack.c.b16 %v2755, %v2579
  %v3812 = vpack.c.b16 %v2756, %v2580
  %v3813 = vpack.c.b16 %v2757, %v2581
  %v3814 = vpack.c.b16 %v2758, %v2582
  %v3815 = vpack.c.b16 %v2759, %v2583
  %v3816 = vpack.c.b16 %v2760, %v2584
  %v3817 = vpack.c.b16 %v2761, %v2585
  %v3818 = vpack.c.b16 %v2762, %v2586
  %v3819 = vpack.c.b16 %v2763, %v2587
  %v3820 = vpack.c.b16 %v2764, %v2588
  %v3821 = vpack.c.b16 %v2765, %v2589
  %v3822 = vpack.c.b16 %v2766, %v2590
  %v3823 = vpack.c.b16 %v2767, %v2591
  %v3824 = vpack.c.b16 %v2768, %v2592
  %v3825 = vpack.c.b16 %v2769, %v2593
  %v3826 = vpack.c.b16 %v2770, %v2594
  %v3827 = vpack.c.b16 %v2771, %v2595
  %v3828 = vpack.c.b16 %v2772, %v2596
  %v3829 = vpack.c.b16 %v2773, %v2597
  %v3830 = vpack.c.b16 %v2774, %v2598
  %v3831 = vpack.c.b16 %v2775, %v2599
  %v3832 = vpack.c.b16 %v2776, %v2600
  %v3833 = vpack.c.b16 %v2777, %v2601
  %v3834 = vpack.c.b16 %v2778, %v2602
  %v3835 = vpack.c.b16 %v2779, %v2603
  %v3836 = vpack.c.b16 %v2780, %v2604
  %v3837 = vpack.c.b16 %v2781, %v2605
  %v3838 = vpack.c.b16 %v2782, %v2606
  %v3839 = vpack.c.b16 %v2783, %v2607
  %v3840 = vpack.c.b16 %v2784, %v2608
  %v3841 = vpack.c.b16 %v2785, %v2609
  %v3842 = vpack.c.b16 %v2786, %v2610
  %v3843 = vpack.c.b16 %v2787, %v2611
  %v3844 = vpack.c.b16 %v2788, %v2612
  %v3845 = vpack.c.b16 %v2789, %v2613
  %v3846 = vpack.c.b16 %v2790, %v2614
  %v3847 = vpack.c.b16 %v2791, %v2615
  %v3848 = vpack.c.b16 %v2792, %v2616
  %v3849 = vpack.c.b16 %v2793, %v2617
  %v3850 = vpack.c.b16 %v2794, %v2618
  %v3851 = vpack.c.b16 %v2795, %v2619
  %v3852 = vpack.c.b16 %v2796, %v2620
  %v3853 = vpack.c.b16 %v2797, %v2621
  %v3854 = vpack.c.b16 %v2798, %v2622
  %v3855 = vpack.c.b16 %v2799, %v2623
  %v3856 = vpack.c.b16 %v2800, %v2624
  %v3857 = vpack.c.b16 %v2801, %v2625
  %v3858 = vpack.c.b16 %v2802, %v2626
  %v3859 = vpack.c.b16 %v2803, %v2627
  %v3860 = vpack.c.b16 %v2804, %v2628
  %v3861 = vpack.c.b16 %v2805, %v2629
  %v3862 = vpack.c.b16 %v2806, %v2630
  %v3863 = vpack.c.b16 %v2807, %v2631
  %v3864 = vpack.c.b16 %v2808, %v2632
  %v3865 = vpack.c.b16 %v2809, %v2633
  %v3866 = vpack.c.b16 %v2810, %v2634
  %v3867 = vpack.c.b16 %v2811, %v2635
  %v3868 = vpack.c.b16 %v2812, %v2636
  %v3869 = vpack.c.b16 %v2813, %v2637
  %v3870 = vpack.c.b16 %v2814, %v2638
  %v3871 = vpack.c.b16 %v2815, %v2639
  %v3872 = vpack.c.b16 %v2816, %v2640
  %v3873 = vpack.c.b16 %v2817, %v2641
  %v3874 = vpack.c.b16 %v2818, %v2642
  %v3875 = vpack.c.b16 %v2819, %v2643
  %v3876 = vpack.c.b16 %v2820, %v2644
  %v3877 = vpack.c.b16 %v2821, %v2645
  %v3878 = vpack.c.b16 %v2822, %v2646
  %v3879 = vpack.c.b16 %v2823, %v2647
  %v3880 = vpack.c.b16 %v2824, %v2648
  %v3881 = vpack.c.b16 %v2825, %v2649
  %v3882 = vpack.c.b16 %v2826, %v2650
  %v3883 = vpack.c.b16 %v2827, %v2651
  %v3884 = vpack.c.b16 %v2828, %v2652
  %v3885 = vpack.c.b16 %v2829, %v2653
  %v3886 = vpack.c.b16 %v2830, %v2654
  %v3887 = vpack.c.b16 %v2831, %v2655
  %v3888 = vpack.c.b16 %v2832, %v2656
  %v3889 = vpack.c.b16 %v2833, %v2657
  %v3890 = vpack.c.b16 %v3010, %v2834
  %v3891 = vpack.c.b16 %v3011, %v2835
  %v3892 = vpack.c.b16 %v3012, %v2836
  %v3893 = vpack.c.b16 %v3013, %v2837
  %v3894 = vpack.c.b16 %v3014, %v2838
  %v3895 = vpack.c.b16 %v3015, %v2839
  %v3896 = vpack.c.b16 %v3016, %v2840
  %v3897 = vpack.c.b16 %v3017, %v2841
  %v3898 = vpack.c.b16 %v3018, %v2842
  %v3899 = vpack.c.b16 %v3019, %v2843
  %v3900 = vpack.c.b16 %v3020, %v2844
  %v3901 = vpack.c.b16 %v3021, %v2845
  %v3902 = vpack.c.b16 %v3022, %v2846
  %v3903 = vpack.c.b16 %v3023, %v2847
  %v3904 = vpack.c.b16 %v3024, %v2848
  %v3905 = vpack.c.b16 %v3025, %v2849
  %v3906 = vpack.c.b16 %v3026, %v2850
  %v3907 = vpack.c.b16 %v3027, %v2851
  %v3908 = vpack.c.b16 %v3028, %v2852
  %v3909 = vpack.c.b16 %v3029, %v2853
  %v3910 = vpack.c.b16 %v3030, %v2854
  %v3911 = vpack.c.b16 %v3031, %v2855
  %v3912 = vpack.c.b16 %v3032, %v2856
  %v3913 = vpack.c.b16 %v3033, %v2857
  %v3914 = vpack.c.b16 %v3034, %v2858
  %v3915 = vpack.c.b16 %v3035, %v2859
  %v3916 = vpack.c.b16 %v3036, %v2860
  %v3917 = vpack.c.b16 %v3037, %v2861
  %v3918 = vpack.c.b16 %v3038, %v2862
  %v3919 = vpack.c.b16 %v3039, %v2863
  %v3920 = vpack.c.b16 %v3040, %v2864
  %v3921 = vpack.c.b16 %v3041, %v2865
  %v3922 = vpack.c.b16 %v3042, %v2866
  %v3923 = vpack.c.b16 %v3043, %v2867
  %v3924 = vpack.c.b16 %v3044, %v2868
  %v3925 = vpack.c.b16 %v3045, %v2869
  %v3926 = vpack.c.b16 %v3046, %v2870
  %v3927 = vpack.c.b16 %v3047, %v2871
  %v3928 = vpack.c.b16 %v3048, %v2872
  %v3929 = vpack.c.b16 %v3049, %v2873
  %v3930 = vpack.c.b16 %v3050, %v2874
  %v3931 = vpack.c.b16 %v3051, %v2875
  %v3932 = vpack.c.b16 %v3052, %v2876
  %v3933 = vpack.c.b16 %v3053, %v2877
  %v3934 = vpack.c.b16 %v3054, %v2878
  %v3935 = vpack.c.b16 %v3055, %v2879
  %v3936 = vpack.c.b16 %v3056, %v2880
  %v3937 = vpack.c.b16 %v3057, %v2881
  %v3938 = vpack.c.b16 %v3058, %v2882
  %v3939 = vpack.c.b16 %v3059, %v2883
  %v3940 = vpack.c.b16 %v3060, %v2884
  %v3941 = vpack.c.b16 %v3061, %v2885
  %v3942 = vpack.c.b16 %v3062, %v2886
  %v3943 = vpack.c.b16 %v3063, %v2887
  %v3944 = vpack.c.b16 %v3064, %v2888
  %v3945 = vpack.c.b16 %v3065, %v2889
  %v3946 = vpack.c.b16 %v3066, %v2890
  %v3947 = vpack.c.b16 %v3067, %v2891
  %v3948 = vpack.c.b16 %v3068, %v2892
  %v3949 = vpack.c.b16 %v3069, %v2893
  %v3950 = vpack.c.b16 %v3070, %v2894
  %v3951 = vpack.c.b16 %v3071, %v2895
  %v3952 = vpack.c.b16 %v3072, %v2896
  %v3953 = vpack.c.b16 %v3073, %v2897
  %v3954 = vpack.c.b16 %v3074, %v2898
  %v3955 = vpack.c.b16 %v3075, %v2899
  %v3956 = vpack.c.b16 %v3076, %v2900
  %v3957 = vpack.c.b16 %v3077, %v2901
  %v3958 = vpack.c.b16 %v3078, %v2902
  %v3959 = vpack.c.b16 %v3079, %v2903
  %v3960 = vpack.c.b16 %v3080, %v2904
  %v3961 = vpack.c.b16 %v3081, %v2905
  %v3962 = vpack.c.b16 %v3082, %v2906
  %v3963 = vpack.c.b16 %v3083, %v2907
  %v3964 = vpack.c.b16 %v3084, %v2908
  %v3965 = vpack.c.b16 %v3085, %v2909
  %v3966 = vpack.c.b16 %v3086, %v2910
  %v3967 = vpack.c.b16 %v3087, %v2911
  %v3968 = vpack.c.b16 %v3088, %v2912
  %v3969 = vpack.c.b16 %v3089, %v2913
  %v3970 = vpack.c.b16 %v3090, %v2914
  %v3971 = vpack.c.b16 %v3091, %v2915
  %v3972 = vpack.c.b16 %v3092, %v2916
  %v3973 = vpack.c.b16 %v3093, %v2917
  %v3974 = vpack.c.b16 %v3094, %v2918
  %v3975 = vpack.c.b16 %v3095, %v2919
  %v3976 = vpack.c.b16 %v3096, %v2920
  %v3977 = vpack.c.b16 %v3097, %v2921
  %v3978 = vpack.c.b16 %v3098, %v2922
  %v3979 = vpack.c.b16 %v3099, %v2923
  %v3980 = vpack.c.b16 %v3100, %v2924
  %v3981 = vpack.c.b16 %v3101, %v2925
  %v3982 = vpack.c.b16 %v3102, %v2926
  %v3983 = vpack.c.b16 %v3103, %v2927
  %v3984 = vpack.c.b16 %v3104, %v2928
  %v3985 = vpack.c.b16 %v3105, %v2929
  %v3986 = vpack.c.b16 %v3106, %v2930
  %v3987 = vpack.c.b16 %v3107, %v2931
  %v3988 = vpack.c.b16 %v3108, %v2932
  %v3989 = vpack.c.b16 %v3109, %v2933
  %v3990 = vpack.c.b16 %v3110, %v2934
  %v3991 = vpack.c.b16 %v3111, %v2935
  %v3992 = vpack.c.b16 %v3112, %v2936
  %v3993 = vpack.c.b16 %v3113, %v2937
  %v3994 = vpack.c.b16 %v3114, %v2938
  %v3995 = vpack.c.b16 %v3115, %v2939
  %v3996 = vpack.c.b16 %v3116, %v2940
  %v3997 = vpack.c.b16 %v3117, %v2941
  %v3998 = vpack.c.b16 %v3118, %v2942
  %v3999 = vpack.c.b16 %v3119, %v2943
  %v4000 = vpack.c.b16 %v3120, %v2944
  %v4001 = vpack.c.b16 %v3121, %v2945
  %v4002 = vpack.c.b16 %v3122, %v2946
  %v4003 = vpack.c.b16 %v3123, %v2947
  %v4004 = vpack.c.b16 %v3124, %v2948
  %v4005 = vpack.c.b16 %v3125, %v2949
  %v4006 = vpack.c.b16 %v3126, %v2950
  %v4007 = vpack.c.b16 %v3127, %v2951
  %v4008 = vpack.c.b16 %v3128, %v2952
  %v4009 = vpack.c.b16 %v3129, %v2953
  %v4010 = vpack.c.b16 %v3130, %v2954
  %v4011 = vpack.c.b16 %v3131, %v2955
  %v4012 = vpack.c.b16 %v3132, %v2956
  %v4013 = vpack.c.b16 %v3133, %v2957
  %v4014 = vpack.c.b16 %v3134, %v2958
  %v4015 = vpack.c.b16 %v3135, %v2959
  %v4016 = vpack.c.b16 %v3136, %v2960
  %v4017 = vpack.c.b16 %v3137, %v2961
  %v4018 = vpack.c.b16 %v3138, %v2962
  %v4019 = vpack.c.b16 %v3139, %v2963
  %v4020 = vpack.c.b16 %v3140, %v2964
  %v4021 = vpack.c.b16 %v3141, %v2965
  %v4022 = vpack.c.b16 %v3142, %v2966
  %v4023 = vpack.c.b16 %v3143, %v2967
  %v4024 = vpack.c.b16 %v3144, %v2968
  %v4025 = vpack.c.b16 %v3145, %v2969
  %v4026 = vpack.c.b16 %v3146, %v2970
  %v4027 = vpack.c.b16 %v3147, %v2971
  %v4028 = vpack.c.b16 %v3148, %v2972
  %v4029 = vpack.c.b16 %v3149, %v2973
  %v4030 = vpack.c.b16 %v3150, %v2974
  %v4031 = vpack.c.b16 %v3151, %v2975
  %v4032 = vpack.c.b16 %v3152, %v2976
  %v4033 = vpack.c.b16 %v3153, %v2977
  %v4034 = vpack.c.b16 %v3154, %v2978
  %v4035 = vpack.c.b16 %v3155, %v2979
  %v4036 = vpack.c.b16 %v3156, %v2980
  %v4037 = vpack.c.b16 %v3157, %v2981
  %v4038 = vpack.c.b16 %v3158, %v2982
  %v4039 = vpack.c.b16 %v3159, %v2983
  %v4040 = vpack.c.b16 %v3160, %v2984
  %v4041 = vpack.c.b16 %v3161, %v2985
  %v4042 = vpack.c.b16 %v3162, %v2986
  %v4043 = vpack.c.b16 %v3163, %v2987
  %v4044 = vpack.c.b16 %v3164, %v2988
  %v4045 = vpack.c.b16 %v3165, %v2989
  %v4046 = vpack.c.b16 %v3166, %v2990
  %v4047 = vpack.c.b16 %v3167, %v2991
  %v4048 = vpack.c.b16 %v3168, %v2992
  %v4049 = vpack.c.b16 %v3169, %v2993
  %v4050 = vpack.c.b16 %v3170, %v2994
  %v4051 = vpack.c.b16 %v3171, %v2995
  %v4052 = vpack.c.b16 %v3172, %v2996
  %v4053 = vpack.c.b16 %v3173, %v2997
  %v4054 = vpack.c.b16 %v3174, %v2998
  %v4055 = vpack.c.b16 %v3175, %v2999
  %v4056 = vpack.c.b16 %v3176, %v3000
  %v4057 = vpack.c.b16 %v3177, %v3001
  %v4058 = vpack.c.b16 %v3178, %v3002
  %v4059 = vpack.c.b16 %v3179, %v3003
  %v4060 = vpack.c.b16 %v3180, %v3004
  %v4061 = vpack.c.b16 %v3181, %v3005
  %v4062 = vpack.c.b16 %v3182, %v3006
  %v4063 = vpack.c.b16 %v3183, %v3007
  %v4064 = vpack.c.b16 %v3184, %v3008
  %v4065 = vpack.c.b16 %v3185, %v3009
  %v4066 = vpack.c.b16 %v3362, %v3186
  %v4067 = vpack.c.b16 %v3363, %v3187
  %v4068 = vpack.c.b16 %v3364, %v3188
  %v4069 = vpack.c.b16 %v3365, %v3189
  %v4070 = vpack.c.b16 %v3366, %v3190
  %v4071 = vpack.c.b16 %v3367, %v3191
  %v4072 = vpack.c.b16 %v3368, %v3192
  %v4073 = vpack.c.b16 %v3369, %v3193
  %v4074 = vpack.c.b16 %v3370, %v3194
  %v4075 = vpack.c.b16 %v3371, %v3195
  %v4076 = vpack.c.b16 %v3372, %v3196
  %v4077 = vpack.c.b16 %v3373, %v3197
  %v4078 = vpack.c.b16 %v3374, %v3198
  %v4079 = vpack.c.b16 %v3375, %v3199
  %v4080 = vpack.c.b16 %v3376, %v3200
  %v4081 = vpack.c.b16 %v3377, %v3201
  %v4082 = vpack.c.b16 %v3378, %v3202
  %v4083 = vpack.c.b16 %v3379, %v3203
  %v4084 = vpack.c.b16 %v3380, %v3204
  %v4085 = vpack.c.b16 %v3381, %v3205
  %v4086 = vpack.c.b16 %v3382, %v3206
  %v4087 = vpack.c.b16 %v3383, %v3207
  %v4088 = vpack.c.b16 %v3384, %v3208
  %v4089 = vpack.c.b16 %v3385, %v3209
  %v4090 = vpack.c.b16 %v3386, %v3210
  %v4091 = vpack.c.b16 %v3387, %v3211
  %v4092 = vpack.c.b16 %v3388, %v3212
  %v4093 = vpack.c.b16 %v3389, %v3213
  %v4094 = vpack.c.b16 %v3390, %v3214
  %v4095 = vpack.c.b16 %v3391, %v3215
  %v4096 = vpack.c.b16 %v3392, %v3216
  %v4097 = vpack.c.b16 %v3393, %v3217
  %v4098 = vpack.c.b16 %v3394, %v3218
  %v4099 = vpack.c.b16 %v3395, %v3219
  %v4100 = vpack.c.b16 %v3396, %v3220
  %v4101 = vpack.c.b16 %v3397, %v3221
  %v4102 = vpack.c.b16 %v3398, %v3222
  %v4103 = vpack.c.b16 %v3399, %v3223
  %v4104 = vpack.c.b16 %v3400, %v3224
  %v4105 = vpack.c.b16 %v3401, %v3225
  %v4106 = vpack.c.b16 %v3402, %v3226
  %v4107 = vpack.c.b16 %v3403, %v3227
  %v4108 = vpack.c.b16 %v3404, %v3228
  %v4109 = vpack.c.b16 %v3405, %v3229
  %v4110 = vpack.c.b16 %v3406, %v3230
  %v4111 = vpack.c.b16 %v3407, %v3231
  %v4112 = vpack.c.b16 %v3408, %v3232
  %v4113 = vpack.c.b16 %v3409, %v3233
  %v4114 = vpack.c.b16 %v3410, %v3234
  %v4115 = vpack.c.b16 %v3411, %v3235
  %v4116 = vpack.c.b16 %v3412, %v3236
  %v4117 = vpack.c.b16 %v3413, %v3237
  %v4118 = vpack.c.b16 %v3414, %v3238
  %v4119 = vpack.c.b16 %v3415, %v3239
  %v4120 = vpack.c.b16 %v3416, %v3240
  %v4121 = vpack.c.b16 %v3417, %v3241
  %v4122 = vpack.c.b16 %v3418, %v3242
  %v4123 = vpack.c.b16 %v3419, %v3243
  %v4124 = vpack.c.b16 %v3420, %v3244
  %v4125 = vpack.c.b16 %v3421, %v3245
  %v4126 = vpack.c.b16 %v3422, %v3246
  %v4127 = vpack.c.b16 %v3423, %v3247
  %v4128 = vpack.c.b16 %v3424, %v3248
  %v4129 = vpack.c.b16 %v3425, %v3249
  %v4130 = vpack.c.b16 %v3426, %v3250
  %v4131 = vpack.c.b16 %v3427, %v3251
  %v4132 = vpack.c.b16 %v3428, %v3252
  %v4133 = vpack.c.b16 %v3429, %v3253
  %v4134 = vpack.c.b16 %v3430, %v3254
  %v4135 = vpack.c.b16 %v3431, %v3255
  %v4136 = vpack.c.b16 %v3432, %v3256
  %v4137 = vpack.c.b16 %v3433, %v3257
  %v4138 = vpack.c.b16 %v3434, %v3258
  %v4139 = vpack.c.b16 %v3435, %v3259
  %v4140 = vpack.c.b16 %v3436, %v3260
  %v4141 = vpack.c.b16 %v3437, %v3261
  %v4142 = vpack.c.b16 %v3438, %v3262
  %v4143 = vpack.c.b16 %v3439, %v3263
  %v4144 = vpack.c.b16 %v3440, %v3264
  %v4145 = vpack.c.b16 %v3441, %v3265
  %v4146 = vpack.c.b16 %v3442, %v3266
  %v4147 = vpack.c.b16 %v3443, %v3267
  %v4148 = vpack.c.b16 %v3444, %v3268
  %v4149 = vpack.c.b16 %v3445, %v3269
  %v4150 = vpack.c.b16 %v3446, %v3270
  %v4151 = vpack.c.b16 %v3447, %v3271
  %v4152 = vpack.c.b16 %v3448, %v3272
  %v4153 = vpack.c.b16 %v3449, %v3273
  %v4154 = vpack.c.b16 %v3450, %v3274
  %v4155 = vpack.c.b16 %v3451, %v3275
  %v4156 = vpack.c.b16 %v3452, %v3276
  %v4157 = vpack.c.b16 %v3453, %v3277
  %v4158 = vpack.c.b16 %v3454, %v3278
  %v4159 = vpack.c.b16 %v3455, %v3279
  %v4160 = vpack.c.b16 %v3456, %v3280
  %v4161 = vpack.c.b16 %v3457, %v3281
  %v4162 = vpack.c.b16 %v3458, %v3282
  %v4163 = vpack.c.b16 %v3459, %v3283
  %v4164 = vpack.c.b16 %v3460, %v3284
  %v4165 = vpack.c.b16 %v3461, %v3285
  %v4166 = vpack.c.b16 %v3462, %v3286
  %v4167 = vpack.c.b16 %v3463, %v3287
  %v4168 = vpack.c.b16 %v3464, %v3288
  %v4169 = vpack.c.b16 %v3465, %v3289
  %v4170 = vpack.c.b16 %v3466, %v3290
  %v4171 = vpack.c.b16 %v3467, %v3291
  %v4172 = vpack.c.b16 %v3468, %v3292
  %v4173 = vpack.c.b16 %v3469, %v3293
  %v4174 = vpack.c.b16 %v3470, %v3294
  %v4175 = vpack.c.b16 %v3471, %v3295
  %v4176 = vpack.c.b16 %v3472, %v3296
  %v4177 = vpack.c.b16 %v3473, %v3297
  %v4178 = vpack.c.b16 %v3474, %v3298
  %v4179 = vpack.c.b16 %v3475, %v3299
  %v4180 = vpack.c.b16 %v3476, %v3300
  %v4181 = vpack.c.b16 %v3477, %v3301
  %v4182 = vpack.c.b16 %v3478, %v3302
  %v4183 = vpack.c.b16 %v3479, %v3303
  %v4184 = vpack.c.b16 %v3480, %v3304
  %v4185 = vpack.c.b16 %v3481, %v3305
  %v4186 = vpack.c.b16 %v3482, %v3306
  %v4187 = vpack.c.b16 %v3483, %v3307
  %v4188 = vpack.c.b16 %v3484, %v3308
  %v4189 = vpack.c.b16 %v3485, %v3309
  %v4190 = vpack.c.b16 %v3486, %v3310
  %v4191 = vpack.c.b16 %v3487, %v3311
  %v4192 = vpack.c.b16 %v3488, %v3312
  %v4193 = vpack.c.b16 %v3489, %v3313
  %v4194 = vpack.c.b16 %v3490, %v3314
  %v4195 = vpack.c.b16 %v3491, %v3315
  %v4196 = vpack.c.b16 %v3492, %v3316
  %v4197 = vpack.c.b16 %v3493, %v3317
  %v4198 = vpack.c.b16 %v3494, %v3318
  %v4199 = vpack.c.b16 %v3495, %v3319
  %v4200 = vpack.c.b16 %v3496, %v3320
  %v4201 = vpack.c.b16 %v3497, %v3321
  %v4202 = vpack.c.b16 %v3498, %v3322
  %v4203 = vpack.c.b16 %v3499, %v3323
  %v4204 = vpack.c.b16 %v3500, %v3324
  %v4205 = vpack.c.b16 %v3501, %v3325
  %v4206 = vpack.c.b16 %v3502, %v3326
  %v4207 = vpack.c.b16 %v3503, %v3327
  %v4208 = vpack.c.b16 %v3504, %v3328
  %v4209 = vpack.c.b16 %v3505, %v3329
  %v4210 = vpack.c.b16 %v3506, %v3330
  %v4211 = vpack.c.b16 %v3507, %v3331
  %v4212 = vpack.c.b16 %v3508, %v3332
  %v4213 = vpack.c.b16 %v3509, %v3333
  %v4214 = vpack.c.b16 %v3510, %v3334
  %v4215 = vpack.c.b16 %v3511, %v3335
  %v4216 = vpack.c.b16 %v3512, %v3336
  %v4217 = vpack.c.b16 %v3513, %v3337
  %v4218 = vpack.c.b16 %v3514, %v3338
  %v4219 = vpack.c.b16 %v3515, %v3339
  %v4220 = vpack.c.b16 %v3516, %v3340
  %v4221 = vpack.c.b16 %v3517, %v3341
  %v4222 = vpack.c.b16 %v3518, %v3342
  %v4223 = vpack.c.b16 %v3519, %v3343
  %v4224 = vpack.c.b16 %v3520, %v3344
  %v4225 = vpack.c.b16 %v3521, %v3345
  %v4226 = vpack.c.b16 %v3522, %v3346
  %v4227 = vpack.c.b16 %v3523, %v3347
  %v4228 = vpack.c.b16 %v3524, %v3348
  %v4229 = vpack.c.b16 %v3525, %v3349
  %v4230 = vpack.c.b16 %v3526, %v3350
  %v4231 = vpack.c.b16 %v3527, %v3351
  %v4232 = vpack.c.b16 %v3528, %v3352
  %v4233 = vpack.c.b16 %v3529, %v3353
  %v4234 = vpack.c.b16 %v3530, %v3354
  %v4235 = vpack.c.b16 %v3531, %v3355
  %v4236 = vpack.c.b16 %v3532, %v3356
  %v4237 = vpack.c.b16 %v3533, %v3357
  %v4238 = vpack.c.b16 %v3534, %v3358
  %v4239 = vpack.c.b16 %v3535, %v3359
  %v4240 = vpack.c.b16 %v3536, %v3360
  %v4241 = vpack.c.b16 %v3537, %v3361
  %4946 = vmatpush.bf16.xpose.msra.mxu0 0
  %4947 = vmatpush.bf16.xpose.msra.mxu0 0
  %4948 = vmatpush.bf16.xpose.msra.mxu0 0
  %4949 = vmatpush.bf16.xpose.msra.mxu0 0
  %4950 = vmatpush.bf16.xpose.msra.mxu0 %v4066
  %4951 = vmatpush.bf16.xpose.msra.mxu0 %v3890
  %4952 = vmatpush.bf16.xpose.msra.mxu0 %v3714
  %4953 = vmatpush.bf16.xpose.msra.mxu0 %v3538
  %4954 = vmatmul.bf16.gmra.mxu0 %v1074
  %v4955 = vpop.f32.mrf.mxu0
  %v4956 = vadd.f32 0.0, %v4955
  %v4957 = vpop.f32.mrf.mxu0
  %4958 = vdwg.mxu0
  %4959 = vmatpush.bf16.xpose.msra.mxu0 0
  %4960 = vmatpush.bf16.xpose.msra.mxu0 0
  %4961 = vmatpush.bf16.xpose.msra.mxu0 0
  %4962 = vmatpush.bf16.xpose.msra.mxu0 0
  %4963 = vmatpush.bf16.xpose.msra.mxu0 %v4067
  %4964 = vmatpush.bf16.xpose.msra.mxu0 %v3891
  %4965 = vmatpush.bf16.xpose.msra.mxu0 %v3715
  %4966 = vmatpush.bf16.xpose.msra.mxu0 %v3539
  %4967 = vmatmul.bf16.gmra.mxu0 %v1075
  %v4968 = vpop.f32.mrf.mxu0
  %v4969 = vadd.f32 %v4956, %v4968
  %v4970 = vpop.f32.mrf.mxu0
  %4971 = vdwg.mxu0
  %4972 = vmatpush.bf16.xpose.msra.mxu0 0
  %4973 = vmatpush.bf16.xpose.msra.mxu0 0
  %4974 = vmatpush.bf16.xpose.msra.mxu0 0
  %4975 = vmatpush.bf16.xpose.msra.mxu0 0
  %4976 = vmatpush.bf16.xpose.msra.mxu0 %v4068
  %4977 = vmatpush.bf16.xpose.msra.mxu0 %v3892
  %4978 = vmatpush.bf16.xpose.msra.mxu0 %v3716
  %4979 = vmatpush.bf16.xpose.msra.mxu0 %v3540
  %4980 = vmatmul.bf16.gmra.mxu0 %v1076
  %v4981 = vpop.f32.mrf.mxu0
  %v4982 = vadd.f32 %v4969, %v4981
  %v4983 = vpop.f32.mrf.mxu0
  %4984 = vdwg.mxu0
  %4985 = vmatpush.bf16.xpose.msra.mxu0 0
  %4986 = vmatpush.bf16.xpose.msra.mxu0 0
  %4987 = vmatpush.bf16.xpose.msra.mxu0 0
  %4988 = vmatpush.bf16.xpose.msra.mxu0 0
  %4989 = vmatpush.bf16.xpose.msra.mxu0 %v4069
  %4990 = vmatpush.bf16.xpose.msra.mxu0 %v3893
  %4991 = vmatpush.bf16.xpose.msra.mxu0 %v3717
  %4992 = vmatpush.bf16.xpose.msra.mxu0 %v3541
  %4993 = vmatmul.bf16.gmra.mxu0 %v1077
  %v4994 = vpop.f32.mrf.mxu0
  %v4995 = vadd.f32 %v4982, %v4994
  %v4996 = vpop.f32.mrf.mxu0
  %4997 = vdwg.mxu0
  %4998 = vmatpush.bf16.xpose.msra.mxu0 0
  %4999 = vmatpush.bf16.xpose.msra.mxu0 0
  %5000 = vmatpush.bf16.xpose.msra.mxu0 0
  %5001 = vmatpush.bf16.xpose.msra.mxu0 0
  %5002 = vmatpush.bf16.xpose.msra.mxu0 %v4070
  %5003 = vmatpush.bf16.xpose.msra.mxu0 %v3894
  %5004 = vmatpush.bf16.xpose.msra.mxu0 %v3718
  %5005 = vmatpush.bf16.xpose.msra.mxu0 %v3542
  %5006 = vmatmul.bf16.gmra.mxu0 %v1078
  %v5007 = vpop.f32.mrf.mxu0
  %v5008 = vadd.f32 %v4995, %v5007
  %v5009 = vpop.f32.mrf.mxu0
  %5010 = vdwg.mxu0
  %5011 = vmatpush.bf16.xpose.msra.mxu0 0
  %5012 = vmatpush.bf16.xpose.msra.mxu0 0
  %5013 = vmatpush.bf16.xpose.msra.mxu0 0
  %5014 = vmatpush.bf16.xpose.msra.mxu0 0
  %5015 = vmatpush.bf16.xpose.msra.mxu0 %v4071
  %5016 = vmatpush.bf16.xpose.msra.mxu0 %v3895
  %5017 = vmatpush.bf16.xpose.msra.mxu0 %v3719
  %5018 = vmatpush.bf16.xpose.msra.mxu0 %v3543
  %5019 = vmatmul.bf16.gmra.mxu0 %v1079
  %v5020 = vpop.f32.mrf.mxu0
  %v5021 = vadd.f32 %v5008, %v5020
  %v5022 = vpop.f32.mrf.mxu0
  %5023 = vdwg.mxu0
  %5024 = vmatpush.bf16.xpose.msra.mxu0 0
  %5025 = vmatpush.bf16.xpose.msra.mxu0 0
  %5026 = vmatpush.bf16.xpose.msra.mxu0 0
  %5027 = vmatpush.bf16.xpose.msra.mxu0 0
  %5028 = vmatpush.bf16.xpose.msra.mxu0 %v4072
  %5029 = vmatpush.bf16.xpose.msra.mxu0 %v3896
  %5030 = vmatpush.bf16.xpose.msra.mxu0 %v3720
  %5031 = vmatpush.bf16.xpose.msra.mxu0 %v3544
  %5032 = vmatmul.bf16.gmra.mxu0 %v1080
  %v5033 = vpop.f32.mrf.mxu0
  %v5034 = vadd.f32 %v5021, %v5033
  %v5035 = vpop.f32.mrf.mxu0
  %5036 = vdwg.mxu0
  %5037 = vmatpush.bf16.xpose.msra.mxu0 0
  %5038 = vmatpush.bf16.xpose.msra.mxu0 0
  %5039 = vmatpush.bf16.xpose.msra.mxu0 0
  %5040 = vmatpush.bf16.xpose.msra.mxu0 0
  %5041 = vmatpush.bf16.xpose.msra.mxu0 %v4073
  %5042 = vmatpush.bf16.xpose.msra.mxu0 %v3897
  %5043 = vmatpush.bf16.xpose.msra.mxu0 %v3721
  %5044 = vmatpush.bf16.xpose.msra.mxu0 %v3545
  %5045 = vmatmul.bf16.gmra.mxu0 %v1081
  %v5046 = vpop.f32.mrf.mxu0
  %v5047 = vadd.f32 %v5034, %v5046
  %v5048 = vpop.f32.mrf.mxu0
  %5049 = vdwg.mxu0
  %5050 = vmatpush.bf16.xpose.msra.mxu0 0
  %5051 = vmatpush.bf16.xpose.msra.mxu0 0
  %5052 = vmatpush.bf16.xpose.msra.mxu0 0
  %5053 = vmatpush.bf16.xpose.msra.mxu0 0
  %5054 = vmatpush.bf16.xpose.msra.mxu0 %v4074
  %5055 = vmatpush.bf16.xpose.msra.mxu0 %v3898
  %5056 = vmatpush.bf16.xpose.msra.mxu0 %v3722
  %5057 = vmatpush.bf16.xpose.msra.mxu0 %v3546
  %5058 = vmatmul.bf16.gmra.mxu0 %v1082
  %v5059 = vpop.f32.mrf.mxu0
  %v5060 = vadd.f32 %v5047, %v5059
  %v5061 = vpop.f32.mrf.mxu0
  %5062 = vdwg.mxu0
  %5063 = vmatpush.bf16.xpose.msra.mxu0 0
  %5064 = vmatpush.bf16.xpose.msra.mxu0 0
  %5065 = vmatpush.bf16.xpose.msra.mxu0 0
  %5066 = vmatpush.bf16.xpose.msra.mxu0 0
  %5067 = vmatpush.bf16.xpose.msra.mxu0 %v4075
  %5068 = vmatpush.bf16.xpose.msra.mxu0 %v3899
  %5069 = vmatpush.bf16.xpose.msra.mxu0 %v3723
  %5070 = vmatpush.bf16.xpose.msra.mxu0 %v3547
  %5071 = vmatmul.bf16.gmra.mxu0 %v1083
  %v5072 = vpop.f32.mrf.mxu0
  %v5073 = vadd.f32 %v5060, %v5072
  %v5074 = vpop.f32.mrf.mxu0
  %5075 = vdwg.mxu0
  %5076 = vmatpush.bf16.xpose.msra.mxu0 0
  %5077 = vmatpush.bf16.xpose.msra.mxu0 0
  %5078 = vmatpush.bf16.xpose.msra.mxu0 0
  %5079 = vmatpush.bf16.xpose.msra.mxu0 0
  %5080 = vmatpush.bf16.xpose.msra.mxu0 %v4076
  %5081 = vmatpush.bf16.xpose.msra.mxu0 %v3900
  %5082 = vmatpush.bf16.xpose.msra.mxu0 %v3724
  %5083 = vmatpush.bf16.xpose.msra.mxu0 %v3548
  %5084 = vmatmul.bf16.gmra.mxu0 %v1084
  %v5085 = vpop.f32.mrf.mxu0
  %v5086 = vadd.f32 %v5073, %v5085
  %v5087 = vpop.f32.mrf.mxu0
  %5088 = vdwg.mxu0
  %5089 = vmatpush.bf16.xpose.msra.mxu0 0
  %5090 = vmatpush.bf16.xpose.msra.mxu0 0
  %5091 = vmatpush.bf16.xpose.msra.mxu0 0
  %5092 = vmatpush.bf16.xpose.msra.mxu0 0
  %5093 = vmatpush.bf16.xpose.msra.mxu0 %v4077
  %5094 = vmatpush.bf16.xpose.msra.mxu0 %v3901
  %5095 = vmatpush.bf16.xpose.msra.mxu0 %v3725
  %5096 = vmatpush.bf16.xpose.msra.mxu0 %v3549
  %5097 = vmatmul.bf16.gmra.mxu0 %v1085
  %v5098 = vpop.f32.mrf.mxu0
  %v5099 = vadd.f32 %v5086, %v5098
  %v5100 = vpop.f32.mrf.mxu0
  %5101 = vdwg.mxu0
  %5102 = vmatpush.bf16.xpose.msra.mxu0 0
  %5103 = vmatpush.bf16.xpose.msra.mxu0 0
  %5104 = vmatpush.bf16.xpose.msra.mxu0 0
  %5105 = vmatpush.bf16.xpose.msra.mxu0 0
  %5106 = vmatpush.bf16.xpose.msra.mxu0 %v4078
  %5107 = vmatpush.bf16.xpose.msra.mxu0 %v3902
  %5108 = vmatpush.bf16.xpose.msra.mxu0 %v3726
  %5109 = vmatpush.bf16.xpose.msra.mxu0 %v3550
  %5110 = vmatmul.bf16.gmra.mxu0 %v1086
  %v5111 = vpop.f32.mrf.mxu0
  %v5112 = vadd.f32 %v5099, %v5111
  %v5113 = vpop.f32.mrf.mxu0
  %5114 = vdwg.mxu0
  %5115 = vmatpush.bf16.xpose.msra.mxu0 0
  %5116 = vmatpush.bf16.xpose.msra.mxu0 0
  %5117 = vmatpush.bf16.xpose.msra.mxu0 0
  %5118 = vmatpush.bf16.xpose.msra.mxu0 0
  %5119 = vmatpush.bf16.xpose.msra.mxu0 %v4079
  %5120 = vmatpush.bf16.xpose.msra.mxu0 %v3903
  %5121 = vmatpush.bf16.xpose.msra.mxu0 %v3727
  %5122 = vmatpush.bf16.xpose.msra.mxu0 %v3551
  %5123 = vmatmul.bf16.gmra.mxu0 %v1087
  %v5124 = vpop.f32.mrf.mxu0
  %v5125 = vadd.f32 %v5112, %v5124
  %v5126 = vpop.f32.mrf.mxu0
  %5127 = vdwg.mxu0
  %5128 = vmatpush.bf16.xpose.msra.mxu0 0
  %5129 = vmatpush.bf16.xpose.msra.mxu0 0
  %5130 = vmatpush.bf16.xpose.msra.mxu0 0
  %5131 = vmatpush.bf16.xpose.msra.mxu0 0
  %5132 = vmatpush.bf16.xpose.msra.mxu0 %v4080
  %5133 = vmatpush.bf16.xpose.msra.mxu0 %v3904
  %5134 = vmatpush.bf16.xpose.msra.mxu0 %v3728
  %5135 = vmatpush.bf16.xpose.msra.mxu0 %v3552
  %5136 = vmatmul.bf16.gmra.mxu0 %v1088
  %v5137 = vpop.f32.mrf.mxu0
  %v5138 = vadd.f32 %v5125, %v5137
  %v5139 = vpop.f32.mrf.mxu0
  %5140 = vdwg.mxu0
  %5141 = vmatpush.bf16.xpose.msra.mxu0 0
  %5142 = vmatpush.bf16.xpose.msra.mxu0 0
  %5143 = vmatpush.bf16.xpose.msra.mxu0 0
  %5144 = vmatpush.bf16.xpose.msra.mxu0 0
  %5145 = vmatpush.bf16.xpose.msra.mxu0 %v4081
  %5146 = vmatpush.bf16.xpose.msra.mxu0 %v3905
  %5147 = vmatpush.bf16.xpose.msra.mxu0 %v3729
  %5148 = vmatpush.bf16.xpose.msra.mxu0 %v3553
  %5149 = vmatmul.bf16.gmra.mxu0 %v1089
  %v5150 = vpop.f32.mrf.mxu0
  %v5151 = vadd.f32 %v5138, %v5150
  %v5152 = vpop.f32.mrf.mxu0
  %5153 = vdwg.mxu0
  %5154 = vmatpush.bf16.xpose.msra.mxu0 0
  %5155 = vmatpush.bf16.xpose.msra.mxu0 0
  %5156 = vmatpush.bf16.xpose.msra.mxu0 0
  %5157 = vmatpush.bf16.xpose.msra.mxu0 0
  %5158 = vmatpush.bf16.xpose.msra.mxu0 %v4082
  %5159 = vmatpush.bf16.xpose.msra.mxu0 %v3906
  %5160 = vmatpush.bf16.xpose.msra.mxu0 %v3730
  %5161 = vmatpush.bf16.xpose.msra.mxu0 %v3554
  %5162 = vmatmul.bf16.gmra.mxu0 %v1090
  %v5163 = vpop.f32.mrf.mxu0
  %v5164 = vadd.f32 %v5151, %v5163
  %v5165 = vpop.f32.mrf.mxu0
  %5166 = vdwg.mxu0
  %5167 = vmatpush.bf16.xpose.msra.mxu0 0
  %5168 = vmatpush.bf16.xpose.msra.mxu0 0
  %5169 = vmatpush.bf16.xpose.msra.mxu0 0
  %5170 = vmatpush.bf16.xpose.msra.mxu0 0
  %5171 = vmatpush.bf16.xpose.msra.mxu0 %v4083
  %5172 = vmatpush.bf16.xpose.msra.mxu0 %v3907
  %5173 = vmatpush.bf16.xpose.msra.mxu0 %v3731
  %5174 = vmatpush.bf16.xpose.msra.mxu0 %v3555
  %5175 = vmatmul.bf16.gmra.mxu0 %v1091
  %v5176 = vpop.f32.mrf.mxu0
  %v5177 = vadd.f32 %v5164, %v5176
  %v5178 = vpop.f32.mrf.mxu0
  %5179 = vdwg.mxu0
  %5180 = vmatpush.bf16.xpose.msra.mxu0 0
  %5181 = vmatpush.bf16.xpose.msra.mxu0 0
  %5182 = vmatpush.bf16.xpose.msra.mxu0 0
  %5183 = vmatpush.bf16.xpose.msra.mxu0 0
  %5184 = vmatpush.bf16.xpose.msra.mxu0 %v4084
  %5185 = vmatpush.bf16.xpose.msra.mxu0 %v3908
  %5186 = vmatpush.bf16.xpose.msra.mxu0 %v3732
  %5187 = vmatpush.bf16.xpose.msra.mxu0 %v3556
  %5188 = vmatmul.bf16.gmra.mxu0 %v1092
  %v5189 = vpop.f32.mrf.mxu0
  %v5190 = vadd.f32 %v5177, %v5189
  %v5191 = vpop.f32.mrf.mxu0
  %5192 = vdwg.mxu0
  %5193 = vmatpush.bf16.xpose.msra.mxu0 0
  %5194 = vmatpush.bf16.xpose.msra.mxu0 0
  %5195 = vmatpush.bf16.xpose.msra.mxu0 0
  %5196 = vmatpush.bf16.xpose.msra.mxu0 0
  %5197 = vmatpush.bf16.xpose.msra.mxu0 %v4085
  %5198 = vmatpush.bf16.xpose.msra.mxu0 %v3909
  %5199 = vmatpush.bf16.xpose.msra.mxu0 %v3733
  %5200 = vmatpush.bf16.xpose.msra.mxu0 %v3557
  %5201 = vmatmul.bf16.gmra.mxu0 %v1093
  %v5202 = vpop.f32.mrf.mxu0
  %v5203 = vadd.f32 %v5190, %v5202
  %v5204 = vpop.f32.mrf.mxu0
  %5205 = vdwg.mxu0
  %5206 = vmatpush.bf16.xpose.msra.mxu0 0
  %5207 = vmatpush.bf16.xpose.msra.mxu0 0
  %5208 = vmatpush.bf16.xpose.msra.mxu0 0
  %5209 = vmatpush.bf16.xpose.msra.mxu0 0
  %5210 = vmatpush.bf16.xpose.msra.mxu0 %v4086
  %5211 = vmatpush.bf16.xpose.msra.mxu0 %v3910
  %5212 = vmatpush.bf16.xpose.msra.mxu0 %v3734
  %5213 = vmatpush.bf16.xpose.msra.mxu0 %v3558
  %5214 = vmatmul.bf16.gmra.mxu0 %v1094
  %v5215 = vpop.f32.mrf.mxu0
  %v5216 = vadd.f32 %v5203, %v5215
  %v5217 = vpop.f32.mrf.mxu0
  %5218 = vdwg.mxu0
  %5219 = vmatpush.bf16.xpose.msra.mxu0 0
  %5220 = vmatpush.bf16.xpose.msra.mxu0 0
  %5221 = vmatpush.bf16.xpose.msra.mxu0 0
  %5222 = vmatpush.bf16.xpose.msra.mxu0 0
  %5223 = vmatpush.bf16.xpose.msra.mxu0 %v4087
  %5224 = vmatpush.bf16.xpose.msra.mxu0 %v3911
  %5225 = vmatpush.bf16.xpose.msra.mxu0 %v3735
  %5226 = vmatpush.bf16.xpose.msra.mxu0 %v3559
  %5227 = vmatmul.bf16.gmra.mxu0 %v1095
  %v5228 = vpop.f32.mrf.mxu0
  %v5229 = vadd.f32 %v5216, %v5228
  %v5230 = vpop.f32.mrf.mxu0
  %5231 = vdwg.mxu0
  %5232 = vmatpush.bf16.xpose.msra.mxu0 0
  %5233 = vmatpush.bf16.xpose.msra.mxu0 0
  %5234 = vmatpush.bf16.xpose.msra.mxu0 0
  %5235 = vmatpush.bf16.xpose.msra.mxu0 0
  %5236 = vmatpush.bf16.xpose.msra.mxu0 %v4088
  %5237 = vmatpush.bf16.xpose.msra.mxu0 %v3912
  %5238 = vmatpush.bf16.xpose.msra.mxu0 %v3736
  %5239 = vmatpush.bf16.xpose.msra.mxu0 %v3560
  %5240 = vmatmul.bf16.gmra.mxu0 %v1096
  %v5241 = vpop.f32.mrf.mxu0
  %v5242 = vadd.f32 %v5229, %v5241
  %v5243 = vpop.f32.mrf.mxu0
  %5244 = vdwg.mxu0
  %5245 = vmatpush.bf16.xpose.msra.mxu0 0
  %5246 = vmatpush.bf16.xpose.msra.mxu0 0
  %5247 = vmatpush.bf16.xpose.msra.mxu0 0
  %5248 = vmatpush.bf16.xpose.msra.mxu0 0
  %5249 = vmatpush.bf16.xpose.msra.mxu0 %v4089
  %5250 = vmatpush.bf16.xpose.msra.mxu0 %v3913
  %5251 = vmatpush.bf16.xpose.msra.mxu0 %v3737
  %5252 = vmatpush.bf16.xpose.msra.mxu0 %v3561
  %5253 = vmatmul.bf16.gmra.mxu0 %v1097
  %v5254 = vpop.f32.mrf.mxu0
  %v5255 = vadd.f32 %v5242, %v5254
  %v5256 = vpop.f32.mrf.mxu0
  %5257 = vdwg.mxu0
  %5258 = vmatpush.bf16.xpose.msra.mxu0 0
  %5259 = vmatpush.bf16.xpose.msra.mxu0 0
  %5260 = vmatpush.bf16.xpose.msra.mxu0 0
  %5261 = vmatpush.bf16.xpose.msra.mxu0 0
  %5262 = vmatpush.bf16.xpose.msra.mxu0 %v4090
  %5263 = vmatpush.bf16.xpose.msra.mxu0 %v3914
  %5264 = vmatpush.bf16.xpose.msra.mxu0 %v3738
  %5265 = vmatpush.bf16.xpose.msra.mxu0 %v3562
  %5266 = vmatmul.bf16.gmra.mxu0 %v1098
  %v5267 = vpop.f32.mrf.mxu0
  %v5268 = vadd.f32 %v5255, %v5267
  %v5269 = vpop.f32.mrf.mxu0
  %5270 = vdwg.mxu0
  %5271 = vmatpush.bf16.xpose.msra.mxu0 0
  %5272 = vmatpush.bf16.xpose.msra.mxu0 0
  %5273 = vmatpush.bf16.xpose.msra.mxu0 0
  %5274 = vmatpush.bf16.xpose.msra.mxu0 0
  %5275 = vmatpush.bf16.xpose.msra.mxu0 %v4091
  %5276 = vmatpush.bf16.xpose.msra.mxu0 %v3915
  %5277 = vmatpush.bf16.xpose.msra.mxu0 %v3739
  %5278 = vmatpush.bf16.xpose.msra.mxu0 %v3563
  %5279 = vmatmul.bf16.gmra.mxu0 %v1099
  %v5280 = vpop.f32.mrf.mxu0
  %v5281 = vadd.f32 %v5268, %v5280
  %v5282 = vpop.f32.mrf.mxu0
  %5283 = vdwg.mxu0
  %5284 = vmatpush.bf16.xpose.msra.mxu0 0
  %5285 = vmatpush.bf16.xpose.msra.mxu0 0
  %5286 = vmatpush.bf16.xpose.msra.mxu0 0
  %5287 = vmatpush.bf16.xpose.msra.mxu0 0
  %5288 = vmatpush.bf16.xpose.msra.mxu0 %v4092
  %5289 = vmatpush.bf16.xpose.msra.mxu0 %v3916
  %5290 = vmatpush.bf16.xpose.msra.mxu0 %v3740
  %5291 = vmatpush.bf16.xpose.msra.mxu0 %v3564
  %5292 = vmatmul.bf16.gmra.mxu0 %v1100
  %v5293 = vpop.f32.mrf.mxu0
  %v5294 = vadd.f32 %v5281, %v5293
  %v5295 = vpop.f32.mrf.mxu0
  %5296 = vdwg.mxu0
  %5297 = vmatpush.bf16.xpose.msra.mxu0 0
  %5298 = vmatpush.bf16.xpose.msra.mxu0 0
  %5299 = vmatpush.bf16.xpose.msra.mxu0 0
  %5300 = vmatpush.bf16.xpose.msra.mxu0 0
  %5301 = vmatpush.bf16.xpose.msra.mxu0 %v4093
  %5302 = vmatpush.bf16.xpose.msra.mxu0 %v3917
  %5303 = vmatpush.bf16.xpose.msra.mxu0 %v3741
  %5304 = vmatpush.bf16.xpose.msra.mxu0 %v3565
  %5305 = vmatmul.bf16.gmra.mxu0 %v1101
  %v5306 = vpop.f32.mrf.mxu0
  %v5307 = vadd.f32 %v5294, %v5306
  %v5308 = vpop.f32.mrf.mxu0
  %5309 = vdwg.mxu0
  %5310 = vmatpush.bf16.xpose.msra.mxu0 0
  %5311 = vmatpush.bf16.xpose.msra.mxu0 0
  %5312 = vmatpush.bf16.xpose.msra.mxu0 0
  %5313 = vmatpush.bf16.xpose.msra.mxu0 0
  %5314 = vmatpush.bf16.xpose.msra.mxu0 %v4094
  %5315 = vmatpush.bf16.xpose.msra.mxu0 %v3918
  %5316 = vmatpush.bf16.xpose.msra.mxu0 %v3742
  %5317 = vmatpush.bf16.xpose.msra.mxu0 %v3566
  %5318 = vmatmul.bf16.gmra.mxu0 %v1102
  %v5319 = vpop.f32.mrf.mxu0
  %v5320 = vadd.f32 %v5307, %v5319
  %v5321 = vpop.f32.mrf.mxu0
  %5322 = vdwg.mxu0
  %5323 = vmatpush.bf16.xpose.msra.mxu0 0
  %5324 = vmatpush.bf16.xpose.msra.mxu0 0
  %5325 = vmatpush.bf16.xpose.msra.mxu0 0
  %5326 = vmatpush.bf16.xpose.msra.mxu0 0
  %5327 = vmatpush.bf16.xpose.msra.mxu0 %v4095
  %5328 = vmatpush.bf16.xpose.msra.mxu0 %v3919
  %5329 = vmatpush.bf16.xpose.msra.mxu0 %v3743
  %5330 = vmatpush.bf16.xpose.msra.mxu0 %v3567
  %5331 = vmatmul.bf16.gmra.mxu0 %v1103
  %v5332 = vpop.f32.mrf.mxu0
  %v5333 = vadd.f32 %v5320, %v5332
  %v5334 = vpop.f32.mrf.mxu0
  %5335 = vdwg.mxu0
  %5336 = vmatpush.bf16.xpose.msra.mxu0 0
  %5337 = vmatpush.bf16.xpose.msra.mxu0 0
  %5338 = vmatpush.bf16.xpose.msra.mxu0 0
  %5339 = vmatpush.bf16.xpose.msra.mxu0 0
  %5340 = vmatpush.bf16.xpose.msra.mxu0 %v4096
  %5341 = vmatpush.bf16.xpose.msra.mxu0 %v3920
  %5342 = vmatpush.bf16.xpose.msra.mxu0 %v3744
  %5343 = vmatpush.bf16.xpose.msra.mxu0 %v3568
  %5344 = vmatmul.bf16.gmra.mxu0 %v1104
  %v5345 = vpop.f32.mrf.mxu0
  %v5346 = vadd.f32 %v5333, %v5345
  %v5347 = vpop.f32.mrf.mxu0
  %5348 = vdwg.mxu0
  %5349 = vmatpush.bf16.xpose.msra.mxu0 0
  %5350 = vmatpush.bf16.xpose.msra.mxu0 0
  %5351 = vmatpush.bf16.xpose.msra.mxu0 0
  %5352 = vmatpush.bf16.xpose.msra.mxu0 0
  %5353 = vmatpush.bf16.xpose.msra.mxu0 %v4097
  %5354 = vmatpush.bf16.xpose.msra.mxu0 %v3921
  %5355 = vmatpush.bf16.xpose.msra.mxu0 %v3745
  %5356 = vmatpush.bf16.xpose.msra.mxu0 %v3569
  %5357 = vmatmul.bf16.gmra.mxu0 %v1105
  %v5358 = vpop.f32.mrf.mxu0
  %v5359 = vadd.f32 %v5346, %v5358
  %v5360 = vpop.f32.mrf.mxu0
  %5361 = vdwg.mxu0
  %5362 = vmatpush.bf16.xpose.msra.mxu0 0
  %5363 = vmatpush.bf16.xpose.msra.mxu0 0
  %5364 = vmatpush.bf16.xpose.msra.mxu0 0
  %5365 = vmatpush.bf16.xpose.msra.mxu0 0
  %5366 = vmatpush.bf16.xpose.msra.mxu0 %v4098
  %5367 = vmatpush.bf16.xpose.msra.mxu0 %v3922
  %5368 = vmatpush.bf16.xpose.msra.mxu0 %v3746
  %5369 = vmatpush.bf16.xpose.msra.mxu0 %v3570
  %5370 = vmatmul.bf16.gmra.mxu0 %v1106
  %v5371 = vpop.f32.mrf.mxu0
  %v5372 = vadd.f32 %v5359, %v5371
  %v5373 = vpop.f32.mrf.mxu0
  %5374 = vdwg.mxu0
  %5375 = vmatpush.bf16.xpose.msra.mxu0 0
  %5376 = vmatpush.bf16.xpose.msra.mxu0 0
  %5377 = vmatpush.bf16.xpose.msra.mxu0 0
  %5378 = vmatpush.bf16.xpose.msra.mxu0 0
  %5379 = vmatpush.bf16.xpose.msra.mxu0 %v4099
  %5380 = vmatpush.bf16.xpose.msra.mxu0 %v3923
  %5381 = vmatpush.bf16.xpose.msra.mxu0 %v3747
  %5382 = vmatpush.bf16.xpose.msra.mxu0 %v3571
  %5383 = vmatmul.bf16.gmra.mxu0 %v1107
  %v5384 = vpop.f32.mrf.mxu0
  %v5385 = vadd.f32 %v5372, %v5384
  %v5386 = vpop.f32.mrf.mxu0
  %5387 = vdwg.mxu0
  %5388 = vmatpush.bf16.xpose.msra.mxu0 0
  %5389 = vmatpush.bf16.xpose.msra.mxu0 0
  %5390 = vmatpush.bf16.xpose.msra.mxu0 0
  %5391 = vmatpush.bf16.xpose.msra.mxu0 0
  %5392 = vmatpush.bf16.xpose.msra.mxu0 %v4100
  %5393 = vmatpush.bf16.xpose.msra.mxu0 %v3924
  %5394 = vmatpush.bf16.xpose.msra.mxu0 %v3748
  %5395 = vmatpush.bf16.xpose.msra.mxu0 %v3572
  %5396 = vmatmul.bf16.gmra.mxu0 %v1108
  %v5397 = vpop.f32.mrf.mxu0
  %v5398 = vadd.f32 %v5385, %v5397
  %v5399 = vpop.f32.mrf.mxu0
  %5400 = vdwg.mxu0
  %5401 = vmatpush.bf16.xpose.msra.mxu0 0
  %5402 = vmatpush.bf16.xpose.msra.mxu0 0
  %5403 = vmatpush.bf16.xpose.msra.mxu0 0
  %5404 = vmatpush.bf16.xpose.msra.mxu0 0
  %5405 = vmatpush.bf16.xpose.msra.mxu0 %v4101
  %5406 = vmatpush.bf16.xpose.msra.mxu0 %v3925
  %5407 = vmatpush.bf16.xpose.msra.mxu0 %v3749
  %5408 = vmatpush.bf16.xpose.msra.mxu0 %v3573
  %5409 = vmatmul.bf16.gmra.mxu0 %v1109
  %v5410 = vpop.f32.mrf.mxu0
  %v5411 = vadd.f32 %v5398, %v5410
  %v5412 = vpop.f32.mrf.mxu0
  %5413 = vdwg.mxu0
  %5414 = vmatpush.bf16.xpose.msra.mxu0 0
  %5415 = vmatpush.bf16.xpose.msra.mxu0 0
  %5416 = vmatpush.bf16.xpose.msra.mxu0 0
  %5417 = vmatpush.bf16.xpose.msra.mxu0 0
  %5418 = vmatpush.bf16.xpose.msra.mxu0 %v4102
  %5419 = vmatpush.bf16.xpose.msra.mxu0 %v3926
  %5420 = vmatpush.bf16.xpose.msra.mxu0 %v3750
  %5421 = vmatpush.bf16.xpose.msra.mxu0 %v3574
  %5422 = vmatmul.bf16.gmra.mxu0 %v1110
  %v5423 = vpop.f32.mrf.mxu0
  %v5424 = vadd.f32 %v5411, %v5423
  %v5425 = vpop.f32.mrf.mxu0
  %5426 = vdwg.mxu0
  %5427 = vmatpush.bf16.xpose.msra.mxu0 0
  %5428 = vmatpush.bf16.xpose.msra.mxu0 0
  %5429 = vmatpush.bf16.xpose.msra.mxu0 0
  %5430 = vmatpush.bf16.xpose.msra.mxu0 0
  %5431 = vmatpush.bf16.xpose.msra.mxu0 %v4103
  %5432 = vmatpush.bf16.xpose.msra.mxu0 %v3927
  %5433 = vmatpush.bf16.xpose.msra.mxu0 %v3751
  %5434 = vmatpush.bf16.xpose.msra.mxu0 %v3575
  %5435 = vmatmul.bf16.gmra.mxu0 %v1111
  %v5436 = vpop.f32.mrf.mxu0
  %v5437 = vadd.f32 %v5424, %v5436
  %v5438 = vpop.f32.mrf.mxu0
  %5439 = vdwg.mxu0
  %5440 = vmatpush.bf16.xpose.msra.mxu0 0
  %5441 = vmatpush.bf16.xpose.msra.mxu0 0
  %5442 = vmatpush.bf16.xpose.msra.mxu0 0
  %5443 = vmatpush.bf16.xpose.msra.mxu0 0
  %5444 = vmatpush.bf16.xpose.msra.mxu0 %v4104
  %5445 = vmatpush.bf16.xpose.msra.mxu0 %v3928
  %5446 = vmatpush.bf16.xpose.msra.mxu0 %v3752
  %5447 = vmatpush.bf16.xpose.msra.mxu0 %v3576
  %5448 = vmatmul.bf16.gmra.mxu0 %v1112
  %v5449 = vpop.f32.mrf.mxu0
  %v5450 = vadd.f32 %v5437, %v5449
  %v5451 = vpop.f32.mrf.mxu0
  %5452 = vdwg.mxu0
  %5453 = vmatpush.bf16.xpose.msra.mxu0 0
  %5454 = vmatpush.bf16.xpose.msra.mxu0 0
  %5455 = vmatpush.bf16.xpose.msra.mxu0 0
  %5456 = vmatpush.bf16.xpose.msra.mxu0 0
  %5457 = vmatpush.bf16.xpose.msra.mxu0 %v4105
  %5458 = vmatpush.bf16.xpose.msra.mxu0 %v3929
  %5459 = vmatpush.bf16.xpose.msra.mxu0 %v3753
  %5460 = vmatpush.bf16.xpose.msra.mxu0 %v3577
  %5461 = vmatmul.bf16.gmra.mxu0 %v1113
  %v5462 = vpop.f32.mrf.mxu0
  %v5463 = vadd.f32 %v5450, %v5462
  %v5464 = vpop.f32.mrf.mxu0
  %5465 = vdwg.mxu0
  %5466 = vmatpush.bf16.xpose.msra.mxu0 0
  %5467 = vmatpush.bf16.xpose.msra.mxu0 0
  %5468 = vmatpush.bf16.xpose.msra.mxu0 0
  %5469 = vmatpush.bf16.xpose.msra.mxu0 0
  %5470 = vmatpush.bf16.xpose.msra.mxu0 %v4106
  %5471 = vmatpush.bf16.xpose.msra.mxu0 %v3930
  %5472 = vmatpush.bf16.xpose.msra.mxu0 %v3754
  %5473 = vmatpush.bf16.xpose.msra.mxu0 %v3578
  %5474 = vmatmul.bf16.gmra.mxu0 %v1114
  %v5475 = vpop.f32.mrf.mxu0
  %v5476 = vadd.f32 %v5463, %v5475
  %v5477 = vpop.f32.mrf.mxu0
  %5478 = vdwg.mxu0
  %5479 = vmatpush.bf16.xpose.msra.mxu0 0
  %5480 = vmatpush.bf16.xpose.msra.mxu0 0
  %5481 = vmatpush.bf16.xpose.msra.mxu0 0
  %5482 = vmatpush.bf16.xpose.msra.mxu0 0
  %5483 = vmatpush.bf16.xpose.msra.mxu0 %v4107
  %5484 = vmatpush.bf16.xpose.msra.mxu0 %v3931
  %5485 = vmatpush.bf16.xpose.msra.mxu0 %v3755
  %5486 = vmatpush.bf16.xpose.msra.mxu0 %v3579
  %5487 = vmatmul.bf16.gmra.mxu0 %v1115
  %v5488 = vpop.f32.mrf.mxu0
  %v5489 = vadd.f32 %v5476, %v5488
  %v5490 = vpop.f32.mrf.mxu0
  %5491 = vdwg.mxu0
  %5492 = vmatpush.bf16.xpose.msra.mxu0 0
  %5493 = vmatpush.bf16.xpose.msra.mxu0 0
  %5494 = vmatpush.bf16.xpose.msra.mxu0 0
  %5495 = vmatpush.bf16.xpose.msra.mxu0 0
  %5496 = vmatpush.bf16.xpose.msra.mxu0 %v4108
  %5497 = vmatpush.bf16.xpose.msra.mxu0 %v3932
  %5498 = vmatpush.bf16.xpose.msra.mxu0 %v3756
  %5499 = vmatpush.bf16.xpose.msra.mxu0 %v3580
  %5500 = vmatmul.bf16.gmra.mxu0 %v1116
  %v5501 = vpop.f32.mrf.mxu0
  %v5502 = vadd.f32 %v5489, %v5501
  %v5503 = vpop.f32.mrf.mxu0
  %5504 = vdwg.mxu0
  %5505 = vmatpush.bf16.xpose.msra.mxu0 0
  %5506 = vmatpush.bf16.xpose.msra.mxu0 0
  %5507 = vmatpush.bf16.xpose.msra.mxu0 0
  %5508 = vmatpush.bf16.xpose.msra.mxu0 0
  %5509 = vmatpush.bf16.xpose.msra.mxu0 %v4109
  %5510 = vmatpush.bf16.xpose.msra.mxu0 %v3933
  %5511 = vmatpush.bf16.xpose.msra.mxu0 %v3757
  %5512 = vmatpush.bf16.xpose.msra.mxu0 %v3581
  %5513 = vmatmul.bf16.gmra.mxu0 %v1117
  %v5514 = vpop.f32.mrf.mxu0
  %v5515 = vadd.f32 %v5502, %v5514
  %v5516 = vpop.f32.mrf.mxu0
  %5517 = vdwg.mxu0
  %5518 = vmatpush.bf16.xpose.msra.mxu0 0
  %5519 = vmatpush.bf16.xpose.msra.mxu0 0
  %5520 = vmatpush.bf16.xpose.msra.mxu0 0
  %5521 = vmatpush.bf16.xpose.msra.mxu0 0
  %5522 = vmatpush.bf16.xpose.msra.mxu0 %v4110
  %5523 = vmatpush.bf16.xpose.msra.mxu0 %v3934
  %5524 = vmatpush.bf16.xpose.msra.mxu0 %v3758
  %5525 = vmatpush.bf16.xpose.msra.mxu0 %v3582
  %5526 = vmatmul.bf16.gmra.mxu0 %v1118
  %v5527 = vpop.f32.mrf.mxu0
  %v5528 = vadd.f32 %v5515, %v5527
  %v5529 = vpop.f32.mrf.mxu0
  %5530 = vdwg.mxu0
  %5531 = vmatpush.bf16.xpose.msra.mxu0 0
  %5532 = vmatpush.bf16.xpose.msra.mxu0 0
  %5533 = vmatpush.bf16.xpose.msra.mxu0 0
  %5534 = vmatpush.bf16.xpose.msra.mxu0 0
  %5535 = vmatpush.bf16.xpose.msra.mxu0 %v4111
  %5536 = vmatpush.bf16.xpose.msra.mxu0 %v3935
  %5537 = vmatpush.bf16.xpose.msra.mxu0 %v3759
  %5538 = vmatpush.bf16.xpose.msra.mxu0 %v3583
  %5539 = vmatmul.bf16.gmra.mxu0 %v1119
  %v5540 = vpop.f32.mrf.mxu0
  %v5541 = vadd.f32 %v5528, %v5540
  %v5542 = vpop.f32.mrf.mxu0
  %5543 = vdwg.mxu0
  %5544 = vmatpush.bf16.xpose.msra.mxu0 0
  %5545 = vmatpush.bf16.xpose.msra.mxu0 0
  %5546 = vmatpush.bf16.xpose.msra.mxu0 0
  %5547 = vmatpush.bf16.xpose.msra.mxu0 0
  %5548 = vmatpush.bf16.xpose.msra.mxu0 %v4112
  %5549 = vmatpush.bf16.xpose.msra.mxu0 %v3936
  %5550 = vmatpush.bf16.xpose.msra.mxu0 %v3760
  %5551 = vmatpush.bf16.xpose.msra.mxu0 %v3584
  %5552 = vmatmul.bf16.gmra.mxu0 %v1120
  %v5553 = vpop.f32.mrf.mxu0
  %v5554 = vadd.f32 %v5541, %v5553
  %v5555 = vpop.f32.mrf.mxu0
  %5556 = vdwg.mxu0
  %5557 = vmatpush.bf16.xpose.msra.mxu0 0
  %5558 = vmatpush.bf16.xpose.msra.mxu0 0
  %5559 = vmatpush.bf16.xpose.msra.mxu0 0
  %5560 = vmatpush.bf16.xpose.msra.mxu0 0
  %5561 = vmatpush.bf16.xpose.msra.mxu0 %v4113
  %5562 = vmatpush.bf16.xpose.msra.mxu0 %v3937
  %5563 = vmatpush.bf16.xpose.msra.mxu0 %v3761
  %5564 = vmatpush.bf16.xpose.msra.mxu0 %v3585
  %5565 = vmatmul.bf16.gmra.mxu0 %v1121
  %v5566 = vpop.f32.mrf.mxu0
  %v5567 = vadd.f32 %v5554, %v5566
  %v5568 = vpop.f32.mrf.mxu0
  %5569 = vdwg.mxu0
  %5570 = vmatpush.bf16.xpose.msra.mxu0 0
  %5571 = vmatpush.bf16.xpose.msra.mxu0 0
  %5572 = vmatpush.bf16.xpose.msra.mxu0 0
  %5573 = vmatpush.bf16.xpose.msra.mxu0 0
  %5574 = vmatpush.bf16.xpose.msra.mxu0 %v4114
  %5575 = vmatpush.bf16.xpose.msra.mxu0 %v3938
  %5576 = vmatpush.bf16.xpose.msra.mxu0 %v3762
  %5577 = vmatpush.bf16.xpose.msra.mxu0 %v3586
  %5578 = vmatmul.bf16.gmra.mxu0 %v1122
  %v5579 = vpop.f32.mrf.mxu0
  %v5580 = vadd.f32 %v5567, %v5579
  %v5581 = vpop.f32.mrf.mxu0
  %5582 = vdwg.mxu0
  %5583 = vmatpush.bf16.xpose.msra.mxu0 0
  %5584 = vmatpush.bf16.xpose.msra.mxu0 0
  %5585 = vmatpush.bf16.xpose.msra.mxu0 0
  %5586 = vmatpush.bf16.xpose.msra.mxu0 0
  %5587 = vmatpush.bf16.xpose.msra.mxu0 %v4115
  %5588 = vmatpush.bf16.xpose.msra.mxu0 %v3939
  %5589 = vmatpush.bf16.xpose.msra.mxu0 %v3763
  %5590 = vmatpush.bf16.xpose.msra.mxu0 %v3587
  %5591 = vmatmul.bf16.gmra.mxu0 %v1123
  %v5592 = vpop.f32.mrf.mxu0
  %v5593 = vadd.f32 %v5580, %v5592
  %v5594 = vpop.f32.mrf.mxu0
  %5595 = vdwg.mxu0
  %5596 = vmatpush.bf16.xpose.msra.mxu0 0
  %5597 = vmatpush.bf16.xpose.msra.mxu0 0
  %5598 = vmatpush.bf16.xpose.msra.mxu0 0
  %5599 = vmatpush.bf16.xpose.msra.mxu0 0
  %5600 = vmatpush.bf16.xpose.msra.mxu0 %v4116
  %5601 = vmatpush.bf16.xpose.msra.mxu0 %v3940
  %5602 = vmatpush.bf16.xpose.msra.mxu0 %v3764
  %5603 = vmatpush.bf16.xpose.msra.mxu0 %v3588
  %5604 = vmatmul.bf16.gmra.mxu0 %v1124
  %v5605 = vpop.f32.mrf.mxu0
  %v5606 = vadd.f32 %v5593, %v5605
  %v5607 = vpop.f32.mrf.mxu0
  %5608 = vdwg.mxu0
  %5609 = vmatpush.bf16.xpose.msra.mxu0 0
  %5610 = vmatpush.bf16.xpose.msra.mxu0 0
  %5611 = vmatpush.bf16.xpose.msra.mxu0 0
  %5612 = vmatpush.bf16.xpose.msra.mxu0 0
  %5613 = vmatpush.bf16.xpose.msra.mxu0 %v4117
  %5614 = vmatpush.bf16.xpose.msra.mxu0 %v3941
  %5615 = vmatpush.bf16.xpose.msra.mxu0 %v3765
  %5616 = vmatpush.bf16.xpose.msra.mxu0 %v3589
  %5617 = vmatmul.bf16.gmra.mxu0 %v1125
  %v5618 = vpop.f32.mrf.mxu0
  %v5619 = vadd.f32 %v5606, %v5618
  %v5620 = vpop.f32.mrf.mxu0
  %5621 = vdwg.mxu0
  %5622 = vmatpush.bf16.xpose.msra.mxu0 0
  %5623 = vmatpush.bf16.xpose.msra.mxu0 0
  %5624 = vmatpush.bf16.xpose.msra.mxu0 0
  %5625 = vmatpush.bf16.xpose.msra.mxu0 0
  %5626 = vmatpush.bf16.xpose.msra.mxu0 %v4118
  %5627 = vmatpush.bf16.xpose.msra.mxu0 %v3942
  %5628 = vmatpush.bf16.xpose.msra.mxu0 %v3766
  %5629 = vmatpush.bf16.xpose.msra.mxu0 %v3590
  %5630 = vmatmul.bf16.gmra.mxu0 %v1126
  %v5631 = vpop.f32.mrf.mxu0
  %v5632 = vadd.f32 %v5619, %v5631
  %v5633 = vpop.f32.mrf.mxu0
  %5634 = vdwg.mxu0
  %5635 = vmatpush.bf16.xpose.msra.mxu0 0
  %5636 = vmatpush.bf16.xpose.msra.mxu0 0
  %5637 = vmatpush.bf16.xpose.msra.mxu0 0
  %5638 = vmatpush.bf16.xpose.msra.mxu0 0
  %5639 = vmatpush.bf16.xpose.msra.mxu0 %v4119
  %5640 = vmatpush.bf16.xpose.msra.mxu0 %v3943
  %5641 = vmatpush.bf16.xpose.msra.mxu0 %v3767
  %5642 = vmatpush.bf16.xpose.msra.mxu0 %v3591
  %5643 = vmatmul.bf16.gmra.mxu0 %v1127
  %v5644 = vpop.f32.mrf.mxu0
  %v5645 = vadd.f32 %v5632, %v5644
  %v5646 = vpop.f32.mrf.mxu0
  %5647 = vdwg.mxu0
  %5648 = vmatpush.bf16.xpose.msra.mxu0 0
  %5649 = vmatpush.bf16.xpose.msra.mxu0 0
  %5650 = vmatpush.bf16.xpose.msra.mxu0 0
  %5651 = vmatpush.bf16.xpose.msra.mxu0 0
  %5652 = vmatpush.bf16.xpose.msra.mxu0 %v4120
  %5653 = vmatpush.bf16.xpose.msra.mxu0 %v3944
  %5654 = vmatpush.bf16.xpose.msra.mxu0 %v3768
  %5655 = vmatpush.bf16.xpose.msra.mxu0 %v3592
  %5656 = vmatmul.bf16.gmra.mxu0 %v1128
  %v5657 = vpop.f32.mrf.mxu0
  %v5658 = vadd.f32 %v5645, %v5657
  %v5659 = vpop.f32.mrf.mxu0
  %5660 = vdwg.mxu0
  %5661 = vmatpush.bf16.xpose.msra.mxu0 0
  %5662 = vmatpush.bf16.xpose.msra.mxu0 0
  %5663 = vmatpush.bf16.xpose.msra.mxu0 0
  %5664 = vmatpush.bf16.xpose.msra.mxu0 0
  %5665 = vmatpush.bf16.xpose.msra.mxu0 %v4121
  %5666 = vmatpush.bf16.xpose.msra.mxu0 %v3945
  %5667 = vmatpush.bf16.xpose.msra.mxu0 %v3769
  %5668 = vmatpush.bf16.xpose.msra.mxu0 %v3593
  %5669 = vmatmul.bf16.gmra.mxu0 %v1129
  %v5670 = vpop.f32.mrf.mxu0
  %v5671 = vadd.f32 %v5658, %v5670
  %v5672 = vpop.f32.mrf.mxu0
  %5673 = vdwg.mxu0
  %5674 = vmatpush.bf16.xpose.msra.mxu0 0
  %5675 = vmatpush.bf16.xpose.msra.mxu0 0
  %5676 = vmatpush.bf16.xpose.msra.mxu0 0
  %5677 = vmatpush.bf16.xpose.msra.mxu0 0
  %5678 = vmatpush.bf16.xpose.msra.mxu0 %v4122
  %5679 = vmatpush.bf16.xpose.msra.mxu0 %v3946
  %5680 = vmatpush.bf16.xpose.msra.mxu0 %v3770
  %5681 = vmatpush.bf16.xpose.msra.mxu0 %v3594
  %5682 = vmatmul.bf16.gmra.mxu0 %v1130
  %v5683 = vpop.f32.mrf.mxu0
  %v5684 = vadd.f32 %v5671, %v5683
  %v5685 = vpop.f32.mrf.mxu0
  %5686 = vdwg.mxu0
  %5687 = vmatpush.bf16.xpose.msra.mxu0 0
  %5688 = vmatpush.bf16.xpose.msra.mxu0 0
  %5689 = vmatpush.bf16.xpose.msra.mxu0 0
  %5690 = vmatpush.bf16.xpose.msra.mxu0 0
  %5691 = vmatpush.bf16.xpose.msra.mxu0 %v4123
  %5692 = vmatpush.bf16.xpose.msra.mxu0 %v3947
  %5693 = vmatpush.bf16.xpose.msra.mxu0 %v3771
  %5694 = vmatpush.bf16.xpose.msra.mxu0 %v3595
  %5695 = vmatmul.bf16.gmra.mxu0 %v1131
  %v5696 = vpop.f32.mrf.mxu0
  %v5697 = vadd.f32 %v5684, %v5696
  %v5698 = vpop.f32.mrf.mxu0
  %5699 = vdwg.mxu0
  %5700 = vmatpush.bf16.xpose.msra.mxu0 0
  %5701 = vmatpush.bf16.xpose.msra.mxu0 0
  %5702 = vmatpush.bf16.xpose.msra.mxu0 0
  %5703 = vmatpush.bf16.xpose.msra.mxu0 0
  %5704 = vmatpush.bf16.xpose.msra.mxu0 %v4124
  %5705 = vmatpush.bf16.xpose.msra.mxu0 %v3948
  %5706 = vmatpush.bf16.xpose.msra.mxu0 %v3772
  %5707 = vmatpush.bf16.xpose.msra.mxu0 %v3596
  %5708 = vmatmul.bf16.gmra.mxu0 %v1132
  %v5709 = vpop.f32.mrf.mxu0
  %v5710 = vadd.f32 %v5697, %v5709
  %v5711 = vpop.f32.mrf.mxu0
  %5712 = vdwg.mxu0
  %5713 = vmatpush.bf16.xpose.msra.mxu0 0
  %5714 = vmatpush.bf16.xpose.msra.mxu0 0
  %5715 = vmatpush.bf16.xpose.msra.mxu0 0
  %5716 = vmatpush.bf16.xpose.msra.mxu0 0
  %5717 = vmatpush.bf16.xpose.msra.mxu0 %v4125
  %5718 = vmatpush.bf16.xpose.msra.mxu0 %v3949
  %5719 = vmatpush.bf16.xpose.msra.mxu0 %v3773
  %5720 = vmatpush.bf16.xpose.msra.mxu0 %v3597
  %5721 = vmatmul.bf16.gmra.mxu0 %v1133
  %v5722 = vpop.f32.mrf.mxu0
  %v5723 = vadd.f32 %v5710, %v5722
  %v5724 = vpop.f32.mrf.mxu0
  %5725 = vdwg.mxu0
  %5726 = vmatpush.bf16.xpose.msra.mxu0 0
  %5727 = vmatpush.bf16.xpose.msra.mxu0 0
  %5728 = vmatpush.bf16.xpose.msra.mxu0 0
  %5729 = vmatpush.bf16.xpose.msra.mxu0 0
  %5730 = vmatpush.bf16.xpose.msra.mxu0 %v4126
  %5731 = vmatpush.bf16.xpose.msra.mxu0 %v3950
  %5732 = vmatpush.bf16.xpose.msra.mxu0 %v3774
  %5733 = vmatpush.bf16.xpose.msra.mxu0 %v3598
  %5734 = vmatmul.bf16.gmra.mxu0 %v1134
  %v5735 = vpop.f32.mrf.mxu0
  %v5736 = vadd.f32 %v5723, %v5735
  %v5737 = vpop.f32.mrf.mxu0
  %5738 = vdwg.mxu0
  %5739 = vmatpush.bf16.xpose.msra.mxu0 0
  %5740 = vmatpush.bf16.xpose.msra.mxu0 0
  %5741 = vmatpush.bf16.xpose.msra.mxu0 0
  %5742 = vmatpush.bf16.xpose.msra.mxu0 0
  %5743 = vmatpush.bf16.xpose.msra.mxu0 %v4127
  %5744 = vmatpush.bf16.xpose.msra.mxu0 %v3951
  %5745 = vmatpush.bf16.xpose.msra.mxu0 %v3775
  %5746 = vmatpush.bf16.xpose.msra.mxu0 %v3599
  %5747 = vmatmul.bf16.gmra.mxu0 %v1135
  %v5748 = vpop.f32.mrf.mxu0
  %v5749 = vadd.f32 %v5736, %v5748
  %v5750 = vpop.f32.mrf.mxu0
  %5751 = vdwg.mxu0
  %5752 = vmatpush.bf16.xpose.msra.mxu0 0
  %5753 = vmatpush.bf16.xpose.msra.mxu0 0
  %5754 = vmatpush.bf16.xpose.msra.mxu0 0
  %5755 = vmatpush.bf16.xpose.msra.mxu0 0
  %5756 = vmatpush.bf16.xpose.msra.mxu0 %v4128
  %5757 = vmatpush.bf16.xpose.msra.mxu0 %v3952
  %5758 = vmatpush.bf16.xpose.msra.mxu0 %v3776
  %5759 = vmatpush.bf16.xpose.msra.mxu0 %v3600
  %5760 = vmatmul.bf16.gmra.mxu0 %v1136
  %v5761 = vpop.f32.mrf.mxu0
  %v5762 = vadd.f32 %v5749, %v5761
  %v5763 = vpop.f32.mrf.mxu0
  %5764 = vdwg.mxu0
  %5765 = vmatpush.bf16.xpose.msra.mxu0 0
  %5766 = vmatpush.bf16.xpose.msra.mxu0 0
  %5767 = vmatpush.bf16.xpose.msra.mxu0 0
  %5768 = vmatpush.bf16.xpose.msra.mxu0 0
  %5769 = vmatpush.bf16.xpose.msra.mxu0 %v4129
  %5770 = vmatpush.bf16.xpose.msra.mxu0 %v3953
  %5771 = vmatpush.bf16.xpose.msra.mxu0 %v3777
  %5772 = vmatpush.bf16.xpose.msra.mxu0 %v3601
  %5773 = vmatmul.bf16.gmra.mxu0 %v1137
  %v5774 = vpop.f32.mrf.mxu0
  %v5775 = vadd.f32 %v5762, %v5774
  %v5776 = vpop.f32.mrf.mxu0
  %5777 = vdwg.mxu0
  %5778 = vmatpush.bf16.xpose.msra.mxu0 0
  %5779 = vmatpush.bf16.xpose.msra.mxu0 0
  %5780 = vmatpush.bf16.xpose.msra.mxu0 0
  %5781 = vmatpush.bf16.xpose.msra.mxu0 0
  %5782 = vmatpush.bf16.xpose.msra.mxu0 %v4130
  %5783 = vmatpush.bf16.xpose.msra.mxu0 %v3954
  %5784 = vmatpush.bf16.xpose.msra.mxu0 %v3778
  %5785 = vmatpush.bf16.xpose.msra.mxu0 %v3602
  %5786 = vmatmul.bf16.gmra.mxu0 %v1138
  %v5787 = vpop.f32.mrf.mxu0
  %v5788 = vadd.f32 %v5775, %v5787
  %v5789 = vpop.f32.mrf.mxu0
  %5790 = vdwg.mxu0
  %5791 = vmatpush.bf16.xpose.msra.mxu0 0
  %5792 = vmatpush.bf16.xpose.msra.mxu0 0
  %5793 = vmatpush.bf16.xpose.msra.mxu0 0
  %5794 = vmatpush.bf16.xpose.msra.mxu0 0
  %5795 = vmatpush.bf16.xpose.msra.mxu0 %v4131
  %5796 = vmatpush.bf16.xpose.msra.mxu0 %v3955
  %5797 = vmatpush.bf16.xpose.msra.mxu0 %v3779
  %5798 = vmatpush.bf16.xpose.msra.mxu0 %v3603
  %5799 = vmatmul.bf16.gmra.mxu0 %v1139
  %v5800 = vpop.f32.mrf.mxu0
  %v5801 = vadd.f32 %v5788, %v5800
  %v5802 = vpop.f32.mrf.mxu0
  %5803 = vdwg.mxu0
  %5804 = vmatpush.bf16.xpose.msra.mxu0 0
  %5805 = vmatpush.bf16.xpose.msra.mxu0 0
  %5806 = vmatpush.bf16.xpose.msra.mxu0 0
  %5807 = vmatpush.bf16.xpose.msra.mxu0 0
  %5808 = vmatpush.bf16.xpose.msra.mxu0 %v4132
  %5809 = vmatpush.bf16.xpose.msra.mxu0 %v3956
  %5810 = vmatpush.bf16.xpose.msra.mxu0 %v3780
  %5811 = vmatpush.bf16.xpose.msra.mxu0 %v3604
  %5812 = vmatmul.bf16.gmra.mxu0 %v1140
  %v5813 = vpop.f32.mrf.mxu0
  %v5814 = vadd.f32 %v5801, %v5813
  %v5815 = vpop.f32.mrf.mxu0
  %5816 = vdwg.mxu0
  %5817 = vmatpush.bf16.xpose.msra.mxu0 0
  %5818 = vmatpush.bf16.xpose.msra.mxu0 0
  %5819 = vmatpush.bf16.xpose.msra.mxu0 0
  %5820 = vmatpush.bf16.xpose.msra.mxu0 0
  %5821 = vmatpush.bf16.xpose.msra.mxu0 %v4133
  %5822 = vmatpush.bf16.xpose.msra.mxu0 %v3957
  %5823 = vmatpush.bf16.xpose.msra.mxu0 %v3781
  %5824 = vmatpush.bf16.xpose.msra.mxu0 %v3605
  %5825 = vmatmul.bf16.gmra.mxu0 %v1141
  %v5826 = vpop.f32.mrf.mxu0
  %v5827 = vadd.f32 %v5814, %v5826
  %v5828 = vpop.f32.mrf.mxu0
  %5829 = vdwg.mxu0
  %5830 = vmatpush.bf16.xpose.msra.mxu0 0
  %5831 = vmatpush.bf16.xpose.msra.mxu0 0
  %5832 = vmatpush.bf16.xpose.msra.mxu0 0
  %5833 = vmatpush.bf16.xpose.msra.mxu0 0
  %5834 = vmatpush.bf16.xpose.msra.mxu0 %v4134
  %5835 = vmatpush.bf16.xpose.msra.mxu0 %v3958
  %5836 = vmatpush.bf16.xpose.msra.mxu0 %v3782
  %5837 = vmatpush.bf16.xpose.msra.mxu0 %v3606
  %5838 = vmatmul.bf16.gmra.mxu0 %v1142
  %v5839 = vpop.f32.mrf.mxu0
  %v5840 = vadd.f32 %v5827, %v5839
  %v5841 = vpop.f32.mrf.mxu0
  %5842 = vdwg.mxu0
  %5843 = vmatpush.bf16.xpose.msra.mxu0 0
  %5844 = vmatpush.bf16.xpose.msra.mxu0 0
  %5845 = vmatpush.bf16.xpose.msra.mxu0 0
  %5846 = vmatpush.bf16.xpose.msra.mxu0 0
  %5847 = vmatpush.bf16.xpose.msra.mxu0 %v4135
  %5848 = vmatpush.bf16.xpose.msra.mxu0 %v3959
  %5849 = vmatpush.bf16.xpose.msra.mxu0 %v3783
  %5850 = vmatpush.bf16.xpose.msra.mxu0 %v3607
  %5851 = vmatmul.bf16.gmra.mxu0 %v1143
  %v5852 = vpop.f32.mrf.mxu0
  %v5853 = vadd.f32 %v5840, %v5852
  %v5854 = vpop.f32.mrf.mxu0
  %5855 = vdwg.mxu0
  %5856 = vmatpush.bf16.xpose.msra.mxu0 0
  %5857 = vmatpush.bf16.xpose.msra.mxu0 0
  %5858 = vmatpush.bf16.xpose.msra.mxu0 0
  %5859 = vmatpush.bf16.xpose.msra.mxu0 0
  %5860 = vmatpush.bf16.xpose.msra.mxu0 %v4136
  %5861 = vmatpush.bf16.xpose.msra.mxu0 %v3960
  %5862 = vmatpush.bf16.xpose.msra.mxu0 %v3784
  %5863 = vmatpush.bf16.xpose.msra.mxu0 %v3608
  %5864 = vmatmul.bf16.gmra.mxu0 %v1144
  %v5865 = vpop.f32.mrf.mxu0
  %v5866 = vadd.f32 %v5853, %v5865
  %v5867 = vpop.f32.mrf.mxu0
  %5868 = vdwg.mxu0
  %5869 = vmatpush.bf16.xpose.msra.mxu0 0
  %5870 = vmatpush.bf16.xpose.msra.mxu0 0
  %5871 = vmatpush.bf16.xpose.msra.mxu0 0
  %5872 = vmatpush.bf16.xpose.msra.mxu0 0
  %5873 = vmatpush.bf16.xpose.msra.mxu0 %v4137
  %5874 = vmatpush.bf16.xpose.msra.mxu0 %v3961
  %5875 = vmatpush.bf16.xpose.msra.mxu0 %v3785
  %5876 = vmatpush.bf16.xpose.msra.mxu0 %v3609
  %5877 = vmatmul.bf16.gmra.mxu0 %v1145
  %v5878 = vpop.f32.mrf.mxu0
  %v5879 = vadd.f32 %v5866, %v5878
  %v5880 = vpop.f32.mrf.mxu0
  %5881 = vdwg.mxu0
  %5882 = vmatpush.bf16.xpose.msra.mxu0 0
  %5883 = vmatpush.bf16.xpose.msra.mxu0 0
  %5884 = vmatpush.bf16.xpose.msra.mxu0 0
  %5885 = vmatpush.bf16.xpose.msra.mxu0 0
  %5886 = vmatpush.bf16.xpose.msra.mxu0 %v4138
  %5887 = vmatpush.bf16.xpose.msra.mxu0 %v3962
  %5888 = vmatpush.bf16.xpose.msra.mxu0 %v3786
  %5889 = vmatpush.bf16.xpose.msra.mxu0 %v3610
  %5890 = vmatmul.bf16.gmra.mxu0 %v1146
  %v5891 = vpop.f32.mrf.mxu0
  %v5892 = vadd.f32 %v5879, %v5891
  %v5893 = vpop.f32.mrf.mxu0
  %5894 = vdwg.mxu0
  %5895 = vmatpush.bf16.xpose.msra.mxu0 0
  %5896 = vmatpush.bf16.xpose.msra.mxu0 0
  %5897 = vmatpush.bf16.xpose.msra.mxu0 0
  %5898 = vmatpush.bf16.xpose.msra.mxu0 0
  %5899 = vmatpush.bf16.xpose.msra.mxu0 %v4139
  %5900 = vmatpush.bf16.xpose.msra.mxu0 %v3963
  %5901 = vmatpush.bf16.xpose.msra.mxu0 %v3787
  %5902 = vmatpush.bf16.xpose.msra.mxu0 %v3611
  %5903 = vmatmul.bf16.gmra.mxu0 %v1147
  %v5904 = vpop.f32.mrf.mxu0
  %v5905 = vadd.f32 %v5892, %v5904
  %v5906 = vpop.f32.mrf.mxu0
  %5907 = vdwg.mxu0
  %5908 = vmatpush.bf16.xpose.msra.mxu0 0
  %5909 = vmatpush.bf16.xpose.msra.mxu0 0
  %5910 = vmatpush.bf16.xpose.msra.mxu0 0
  %5911 = vmatpush.bf16.xpose.msra.mxu0 0
  %5912 = vmatpush.bf16.xpose.msra.mxu0 %v4140
  %5913 = vmatpush.bf16.xpose.msra.mxu0 %v3964
  %5914 = vmatpush.bf16.xpose.msra.mxu0 %v3788
  %5915 = vmatpush.bf16.xpose.msra.mxu0 %v3612
  %5916 = vmatmul.bf16.gmra.mxu0 %v1148
  %v5917 = vpop.f32.mrf.mxu0
  %v5918 = vadd.f32 %v5905, %v5917
  %v5919 = vpop.f32.mrf.mxu0
  %5920 = vdwg.mxu0
  %5921 = vmatpush.bf16.xpose.msra.mxu0 0
  %5922 = vmatpush.bf16.xpose.msra.mxu0 0
  %5923 = vmatpush.bf16.xpose.msra.mxu0 0
  %5924 = vmatpush.bf16.xpose.msra.mxu0 0
  %5925 = vmatpush.bf16.xpose.msra.mxu0 %v4141
  %5926 = vmatpush.bf16.xpose.msra.mxu0 %v3965
  %5927 = vmatpush.bf16.xpose.msra.mxu0 %v3789
  %5928 = vmatpush.bf16.xpose.msra.mxu0 %v3613
  %5929 = vmatmul.bf16.gmra.mxu0 %v1149
  %v5930 = vpop.f32.mrf.mxu0
  %v5931 = vadd.f32 %v5918, %v5930
  %v5932 = vpop.f32.mrf.mxu0
  %5933 = vdwg.mxu0
  %5934 = vmatpush.bf16.xpose.msra.mxu0 0
  %5935 = vmatpush.bf16.xpose.msra.mxu0 0
  %5936 = vmatpush.bf16.xpose.msra.mxu0 0
  %5937 = vmatpush.bf16.xpose.msra.mxu0 0
  %5938 = vmatpush.bf16.xpose.msra.mxu0 %v4142
  %5939 = vmatpush.bf16.xpose.msra.mxu0 %v3966
  %5940 = vmatpush.bf16.xpose.msra.mxu0 %v3790
  %5941 = vmatpush.bf16.xpose.msra.mxu0 %v3614
  %5942 = vmatmul.bf16.gmra.mxu0 %v1150
  %v5943 = vpop.f32.mrf.mxu0
  %v5944 = vadd.f32 %v5931, %v5943
  %v5945 = vpop.f32.mrf.mxu0
  %5946 = vdwg.mxu0
  %5947 = vmatpush.bf16.xpose.msra.mxu0 0
  %5948 = vmatpush.bf16.xpose.msra.mxu0 0
  %5949 = vmatpush.bf16.xpose.msra.mxu0 0
  %5950 = vmatpush.bf16.xpose.msra.mxu0 0
  %5951 = vmatpush.bf16.xpose.msra.mxu0 %v4143
  %5952 = vmatpush.bf16.xpose.msra.mxu0 %v3967
  %5953 = vmatpush.bf16.xpose.msra.mxu0 %v3791
  %5954 = vmatpush.bf16.xpose.msra.mxu0 %v3615
  %5955 = vmatmul.bf16.gmra.mxu0 %v1151
  %v5956 = vpop.f32.mrf.mxu0
  %v5957 = vadd.f32 %v5944, %v5956
  %v5958 = vpop.f32.mrf.mxu0
  %5959 = vdwg.mxu0
  %5960 = vmatpush.bf16.xpose.msra.mxu0 0
  %5961 = vmatpush.bf16.xpose.msra.mxu0 0
  %5962 = vmatpush.bf16.xpose.msra.mxu0 0
  %5963 = vmatpush.bf16.xpose.msra.mxu0 0
  %5964 = vmatpush.bf16.xpose.msra.mxu0 %v4144
  %5965 = vmatpush.bf16.xpose.msra.mxu0 %v3968
  %5966 = vmatpush.bf16.xpose.msra.mxu0 %v3792
  %5967 = vmatpush.bf16.xpose.msra.mxu0 %v3616
  %5968 = vmatmul.bf16.gmra.mxu0 %v1152
  %v5969 = vpop.f32.mrf.mxu0
  %v5970 = vadd.f32 %v5957, %v5969
  %v5971 = vpop.f32.mrf.mxu0
  %5972 = vdwg.mxu0
  %5973 = vmatpush.bf16.xpose.msra.mxu0 0
  %5974 = vmatpush.bf16.xpose.msra.mxu0 0
  %5975 = vmatpush.bf16.xpose.msra.mxu0 0
  %5976 = vmatpush.bf16.xpose.msra.mxu0 0
  %5977 = vmatpush.bf16.xpose.msra.mxu0 %v4145
  %5978 = vmatpush.bf16.xpose.msra.mxu0 %v3969
  %5979 = vmatpush.bf16.xpose.msra.mxu0 %v3793
  %5980 = vmatpush.bf16.xpose.msra.mxu0 %v3617
  %5981 = vmatmul.bf16.gmra.mxu0 %v1153
  %v5982 = vpop.f32.mrf.mxu0
  %v5983 = vadd.f32 %v5970, %v5982
  %v5984 = vpop.f32.mrf.mxu0
  %5985 = vdwg.mxu0
  %5986 = vmatpush.bf16.xpose.msra.mxu0 0
  %5987 = vmatpush.bf16.xpose.msra.mxu0 0
  %5988 = vmatpush.bf16.xpose.msra.mxu0 0
  %5989 = vmatpush.bf16.xpose.msra.mxu0 0
  %5990 = vmatpush.bf16.xpose.msra.mxu0 %v4146
  %5991 = vmatpush.bf16.xpose.msra.mxu0 %v3970
  %5992 = vmatpush.bf16.xpose.msra.mxu0 %v3794
  %5993 = vmatpush.bf16.xpose.msra.mxu0 %v3618
  %5994 = vmatmul.bf16.gmra.mxu0 %v1154
  %v5995 = vpop.f32.mrf.mxu0
  %v5996 = vadd.f32 %v5983, %v5995
  %v5997 = vpop.f32.mrf.mxu0
  %5998 = vdwg.mxu0
  %5999 = vmatpush.bf16.xpose.msra.mxu0 0
  %6000 = vmatpush.bf16.xpose.msra.mxu0 0
  %6001 = vmatpush.bf16.xpose.msra.mxu0 0
  %6002 = vmatpush.bf16.xpose.msra.mxu0 0
  %6003 = vmatpush.bf16.xpose.msra.mxu0 %v4147
  %6004 = vmatpush.bf16.xpose.msra.mxu0 %v3971
  %6005 = vmatpush.bf16.xpose.msra.mxu0 %v3795
  %6006 = vmatpush.bf16.xpose.msra.mxu0 %v3619
  %6007 = vmatmul.bf16.gmra.mxu0 %v1155
  %v6008 = vpop.f32.mrf.mxu0
  %v6009 = vadd.f32 %v5996, %v6008
  %v6010 = vpop.f32.mrf.mxu0
  %6011 = vdwg.mxu0
  %6012 = vmatpush.bf16.xpose.msra.mxu0 0
  %6013 = vmatpush.bf16.xpose.msra.mxu0 0
  %6014 = vmatpush.bf16.xpose.msra.mxu0 0
  %6015 = vmatpush.bf16.xpose.msra.mxu0 0
  %6016 = vmatpush.bf16.xpose.msra.mxu0 %v4148
  %6017 = vmatpush.bf16.xpose.msra.mxu0 %v3972
  %6018 = vmatpush.bf16.xpose.msra.mxu0 %v3796
  %6019 = vmatpush.bf16.xpose.msra.mxu0 %v3620
  %6020 = vmatmul.bf16.gmra.mxu0 %v1156
  %v6021 = vpop.f32.mrf.mxu0
  %v6022 = vadd.f32 %v6009, %v6021
  %v6023 = vpop.f32.mrf.mxu0
  %6024 = vdwg.mxu0
  %6025 = vmatpush.bf16.xpose.msra.mxu0 0
  %6026 = vmatpush.bf16.xpose.msra.mxu0 0
  %6027 = vmatpush.bf16.xpose.msra.mxu0 0
  %6028 = vmatpush.bf16.xpose.msra.mxu0 0
  %6029 = vmatpush.bf16.xpose.msra.mxu0 %v4149
  %6030 = vmatpush.bf16.xpose.msra.mxu0 %v3973
  %6031 = vmatpush.bf16.xpose.msra.mxu0 %v3797
  %6032 = vmatpush.bf16.xpose.msra.mxu0 %v3621
  %6033 = vmatmul.bf16.gmra.mxu0 %v1157
  %v6034 = vpop.f32.mrf.mxu0
  %v6035 = vadd.f32 %v6022, %v6034
  %v6036 = vpop.f32.mrf.mxu0
  %6037 = vdwg.mxu0
  %6038 = vmatpush.bf16.xpose.msra.mxu0 0
  %6039 = vmatpush.bf16.xpose.msra.mxu0 0
  %6040 = vmatpush.bf16.xpose.msra.mxu0 0
  %6041 = vmatpush.bf16.xpose.msra.mxu0 0
  %6042 = vmatpush.bf16.xpose.msra.mxu0 %v4150
  %6043 = vmatpush.bf16.xpose.msra.mxu0 %v3974
  %6044 = vmatpush.bf16.xpose.msra.mxu0 %v3798
  %6045 = vmatpush.bf16.xpose.msra.mxu0 %v3622
  %6046 = vmatmul.bf16.gmra.mxu0 %v1158
  %v6047 = vpop.f32.mrf.mxu0
  %v6048 = vadd.f32 %v6035, %v6047
  %v6049 = vpop.f32.mrf.mxu0
  %6050 = vdwg.mxu0
  %6051 = vmatpush.bf16.xpose.msra.mxu0 0
  %6052 = vmatpush.bf16.xpose.msra.mxu0 0
  %6053 = vmatpush.bf16.xpose.msra.mxu0 0
  %6054 = vmatpush.bf16.xpose.msra.mxu0 0
  %6055 = vmatpush.bf16.xpose.msra.mxu0 %v4151
  %6056 = vmatpush.bf16.xpose.msra.mxu0 %v3975
  %6057 = vmatpush.bf16.xpose.msra.mxu0 %v3799
  %6058 = vmatpush.bf16.xpose.msra.mxu0 %v3623
  %6059 = vmatmul.bf16.gmra.mxu0 %v1159
  %v6060 = vpop.f32.mrf.mxu0
  %v6061 = vadd.f32 %v6048, %v6060
  %v6062 = vpop.f32.mrf.mxu0
  %6063 = vdwg.mxu0
  %6064 = vmatpush.bf16.xpose.msra.mxu0 0
  %6065 = vmatpush.bf16.xpose.msra.mxu0 0
  %6066 = vmatpush.bf16.xpose.msra.mxu0 0
  %6067 = vmatpush.bf16.xpose.msra.mxu0 0
  %6068 = vmatpush.bf16.xpose.msra.mxu0 %v4152
  %6069 = vmatpush.bf16.xpose.msra.mxu0 %v3976
  %6070 = vmatpush.bf16.xpose.msra.mxu0 %v3800
  %6071 = vmatpush.bf16.xpose.msra.mxu0 %v3624
  %6072 = vmatmul.bf16.gmra.mxu0 %v1160
  %v6073 = vpop.f32.mrf.mxu0
  %v6074 = vadd.f32 %v6061, %v6073
  %v6075 = vpop.f32.mrf.mxu0
  %6076 = vdwg.mxu0
  %6077 = vmatpush.bf16.xpose.msra.mxu0 0
  %6078 = vmatpush.bf16.xpose.msra.mxu0 0
  %6079 = vmatpush.bf16.xpose.msra.mxu0 0
  %6080 = vmatpush.bf16.xpose.msra.mxu0 0
  %6081 = vmatpush.bf16.xpose.msra.mxu0 %v4153
  %6082 = vmatpush.bf16.xpose.msra.mxu0 %v3977
  %6083 = vmatpush.bf16.xpose.msra.mxu0 %v3801
  %6084 = vmatpush.bf16.xpose.msra.mxu0 %v3625
  %6085 = vmatmul.bf16.gmra.mxu0 %v1161
  %v6086 = vpop.f32.mrf.mxu0
  %v6087 = vadd.f32 %v6074, %v6086
  %v6088 = vpop.f32.mrf.mxu0
  %6089 = vdwg.mxu0
  %6090 = vmatpush.bf16.xpose.msra.mxu0 0
  %6091 = vmatpush.bf16.xpose.msra.mxu0 0
  %6092 = vmatpush.bf16.xpose.msra.mxu0 0
  %6093 = vmatpush.bf16.xpose.msra.mxu0 0
  %6094 = vmatpush.bf16.xpose.msra.mxu0 %v4154
  %6095 = vmatpush.bf16.xpose.msra.mxu0 %v3978
  %6096 = vmatpush.bf16.xpose.msra.mxu0 %v3802
  %6097 = vmatpush.bf16.xpose.msra.mxu0 %v3626
  %6098 = vmatmul.bf16.gmra.mxu0 %v1162
  %v6099 = vpop.f32.mrf.mxu0
  %v6100 = vadd.f32 %v6087, %v6099
  %v6101 = vpop.f32.mrf.mxu0
  %6102 = vdwg.mxu0
  %6103 = vmatpush.bf16.xpose.msra.mxu0 0
  %6104 = vmatpush.bf16.xpose.msra.mxu0 0
  %6105 = vmatpush.bf16.xpose.msra.mxu0 0
  %6106 = vmatpush.bf16.xpose.msra.mxu0 0
  %6107 = vmatpush.bf16.xpose.msra.mxu0 %v4155
  %6108 = vmatpush.bf16.xpose.msra.mxu0 %v3979
  %6109 = vmatpush.bf16.xpose.msra.mxu0 %v3803
  %6110 = vmatpush.bf16.xpose.msra.mxu0 %v3627
  %6111 = vmatmul.bf16.gmra.mxu0 %v1163
  %v6112 = vpop.f32.mrf.mxu0
  %v6113 = vadd.f32 %v6100, %v6112
  %v6114 = vpop.f32.mrf.mxu0
  %6115 = vdwg.mxu0
  %6116 = vmatpush.bf16.xpose.msra.mxu0 0
  %6117 = vmatpush.bf16.xpose.msra.mxu0 0
  %6118 = vmatpush.bf16.xpose.msra.mxu0 0
  %6119 = vmatpush.bf16.xpose.msra.mxu0 0
  %6120 = vmatpush.bf16.xpose.msra.mxu0 %v4156
  %6121 = vmatpush.bf16.xpose.msra.mxu0 %v3980
  %6122 = vmatpush.bf16.xpose.msra.mxu0 %v3804
  %6123 = vmatpush.bf16.xpose.msra.mxu0 %v3628
  %6124 = vmatmul.bf16.gmra.mxu0 %v1164
  %v6125 = vpop.f32.mrf.mxu0
  %v6126 = vadd.f32 %v6113, %v6125
  %v6127 = vpop.f32.mrf.mxu0
  %6128 = vdwg.mxu0
  %6129 = vmatpush.bf16.xpose.msra.mxu0 0
  %6130 = vmatpush.bf16.xpose.msra.mxu0 0
  %6131 = vmatpush.bf16.xpose.msra.mxu0 0
  %6132 = vmatpush.bf16.xpose.msra.mxu0 0
  %6133 = vmatpush.bf16.xpose.msra.mxu0 %v4157
  %6134 = vmatpush.bf16.xpose.msra.mxu0 %v3981
  %6135 = vmatpush.bf16.xpose.msra.mxu0 %v3805
  %6136 = vmatpush.bf16.xpose.msra.mxu0 %v3629
  %6137 = vmatmul.bf16.gmra.mxu0 %v1165
  %v6138 = vpop.f32.mrf.mxu0
  %v6139 = vadd.f32 %v6126, %v6138
  %v6140 = vpop.f32.mrf.mxu0
  %6141 = vdwg.mxu0
  %6142 = vmatpush.bf16.xpose.msra.mxu0 0
  %6143 = vmatpush.bf16.xpose.msra.mxu0 0
  %6144 = vmatpush.bf16.xpose.msra.mxu0 0
  %6145 = vmatpush.bf16.xpose.msra.mxu0 0
  %6146 = vmatpush.bf16.xpose.msra.mxu0 %v4158
  %6147 = vmatpush.bf16.xpose.msra.mxu0 %v3982
  %6148 = vmatpush.bf16.xpose.msra.mxu0 %v3806
  %6149 = vmatpush.bf16.xpose.msra.mxu0 %v3630
  %6150 = vmatmul.bf16.gmra.mxu0 %v1166
  %v6151 = vpop.f32.mrf.mxu0
  %v6152 = vadd.f32 %v6139, %v6151
  %v6153 = vpop.f32.mrf.mxu0
  %6154 = vdwg.mxu0
  %6155 = vmatpush.bf16.xpose.msra.mxu0 0
  %6156 = vmatpush.bf16.xpose.msra.mxu0 0
  %6157 = vmatpush.bf16.xpose.msra.mxu0 0
  %6158 = vmatpush.bf16.xpose.msra.mxu0 0
  %6159 = vmatpush.bf16.xpose.msra.mxu0 %v4159
  %6160 = vmatpush.bf16.xpose.msra.mxu0 %v3983
  %6161 = vmatpush.bf16.xpose.msra.mxu0 %v3807
  %6162 = vmatpush.bf16.xpose.msra.mxu0 %v3631
  %6163 = vmatmul.bf16.gmra.mxu0 %v1167
  %v6164 = vpop.f32.mrf.mxu0
  %v6165 = vadd.f32 %v6152, %v6164
  %v6166 = vpop.f32.mrf.mxu0
  %6167 = vdwg.mxu0
  %6168 = vmatpush.bf16.xpose.msra.mxu0 0
  %6169 = vmatpush.bf16.xpose.msra.mxu0 0
  %6170 = vmatpush.bf16.xpose.msra.mxu0 0
  %6171 = vmatpush.bf16.xpose.msra.mxu0 0
  %6172 = vmatpush.bf16.xpose.msra.mxu0 %v4160
  %6173 = vmatpush.bf16.xpose.msra.mxu0 %v3984
  %6174 = vmatpush.bf16.xpose.msra.mxu0 %v3808
  %6175 = vmatpush.bf16.xpose.msra.mxu0 %v3632
  %6176 = vmatmul.bf16.gmra.mxu0 %v1168
  %v6177 = vpop.f32.mrf.mxu0
  %v6178 = vadd.f32 %v6165, %v6177
  %v6179 = vpop.f32.mrf.mxu0
  %6180 = vdwg.mxu0
  %6181 = vmatpush.bf16.xpose.msra.mxu0 0
  %6182 = vmatpush.bf16.xpose.msra.mxu0 0
  %6183 = vmatpush.bf16.xpose.msra.mxu0 0
  %6184 = vmatpush.bf16.xpose.msra.mxu0 0
  %6185 = vmatpush.bf16.xpose.msra.mxu0 %v4161
  %6186 = vmatpush.bf16.xpose.msra.mxu0 %v3985
  %6187 = vmatpush.bf16.xpose.msra.mxu0 %v3809
  %6188 = vmatpush.bf16.xpose.msra.mxu0 %v3633
  %6189 = vmatmul.bf16.gmra.mxu0 %v1169
  %v6190 = vpop.f32.mrf.mxu0
  %v6191 = vadd.f32 %v6178, %v6190
  %v6192 = vpop.f32.mrf.mxu0
  %6193 = vdwg.mxu0
  %6194 = vmatpush.bf16.xpose.msra.mxu0 0
  %6195 = vmatpush.bf16.xpose.msra.mxu0 0
  %6196 = vmatpush.bf16.xpose.msra.mxu0 0
  %6197 = vmatpush.bf16.xpose.msra.mxu0 0
  %6198 = vmatpush.bf16.xpose.msra.mxu0 %v4162
  %6199 = vmatpush.bf16.xpose.msra.mxu0 %v3986
  %6200 = vmatpush.bf16.xpose.msra.mxu0 %v3810
  %6201 = vmatpush.bf16.xpose.msra.mxu0 %v3634
  %6202 = vmatmul.bf16.gmra.mxu0 %v1170
  %v6203 = vpop.f32.mrf.mxu0
  %v6204 = vadd.f32 %v6191, %v6203
  %v6205 = vpop.f32.mrf.mxu0
  %6206 = vdwg.mxu0
  %6207 = vmatpush.bf16.xpose.msra.mxu0 0
  %6208 = vmatpush.bf16.xpose.msra.mxu0 0
  %6209 = vmatpush.bf16.xpose.msra.mxu0 0
  %6210 = vmatpush.bf16.xpose.msra.mxu0 0
  %6211 = vmatpush.bf16.xpose.msra.mxu0 %v4163
  %6212 = vmatpush.bf16.xpose.msra.mxu0 %v3987
  %6213 = vmatpush.bf16.xpose.msra.mxu0 %v3811
  %6214 = vmatpush.bf16.xpose.msra.mxu0 %v3635
  %6215 = vmatmul.bf16.gmra.mxu0 %v1171
  %v6216 = vpop.f32.mrf.mxu0
  %v6217 = vadd.f32 %v6204, %v6216
  %v6218 = vpop.f32.mrf.mxu0
  %6219 = vdwg.mxu0
  %6220 = vmatpush.bf16.xpose.msra.mxu0 0
  %6221 = vmatpush.bf16.xpose.msra.mxu0 0
  %6222 = vmatpush.bf16.xpose.msra.mxu0 0
  %6223 = vmatpush.bf16.xpose.msra.mxu0 0
  %6224 = vmatpush.bf16.xpose.msra.mxu0 %v4164
  %6225 = vmatpush.bf16.xpose.msra.mxu0 %v3988
  %6226 = vmatpush.bf16.xpose.msra.mxu0 %v3812
  %6227 = vmatpush.bf16.xpose.msra.mxu0 %v3636
  %6228 = vmatmul.bf16.gmra.mxu0 %v1172
  %v6229 = vpop.f32.mrf.mxu0
  %v6230 = vadd.f32 %v6217, %v6229
  %v6231 = vpop.f32.mrf.mxu0
  %6232 = vdwg.mxu0
  %6233 = vmatpush.bf16.xpose.msra.mxu0 0
  %6234 = vmatpush.bf16.xpose.msra.mxu0 0
  %6235 = vmatpush.bf16.xpose.msra.mxu0 0
  %6236 = vmatpush.bf16.xpose.msra.mxu0 0
  %6237 = vmatpush.bf16.xpose.msra.mxu0 %v4165
  %6238 = vmatpush.bf16.xpose.msra.mxu0 %v3989
  %6239 = vmatpush.bf16.xpose.msra.mxu0 %v3813
  %6240 = vmatpush.bf16.xpose.msra.mxu0 %v3637
  %6241 = vmatmul.bf16.gmra.mxu0 %v1173
  %v6242 = vpop.f32.mrf.mxu0
  %v6243 = vadd.f32 %v6230, %v6242
  %v6244 = vpop.f32.mrf.mxu0
  %6245 = vdwg.mxu0
  %6246 = vmatpush.bf16.xpose.msra.mxu0 0
  %6247 = vmatpush.bf16.xpose.msra.mxu0 0
  %6248 = vmatpush.bf16.xpose.msra.mxu0 0
  %6249 = vmatpush.bf16.xpose.msra.mxu0 0
  %6250 = vmatpush.bf16.xpose.msra.mxu0 %v4166
  %6251 = vmatpush.bf16.xpose.msra.mxu0 %v3990
  %6252 = vmatpush.bf16.xpose.msra.mxu0 %v3814
  %6253 = vmatpush.bf16.xpose.msra.mxu0 %v3638
  %6254 = vmatmul.bf16.gmra.mxu0 %v1174
  %v6255 = vpop.f32.mrf.mxu0
  %v6256 = vadd.f32 %v6243, %v6255
  %v6257 = vpop.f32.mrf.mxu0
  %6258 = vdwg.mxu0
  %6259 = vmatpush.bf16.xpose.msra.mxu0 0
  %6260 = vmatpush.bf16.xpose.msra.mxu0 0
  %6261 = vmatpush.bf16.xpose.msra.mxu0 0
  %6262 = vmatpush.bf16.xpose.msra.mxu0 0
  %6263 = vmatpush.bf16.xpose.msra.mxu0 %v4167
  %6264 = vmatpush.bf16.xpose.msra.mxu0 %v3991
  %6265 = vmatpush.bf16.xpose.msra.mxu0 %v3815
  %6266 = vmatpush.bf16.xpose.msra.mxu0 %v3639
  %6267 = vmatmul.bf16.gmra.mxu0 %v1175
  %v6268 = vpop.f32.mrf.mxu0
  %v6269 = vadd.f32 %v6256, %v6268
  %v6270 = vpop.f32.mrf.mxu0
  %6271 = vdwg.mxu0
  %6272 = vmatpush.bf16.xpose.msra.mxu0 0
  %6273 = vmatpush.bf16.xpose.msra.mxu0 0
  %6274 = vmatpush.bf16.xpose.msra.mxu0 0
  %6275 = vmatpush.bf16.xpose.msra.mxu0 0
  %6276 = vmatpush.bf16.xpose.msra.mxu0 %v4168
  %6277 = vmatpush.bf16.xpose.msra.mxu0 %v3992
  %6278 = vmatpush.bf16.xpose.msra.mxu0 %v3816
  %6279 = vmatpush.bf16.xpose.msra.mxu0 %v3640
  %6280 = vmatmul.bf16.gmra.mxu0 %v1176
  %v6281 = vpop.f32.mrf.mxu0
  %v6282 = vadd.f32 %v6269, %v6281
  %v6283 = vpop.f32.mrf.mxu0
  %6284 = vdwg.mxu0
  %6285 = vmatpush.bf16.xpose.msra.mxu0 0
  %6286 = vmatpush.bf16.xpose.msra.mxu0 0
  %6287 = vmatpush.bf16.xpose.msra.mxu0 0
  %6288 = vmatpush.bf16.xpose.msra.mxu0 0
  %6289 = vmatpush.bf16.xpose.msra.mxu0 %v4169
  %6290 = vmatpush.bf16.xpose.msra.mxu0 %v3993
  %6291 = vmatpush.bf16.xpose.msra.mxu0 %v3817
  %6292 = vmatpush.bf16.xpose.msra.mxu0 %v3641
  %6293 = vmatmul.bf16.gmra.mxu0 %v1177
  %v6294 = vpop.f32.mrf.mxu0
  %v6295 = vadd.f32 %v6282, %v6294
  %v6296 = vpop.f32.mrf.mxu0
  %6297 = vdwg.mxu0
  %6298 = vmatpush.bf16.xpose.msra.mxu0 0
  %6299 = vmatpush.bf16.xpose.msra.mxu0 0
  %6300 = vmatpush.bf16.xpose.msra.mxu0 0
  %6301 = vmatpush.bf16.xpose.msra.mxu0 0
  %6302 = vmatpush.bf16.xpose.msra.mxu0 %v4170
  %6303 = vmatpush.bf16.xpose.msra.mxu0 %v3994
  %6304 = vmatpush.bf16.xpose.msra.mxu0 %v3818
  %6305 = vmatpush.bf16.xpose.msra.mxu0 %v3642
  %6306 = vmatmul.bf16.gmra.mxu0 %v1178
  %v6307 = vpop.f32.mrf.mxu0
  %v6308 = vadd.f32 %v6295, %v6307
  %v6309 = vpop.f32.mrf.mxu0
  %6310 = vdwg.mxu0
  %6311 = vmatpush.bf16.xpose.msra.mxu0 0
  %6312 = vmatpush.bf16.xpose.msra.mxu0 0
  %6313 = vmatpush.bf16.xpose.msra.mxu0 0
  %6314 = vmatpush.bf16.xpose.msra.mxu0 0
  %6315 = vmatpush.bf16.xpose.msra.mxu0 %v4171
  %6316 = vmatpush.bf16.xpose.msra.mxu0 %v3995
  %6317 = vmatpush.bf16.xpose.msra.mxu0 %v3819
  %6318 = vmatpush.bf16.xpose.msra.mxu0 %v3643
  %6319 = vmatmul.bf16.gmra.mxu0 %v1179
  %v6320 = vpop.f32.mrf.mxu0
  %v6321 = vadd.f32 %v6308, %v6320
  %v6322 = vpop.f32.mrf.mxu0
  %6323 = vdwg.mxu0
  %6324 = vmatpush.bf16.xpose.msra.mxu0 0
  %6325 = vmatpush.bf16.xpose.msra.mxu0 0
  %6326 = vmatpush.bf16.xpose.msra.mxu0 0
  %6327 = vmatpush.bf16.xpose.msra.mxu0 0
  %6328 = vmatpush.bf16.xpose.msra.mxu0 %v4172
  %6329 = vmatpush.bf16.xpose.msra.mxu0 %v3996
  %6330 = vmatpush.bf16.xpose.msra.mxu0 %v3820
  %6331 = vmatpush.bf16.xpose.msra.mxu0 %v3644
  %6332 = vmatmul.bf16.gmra.mxu0 %v1180
  %v6333 = vpop.f32.mrf.mxu0
  %v6334 = vadd.f32 %v6321, %v6333
  %v6335 = vpop.f32.mrf.mxu0
  %6336 = vdwg.mxu0
  %6337 = vmatpush.bf16.xpose.msra.mxu0 0
  %6338 = vmatpush.bf16.xpose.msra.mxu0 0
  %6339 = vmatpush.bf16.xpose.msra.mxu0 0
  %6340 = vmatpush.bf16.xpose.msra.mxu0 0
  %6341 = vmatpush.bf16.xpose.msra.mxu0 %v4173
  %6342 = vmatpush.bf16.xpose.msra.mxu0 %v3997
  %6343 = vmatpush.bf16.xpose.msra.mxu0 %v3821
  %6344 = vmatpush.bf16.xpose.msra.mxu0 %v3645
  %6345 = vmatmul.bf16.gmra.mxu0 %v1181
  %v6346 = vpop.f32.mrf.mxu0
  %v6347 = vadd.f32 %v6334, %v6346
  %v6348 = vpop.f32.mrf.mxu0
  %6349 = vdwg.mxu0
  %6350 = vmatpush.bf16.xpose.msra.mxu0 0
  %6351 = vmatpush.bf16.xpose.msra.mxu0 0
  %6352 = vmatpush.bf16.xpose.msra.mxu0 0
  %6353 = vmatpush.bf16.xpose.msra.mxu0 0
  %6354 = vmatpush.bf16.xpose.msra.mxu0 %v4174
  %6355 = vmatpush.bf16.xpose.msra.mxu0 %v3998
  %6356 = vmatpush.bf16.xpose.msra.mxu0 %v3822
  %6357 = vmatpush.bf16.xpose.msra.mxu0 %v3646
  %6358 = vmatmul.bf16.gmra.mxu0 %v1182
  %v6359 = vpop.f32.mrf.mxu0
  %v6360 = vadd.f32 %v6347, %v6359
  %v6361 = vpop.f32.mrf.mxu0
  %6362 = vdwg.mxu0
  %6363 = vmatpush.bf16.xpose.msra.mxu0 0
  %6364 = vmatpush.bf16.xpose.msra.mxu0 0
  %6365 = vmatpush.bf16.xpose.msra.mxu0 0
  %6366 = vmatpush.bf16.xpose.msra.mxu0 0
  %6367 = vmatpush.bf16.xpose.msra.mxu0 %v4175
  %6368 = vmatpush.bf16.xpose.msra.mxu0 %v3999
  %6369 = vmatpush.bf16.xpose.msra.mxu0 %v3823
  %6370 = vmatpush.bf16.xpose.msra.mxu0 %v3647
  %6371 = vmatmul.bf16.gmra.mxu0 %v1183
  %v6372 = vpop.f32.mrf.mxu0
  %v6373 = vadd.f32 %v6360, %v6372
  %v6374 = vpop.f32.mrf.mxu0
  %6375 = vdwg.mxu0
  %6376 = vmatpush.bf16.xpose.msra.mxu0 0
  %6377 = vmatpush.bf16.xpose.msra.mxu0 0
  %6378 = vmatpush.bf16.xpose.msra.mxu0 0
  %6379 = vmatpush.bf16.xpose.msra.mxu0 0
  %6380 = vmatpush.bf16.xpose.msra.mxu0 %v4176
  %6381 = vmatpush.bf16.xpose.msra.mxu0 %v4000
  %6382 = vmatpush.bf16.xpose.msra.mxu0 %v3824
  %6383 = vmatpush.bf16.xpose.msra.mxu0 %v3648
  %6384 = vmatmul.bf16.gmra.mxu0 %v1184
  %v6385 = vpop.f32.mrf.mxu0
  %v6386 = vadd.f32 %v6373, %v6385
  %v6387 = vpop.f32.mrf.mxu0
  %6388 = vdwg.mxu0
  %6389 = vmatpush.bf16.xpose.msra.mxu0 0
  %6390 = vmatpush.bf16.xpose.msra.mxu0 0
  %6391 = vmatpush.bf16.xpose.msra.mxu0 0
  %6392 = vmatpush.bf16.xpose.msra.mxu0 0
  %6393 = vmatpush.bf16.xpose.msra.mxu0 %v4177
  %6394 = vmatpush.bf16.xpose.msra.mxu0 %v4001
  %6395 = vmatpush.bf16.xpose.msra.mxu0 %v3825
  %6396 = vmatpush.bf16.xpose.msra.mxu0 %v3649
  %6397 = vmatmul.bf16.gmra.mxu0 %v1185
  %v6398 = vpop.f32.mrf.mxu0
  %v6399 = vadd.f32 %v6386, %v6398
  %v6400 = vpop.f32.mrf.mxu0
  %6401 = vdwg.mxu0
  %6402 = vmatpush.bf16.xpose.msra.mxu0 0
  %6403 = vmatpush.bf16.xpose.msra.mxu0 0
  %6404 = vmatpush.bf16.xpose.msra.mxu0 0
  %6405 = vmatpush.bf16.xpose.msra.mxu0 0
  %6406 = vmatpush.bf16.xpose.msra.mxu0 %v4178
  %6407 = vmatpush.bf16.xpose.msra.mxu0 %v4002
  %6408 = vmatpush.bf16.xpose.msra.mxu0 %v3826
  %6409 = vmatpush.bf16.xpose.msra.mxu0 %v3650
  %6410 = vmatmul.bf16.gmra.mxu0 %v1186
  %v6411 = vpop.f32.mrf.mxu0
  %v6412 = vadd.f32 %v6399, %v6411
  %v6413 = vpop.f32.mrf.mxu0
  %6414 = vdwg.mxu0
  %6415 = vmatpush.bf16.xpose.msra.mxu0 0
  %6416 = vmatpush.bf16.xpose.msra.mxu0 0
  %6417 = vmatpush.bf16.xpose.msra.mxu0 0
  %6418 = vmatpush.bf16.xpose.msra.mxu0 0
  %6419 = vmatpush.bf16.xpose.msra.mxu0 %v4179
  %6420 = vmatpush.bf16.xpose.msra.mxu0 %v4003
  %6421 = vmatpush.bf16.xpose.msra.mxu0 %v3827
  %6422 = vmatpush.bf16.xpose.msra.mxu0 %v3651
  %6423 = vmatmul.bf16.gmra.mxu0 %v1187
  %v6424 = vpop.f32.mrf.mxu0
  %v6425 = vadd.f32 %v6412, %v6424
  %v6426 = vpop.f32.mrf.mxu0
  %6427 = vdwg.mxu0
  %6428 = vmatpush.bf16.xpose.msra.mxu0 0
  %6429 = vmatpush.bf16.xpose.msra.mxu0 0
  %6430 = vmatpush.bf16.xpose.msra.mxu0 0
  %6431 = vmatpush.bf16.xpose.msra.mxu0 0
  %6432 = vmatpush.bf16.xpose.msra.mxu0 %v4180
  %6433 = vmatpush.bf16.xpose.msra.mxu0 %v4004
  %6434 = vmatpush.bf16.xpose.msra.mxu0 %v3828
  %6435 = vmatpush.bf16.xpose.msra.mxu0 %v3652
  %6436 = vmatmul.bf16.gmra.mxu0 %v1188
  %v6437 = vpop.f32.mrf.mxu0
  %v6438 = vadd.f32 %v6425, %v6437
  %v6439 = vpop.f32.mrf.mxu0
  %6440 = vdwg.mxu0
  %6441 = vmatpush.bf16.xpose.msra.mxu0 0
  %6442 = vmatpush.bf16.xpose.msra.mxu0 0
  %6443 = vmatpush.bf16.xpose.msra.mxu0 0
  %6444 = vmatpush.bf16.xpose.msra.mxu0 0
  %6445 = vmatpush.bf16.xpose.msra.mxu0 %v4181
  %6446 = vmatpush.bf16.xpose.msra.mxu0 %v4005
  %6447 = vmatpush.bf16.xpose.msra.mxu0 %v3829
  %6448 = vmatpush.bf16.xpose.msra.mxu0 %v3653
  %6449 = vmatmul.bf16.gmra.mxu0 %v1189
  %v6450 = vpop.f32.mrf.mxu0
  %v6451 = vadd.f32 %v6438, %v6450
  %v6452 = vpop.f32.mrf.mxu0
  %6453 = vdwg.mxu0
  %6454 = vmatpush.bf16.xpose.msra.mxu0 0
  %6455 = vmatpush.bf16.xpose.msra.mxu0 0
  %6456 = vmatpush.bf16.xpose.msra.mxu0 0
  %6457 = vmatpush.bf16.xpose.msra.mxu0 0
  %6458 = vmatpush.bf16.xpose.msra.mxu0 %v4182
  %6459 = vmatpush.bf16.xpose.msra.mxu0 %v4006
  %6460 = vmatpush.bf16.xpose.msra.mxu0 %v3830
  %6461 = vmatpush.bf16.xpose.msra.mxu0 %v3654
  %6462 = vmatmul.bf16.gmra.mxu0 %v1190
  %v6463 = vpop.f32.mrf.mxu0
  %v6464 = vadd.f32 %v6451, %v6463
  %v6465 = vpop.f32.mrf.mxu0
  %6466 = vdwg.mxu0
  %6467 = vmatpush.bf16.xpose.msra.mxu0 0
  %6468 = vmatpush.bf16.xpose.msra.mxu0 0
  %6469 = vmatpush.bf16.xpose.msra.mxu0 0
  %6470 = vmatpush.bf16.xpose.msra.mxu0 0
  %6471 = vmatpush.bf16.xpose.msra.mxu0 %v4183
  %6472 = vmatpush.bf16.xpose.msra.mxu0 %v4007
  %6473 = vmatpush.bf16.xpose.msra.mxu0 %v3831
  %6474 = vmatpush.bf16.xpose.msra.mxu0 %v3655
  %6475 = vmatmul.bf16.gmra.mxu0 %v1191
  %v6476 = vpop.f32.mrf.mxu0
  %v6477 = vadd.f32 %v6464, %v6476
  %v6478 = vpop.f32.mrf.mxu0
  %6479 = vdwg.mxu0
  %6480 = vmatpush.bf16.xpose.msra.mxu0 0
  %6481 = vmatpush.bf16.xpose.msra.mxu0 0
  %6482 = vmatpush.bf16.xpose.msra.mxu0 0
  %6483 = vmatpush.bf16.xpose.msra.mxu0 0
  %6484 = vmatpush.bf16.xpose.msra.mxu0 %v4184
  %6485 = vmatpush.bf16.xpose.msra.mxu0 %v4008
  %6486 = vmatpush.bf16.xpose.msra.mxu0 %v3832
  %6487 = vmatpush.bf16.xpose.msra.mxu0 %v3656
  %6488 = vmatmul.bf16.gmra.mxu0 %v1192
  %v6489 = vpop.f32.mrf.mxu0
  %v6490 = vadd.f32 %v6477, %v6489
  %v6491 = vpop.f32.mrf.mxu0
  %6492 = vdwg.mxu0
  %6493 = vmatpush.bf16.xpose.msra.mxu0 0
  %6494 = vmatpush.bf16.xpose.msra.mxu0 0
  %6495 = vmatpush.bf16.xpose.msra.mxu0 0
  %6496 = vmatpush.bf16.xpose.msra.mxu0 0
  %6497 = vmatpush.bf16.xpose.msra.mxu0 %v4185
  %6498 = vmatpush.bf16.xpose.msra.mxu0 %v4009
  %6499 = vmatpush.bf16.xpose.msra.mxu0 %v3833
  %6500 = vmatpush.bf16.xpose.msra.mxu0 %v3657
  %6501 = vmatmul.bf16.gmra.mxu0 %v1193
  %v6502 = vpop.f32.mrf.mxu0
  %v6503 = vadd.f32 %v6490, %v6502
  %v6504 = vpop.f32.mrf.mxu0
  %6505 = vdwg.mxu0
  %6506 = vmatpush.bf16.xpose.msra.mxu0 0
  %6507 = vmatpush.bf16.xpose.msra.mxu0 0
  %6508 = vmatpush.bf16.xpose.msra.mxu0 0
  %6509 = vmatpush.bf16.xpose.msra.mxu0 0
  %6510 = vmatpush.bf16.xpose.msra.mxu0 %v4186
  %6511 = vmatpush.bf16.xpose.msra.mxu0 %v4010
  %6512 = vmatpush.bf16.xpose.msra.mxu0 %v3834
  %6513 = vmatpush.bf16.xpose.msra.mxu0 %v3658
  %6514 = vmatmul.bf16.gmra.mxu0 %v1194
  %v6515 = vpop.f32.mrf.mxu0
  %v6516 = vadd.f32 %v6503, %v6515
  %v6517 = vpop.f32.mrf.mxu0
  %6518 = vdwg.mxu0
  %6519 = vmatpush.bf16.xpose.msra.mxu0 0
  %6520 = vmatpush.bf16.xpose.msra.mxu0 0
  %6521 = vmatpush.bf16.xpose.msra.mxu0 0
  %6522 = vmatpush.bf16.xpose.msra.mxu0 0
  %6523 = vmatpush.bf16.xpose.msra.mxu0 %v4187
  %6524 = vmatpush.bf16.xpose.msra.mxu0 %v4011
  %6525 = vmatpush.bf16.xpose.msra.mxu0 %v3835
  %6526 = vmatpush.bf16.xpose.msra.mxu0 %v3659
  %6527 = vmatmul.bf16.gmra.mxu0 %v1195
  %v6528 = vpop.f32.mrf.mxu0
  %v6529 = vadd.f32 %v6516, %v6528
  %v6530 = vpop.f32.mrf.mxu0
  %6531 = vdwg.mxu0
  %6532 = vmatpush.bf16.xpose.msra.mxu0 0
  %6533 = vmatpush.bf16.xpose.msra.mxu0 0
  %6534 = vmatpush.bf16.xpose.msra.mxu0 0
  %6535 = vmatpush.bf16.xpose.msra.mxu0 0
  %6536 = vmatpush.bf16.xpose.msra.mxu0 %v4188
  %6537 = vmatpush.bf16.xpose.msra.mxu0 %v4012
  %6538 = vmatpush.bf16.xpose.msra.mxu0 %v3836
  %6539 = vmatpush.bf16.xpose.msra.mxu0 %v3660
  %6540 = vmatmul.bf16.gmra.mxu0 %v1196
  %v6541 = vpop.f32.mrf.mxu0
  %v6542 = vadd.f32 %v6529, %v6541
  %v6543 = vpop.f32.mrf.mxu0
  %6544 = vdwg.mxu0
  %6545 = vmatpush.bf16.xpose.msra.mxu0 0
  %6546 = vmatpush.bf16.xpose.msra.mxu0 0
  %6547 = vmatpush.bf16.xpose.msra.mxu0 0
  %6548 = vmatpush.bf16.xpose.msra.mxu0 0
  %6549 = vmatpush.bf16.xpose.msra.mxu0 %v4189
  %6550 = vmatpush.bf16.xpose.msra.mxu0 %v4013
  %6551 = vmatpush.bf16.xpose.msra.mxu0 %v3837
  %6552 = vmatpush.bf16.xpose.msra.mxu0 %v3661
  %6553 = vmatmul.bf16.gmra.mxu0 %v1197
  %v6554 = vpop.f32.mrf.mxu0
  %v6555 = vadd.f32 %v6542, %v6554
  %v6556 = vpop.f32.mrf.mxu0
  %6557 = vdwg.mxu0
  %6558 = vmatpush.bf16.xpose.msra.mxu0 0
  %6559 = vmatpush.bf16.xpose.msra.mxu0 0
  %6560 = vmatpush.bf16.xpose.msra.mxu0 0
  %6561 = vmatpush.bf16.xpose.msra.mxu0 0
  %6562 = vmatpush.bf16.xpose.msra.mxu0 %v4190
  %6563 = vmatpush.bf16.xpose.msra.mxu0 %v4014
  %6564 = vmatpush.bf16.xpose.msra.mxu0 %v3838
  %6565 = vmatpush.bf16.xpose.msra.mxu0 %v3662
  %6566 = vmatmul.bf16.gmra.mxu0 %v1198
  %v6567 = vpop.f32.mrf.mxu0
  %v6568 = vadd.f32 %v6555, %v6567
  %v6569 = vpop.f32.mrf.mxu0
  %6570 = vdwg.mxu0
  %6571 = vmatpush.bf16.xpose.msra.mxu0 0
  %6572 = vmatpush.bf16.xpose.msra.mxu0 0
  %6573 = vmatpush.bf16.xpose.msra.mxu0 0
  %6574 = vmatpush.bf16.xpose.msra.mxu0 0
  %6575 = vmatpush.bf16.xpose.msra.mxu0 %v4191
  %6576 = vmatpush.bf16.xpose.msra.mxu0 %v4015
  %6577 = vmatpush.bf16.xpose.msra.mxu0 %v3839
  %6578 = vmatpush.bf16.xpose.msra.mxu0 %v3663
  %6579 = vmatmul.bf16.gmra.mxu0 %v1199
  %v6580 = vpop.f32.mrf.mxu0
  %v6581 = vadd.f32 %v6568, %v6580
  %v6582 = vpop.f32.mrf.mxu0
  %6583 = vdwg.mxu0
  %6584 = vmatpush.bf16.xpose.msra.mxu0 0
  %6585 = vmatpush.bf16.xpose.msra.mxu0 0
  %6586 = vmatpush.bf16.xpose.msra.mxu0 0
  %6587 = vmatpush.bf16.xpose.msra.mxu0 0
  %6588 = vmatpush.bf16.xpose.msra.mxu0 %v4192
  %6589 = vmatpush.bf16.xpose.msra.mxu0 %v4016
  %6590 = vmatpush.bf16.xpose.msra.mxu0 %v3840
  %6591 = vmatpush.bf16.xpose.msra.mxu0 %v3664
  %6592 = vmatmul.bf16.gmra.mxu0 %v1200
  %v6593 = vpop.f32.mrf.mxu0
  %v6594 = vadd.f32 %v6581, %v6593
  %v6595 = vpop.f32.mrf.mxu0
  %6596 = vdwg.mxu0
  %6597 = vmatpush.bf16.xpose.msra.mxu0 0
  %6598 = vmatpush.bf16.xpose.msra.mxu0 0
  %6599 = vmatpush.bf16.xpose.msra.mxu0 0
  %6600 = vmatpush.bf16.xpose.msra.mxu0 0
  %6601 = vmatpush.bf16.xpose.msra.mxu0 %v4193
  %6602 = vmatpush.bf16.xpose.msra.mxu0 %v4017
  %6603 = vmatpush.bf16.xpose.msra.mxu0 %v3841
  %6604 = vmatpush.bf16.xpose.msra.mxu0 %v3665
  %6605 = vmatmul.bf16.gmra.mxu0 %v1201
  %v6606 = vpop.f32.mrf.mxu0
  %v6607 = vadd.f32 %v6594, %v6606
  %v6608 = vpop.f32.mrf.mxu0
  %6609 = vdwg.mxu0
  %6610 = vmatpush.bf16.xpose.msra.mxu0 0
  %6611 = vmatpush.bf16.xpose.msra.mxu0 0
  %6612 = vmatpush.bf16.xpose.msra.mxu0 0
  %6613 = vmatpush.bf16.xpose.msra.mxu0 0
  %6614 = vmatpush.bf16.xpose.msra.mxu0 %v4194
  %6615 = vmatpush.bf16.xpose.msra.mxu0 %v4018
  %6616 = vmatpush.bf16.xpose.msra.mxu0 %v3842
  %6617 = vmatpush.bf16.xpose.msra.mxu0 %v3666
  %6618 = vmatmul.bf16.gmra.mxu0 %v1202
  %v6619 = vpop.f32.mrf.mxu0
  %v6620 = vadd.f32 %v6607, %v6619
  %v6621 = vpop.f32.mrf.mxu0
  %6622 = vdwg.mxu0
  %6623 = vmatpush.bf16.xpose.msra.mxu0 0
  %6624 = vmatpush.bf16.xpose.msra.mxu0 0
  %6625 = vmatpush.bf16.xpose.msra.mxu0 0
  %6626 = vmatpush.bf16.xpose.msra.mxu0 0
  %6627 = vmatpush.bf16.xpose.msra.mxu0 %v4195
  %6628 = vmatpush.bf16.xpose.msra.mxu0 %v4019
  %6629 = vmatpush.bf16.xpose.msra.mxu0 %v3843
  %6630 = vmatpush.bf16.xpose.msra.mxu0 %v3667
  %6631 = vmatmul.bf16.gmra.mxu0 %v1203
  %v6632 = vpop.f32.mrf.mxu0
  %v6633 = vadd.f32 %v6620, %v6632
  %v6634 = vpop.f32.mrf.mxu0
  %6635 = vdwg.mxu0
  %6636 = vmatpush.bf16.xpose.msra.mxu0 0
  %6637 = vmatpush.bf16.xpose.msra.mxu0 0
  %6638 = vmatpush.bf16.xpose.msra.mxu0 0
  %6639 = vmatpush.bf16.xpose.msra.mxu0 0
  %6640 = vmatpush.bf16.xpose.msra.mxu0 %v4196
  %6641 = vmatpush.bf16.xpose.msra.mxu0 %v4020
  %6642 = vmatpush.bf16.xpose.msra.mxu0 %v3844
  %6643 = vmatpush.bf16.xpose.msra.mxu0 %v3668
  %6644 = vmatmul.bf16.gmra.mxu0 %v1204
  %v6645 = vpop.f32.mrf.mxu0
  %v6646 = vadd.f32 %v6633, %v6645
  %v6647 = vpop.f32.mrf.mxu0
  %6648 = vdwg.mxu0
  %6649 = vmatpush.bf16.xpose.msra.mxu0 0
  %6650 = vmatpush.bf16.xpose.msra.mxu0 0
  %6651 = vmatpush.bf16.xpose.msra.mxu0 0
  %6652 = vmatpush.bf16.xpose.msra.mxu0 0
  %6653 = vmatpush.bf16.xpose.msra.mxu0 %v4197
  %6654 = vmatpush.bf16.xpose.msra.mxu0 %v4021
  %6655 = vmatpush.bf16.xpose.msra.mxu0 %v3845
  %6656 = vmatpush.bf16.xpose.msra.mxu0 %v3669
  %6657 = vmatmul.bf16.gmra.mxu0 %v1205
  %v6658 = vpop.f32.mrf.mxu0
  %v6659 = vadd.f32 %v6646, %v6658
  %v6660 = vpop.f32.mrf.mxu0
  %6661 = vdwg.mxu0
  %6662 = vmatpush.bf16.xpose.msra.mxu0 0
  %6663 = vmatpush.bf16.xpose.msra.mxu0 0
  %6664 = vmatpush.bf16.xpose.msra.mxu0 0
  %6665 = vmatpush.bf16.xpose.msra.mxu0 0
  %6666 = vmatpush.bf16.xpose.msra.mxu0 %v4198
  %6667 = vmatpush.bf16.xpose.msra.mxu0 %v4022
  %6668 = vmatpush.bf16.xpose.msra.mxu0 %v3846
  %6669 = vmatpush.bf16.xpose.msra.mxu0 %v3670
  %6670 = vmatmul.bf16.gmra.mxu0 %v1206
  %v6671 = vpop.f32.mrf.mxu0
  %v6672 = vadd.f32 %v6659, %v6671
  %v6673 = vpop.f32.mrf.mxu0
  %6674 = vdwg.mxu0
  %6675 = vmatpush.bf16.xpose.msra.mxu0 0
  %6676 = vmatpush.bf16.xpose.msra.mxu0 0
  %6677 = vmatpush.bf16.xpose.msra.mxu0 0
  %6678 = vmatpush.bf16.xpose.msra.mxu0 0
  %6679 = vmatpush.bf16.xpose.msra.mxu0 %v4199
  %6680 = vmatpush.bf16.xpose.msra.mxu0 %v4023
  %6681 = vmatpush.bf16.xpose.msra.mxu0 %v3847
  %6682 = vmatpush.bf16.xpose.msra.mxu0 %v3671
  %6683 = vmatmul.bf16.gmra.mxu0 %v1207
  %v6684 = vpop.f32.mrf.mxu0
  %v6685 = vadd.f32 %v6672, %v6684
  %v6686 = vpop.f32.mrf.mxu0
  %6687 = vdwg.mxu0
  %6688 = vmatpush.bf16.xpose.msra.mxu0 0
  %6689 = vmatpush.bf16.xpose.msra.mxu0 0
  %6690 = vmatpush.bf16.xpose.msra.mxu0 0
  %6691 = vmatpush.bf16.xpose.msra.mxu0 0
  %6692 = vmatpush.bf16.xpose.msra.mxu0 %v4200
  %6693 = vmatpush.bf16.xpose.msra.mxu0 %v4024
  %6694 = vmatpush.bf16.xpose.msra.mxu0 %v3848
  %6695 = vmatpush.bf16.xpose.msra.mxu0 %v3672
  %6696 = vmatmul.bf16.gmra.mxu0 %v1208
  %v6697 = vpop.f32.mrf.mxu0
  %v6698 = vadd.f32 %v6685, %v6697
  %v6699 = vpop.f32.mrf.mxu0
  %6700 = vdwg.mxu0
  %6701 = vmatpush.bf16.xpose.msra.mxu0 0
  %6702 = vmatpush.bf16.xpose.msra.mxu0 0
  %6703 = vmatpush.bf16.xpose.msra.mxu0 0
  %6704 = vmatpush.bf16.xpose.msra.mxu0 0
  %6705 = vmatpush.bf16.xpose.msra.mxu0 %v4201
  %6706 = vmatpush.bf16.xpose.msra.mxu0 %v4025
  %6707 = vmatpush.bf16.xpose.msra.mxu0 %v3849
  %6708 = vmatpush.bf16.xpose.msra.mxu0 %v3673
  %6709 = vmatmul.bf16.gmra.mxu0 %v1209
  %v6710 = vpop.f32.mrf.mxu0
  %v6711 = vadd.f32 %v6698, %v6710
  %v6712 = vpop.f32.mrf.mxu0
  %6713 = vdwg.mxu0
  %6714 = vmatpush.bf16.xpose.msra.mxu0 0
  %6715 = vmatpush.bf16.xpose.msra.mxu0 0
  %6716 = vmatpush.bf16.xpose.msra.mxu0 0
  %6717 = vmatpush.bf16.xpose.msra.mxu0 0
  %6718 = vmatpush.bf16.xpose.msra.mxu0 %v4202
  %6719 = vmatpush.bf16.xpose.msra.mxu0 %v4026
  %6720 = vmatpush.bf16.xpose.msra.mxu0 %v3850
  %6721 = vmatpush.bf16.xpose.msra.mxu0 %v3674
  %6722 = vmatmul.bf16.gmra.mxu0 %v1210
  %v6723 = vpop.f32.mrf.mxu0
  %v6724 = vadd.f32 %v6711, %v6723
  %v6725 = vpop.f32.mrf.mxu0
  %6726 = vdwg.mxu0
  %6727 = vmatpush.bf16.xpose.msra.mxu0 0
  %6728 = vmatpush.bf16.xpose.msra.mxu0 0
  %6729 = vmatpush.bf16.xpose.msra.mxu0 0
  %6730 = vmatpush.bf16.xpose.msra.mxu0 0
  %6731 = vmatpush.bf16.xpose.msra.mxu0 %v4203
  %6732 = vmatpush.bf16.xpose.msra.mxu0 %v4027
  %6733 = vmatpush.bf16.xpose.msra.mxu0 %v3851
  %6734 = vmatpush.bf16.xpose.msra.mxu0 %v3675
  %6735 = vmatmul.bf16.gmra.mxu0 %v1211
  %v6736 = vpop.f32.mrf.mxu0
  %v6737 = vadd.f32 %v6724, %v6736
  %v6738 = vpop.f32.mrf.mxu0
  %6739 = vdwg.mxu0
  %6740 = vmatpush.bf16.xpose.msra.mxu0 0
  %6741 = vmatpush.bf16.xpose.msra.mxu0 0
  %6742 = vmatpush.bf16.xpose.msra.mxu0 0
  %6743 = vmatpush.bf16.xpose.msra.mxu0 0
  %6744 = vmatpush.bf16.xpose.msra.mxu0 %v4204
  %6745 = vmatpush.bf16.xpose.msra.mxu0 %v4028
  %6746 = vmatpush.bf16.xpose.msra.mxu0 %v3852
  %6747 = vmatpush.bf16.xpose.msra.mxu0 %v3676
  %6748 = vmatmul.bf16.gmra.mxu0 %v1212
  %v6749 = vpop.f32.mrf.mxu0
  %v6750 = vadd.f32 %v6737, %v6749
  %v6751 = vpop.f32.mrf.mxu0
  %6752 = vdwg.mxu0
  %6753 = vmatpush.bf16.xpose.msra.mxu0 0
  %6754 = vmatpush.bf16.xpose.msra.mxu0 0
  %6755 = vmatpush.bf16.xpose.msra.mxu0 0
  %6756 = vmatpush.bf16.xpose.msra.mxu0 0
  %6757 = vmatpush.bf16.xpose.msra.mxu0 %v4205
  %6758 = vmatpush.bf16.xpose.msra.mxu0 %v4029
  %6759 = vmatpush.bf16.xpose.msra.mxu0 %v3853
  %6760 = vmatpush.bf16.xpose.msra.mxu0 %v3677
  %6761 = vmatmul.bf16.gmra.mxu0 %v1213
  %v6762 = vpop.f32.mrf.mxu0
  %v6763 = vadd.f32 %v6750, %v6762
  %v6764 = vpop.f32.mrf.mxu0
  %6765 = vdwg.mxu0
  %6766 = vmatpush.bf16.xpose.msra.mxu0 0
  %6767 = vmatpush.bf16.xpose.msra.mxu0 0
  %6768 = vmatpush.bf16.xpose.msra.mxu0 0
  %6769 = vmatpush.bf16.xpose.msra.mxu0 0
  %6770 = vmatpush.bf16.xpose.msra.mxu0 %v4206
  %6771 = vmatpush.bf16.xpose.msra.mxu0 %v4030
  %6772 = vmatpush.bf16.xpose.msra.mxu0 %v3854
  %6773 = vmatpush.bf16.xpose.msra.mxu0 %v3678
  %6774 = vmatmul.bf16.gmra.mxu0 %v1214
  %v6775 = vpop.f32.mrf.mxu0
  %v6776 = vadd.f32 %v6763, %v6775
  %v6777 = vpop.f32.mrf.mxu0
  %6778 = vdwg.mxu0
  %6779 = vmatpush.bf16.xpose.msra.mxu0 0
  %6780 = vmatpush.bf16.xpose.msra.mxu0 0
  %6781 = vmatpush.bf16.xpose.msra.mxu0 0
  %6782 = vmatpush.bf16.xpose.msra.mxu0 0
  %6783 = vmatpush.bf16.xpose.msra.mxu0 %v4207
  %6784 = vmatpush.bf16.xpose.msra.mxu0 %v4031
  %6785 = vmatpush.bf16.xpose.msra.mxu0 %v3855
  %6786 = vmatpush.bf16.xpose.msra.mxu0 %v3679
  %6787 = vmatmul.bf16.gmra.mxu0 %v1215
  %v6788 = vpop.f32.mrf.mxu0
  %v6789 = vadd.f32 %v6776, %v6788
  %v6790 = vpop.f32.mrf.mxu0
  %6791 = vdwg.mxu0
  %6792 = vmatpush.bf16.xpose.msra.mxu0 0
  %6793 = vmatpush.bf16.xpose.msra.mxu0 0
  %6794 = vmatpush.bf16.xpose.msra.mxu0 0
  %6795 = vmatpush.bf16.xpose.msra.mxu0 0
  %6796 = vmatpush.bf16.xpose.msra.mxu0 %v4208
  %6797 = vmatpush.bf16.xpose.msra.mxu0 %v4032
  %6798 = vmatpush.bf16.xpose.msra.mxu0 %v3856
  %6799 = vmatpush.bf16.xpose.msra.mxu0 %v3680
  %6800 = vmatmul.bf16.gmra.mxu0 %v1216
  %v6801 = vpop.f32.mrf.mxu0
  %v6802 = vadd.f32 %v6789, %v6801
  %v6803 = vpop.f32.mrf.mxu0
  %6804 = vdwg.mxu0
  %6805 = vmatpush.bf16.xpose.msra.mxu0 0
  %6806 = vmatpush.bf16.xpose.msra.mxu0 0
  %6807 = vmatpush.bf16.xpose.msra.mxu0 0
  %6808 = vmatpush.bf16.xpose.msra.mxu0 0
  %6809 = vmatpush.bf16.xpose.msra.mxu0 %v4209
  %6810 = vmatpush.bf16.xpose.msra.mxu0 %v4033
  %6811 = vmatpush.bf16.xpose.msra.mxu0 %v3857
  %6812 = vmatpush.bf16.xpose.msra.mxu0 %v3681
  %6813 = vmatmul.bf16.gmra.mxu0 %v1217
  %v6814 = vpop.f32.mrf.mxu0
  %v6815 = vadd.f32 %v6802, %v6814
  %v6816 = vpop.f32.mrf.mxu0
  %6817 = vdwg.mxu0
  %6818 = vmatpush.bf16.xpose.msra.mxu0 0
  %6819 = vmatpush.bf16.xpose.msra.mxu0 0
  %6820 = vmatpush.bf16.xpose.msra.mxu0 0
  %6821 = vmatpush.bf16.xpose.msra.mxu0 0
  %6822 = vmatpush.bf16.xpose.msra.mxu0 %v4210
  %6823 = vmatpush.bf16.xpose.msra.mxu0 %v4034
  %6824 = vmatpush.bf16.xpose.msra.mxu0 %v3858
  %6825 = vmatpush.bf16.xpose.msra.mxu0 %v3682
  %6826 = vmatmul.bf16.gmra.mxu0 %v1218
  %v6827 = vpop.f32.mrf.mxu0
  %v6828 = vadd.f32 %v6815, %v6827
  %v6829 = vpop.f32.mrf.mxu0
  %6830 = vdwg.mxu0
  %6831 = vmatpush.bf16.xpose.msra.mxu0 0
  %6832 = vmatpush.bf16.xpose.msra.mxu0 0
  %6833 = vmatpush.bf16.xpose.msra.mxu0 0
  %6834 = vmatpush.bf16.xpose.msra.mxu0 0
  %6835 = vmatpush.bf16.xpose.msra.mxu0 %v4211
  %6836 = vmatpush.bf16.xpose.msra.mxu0 %v4035
  %6837 = vmatpush.bf16.xpose.msra.mxu0 %v3859
  %6838 = vmatpush.bf16.xpose.msra.mxu0 %v3683
  %6839 = vmatmul.bf16.gmra.mxu0 %v1219
  %v6840 = vpop.f32.mrf.mxu0
  %v6841 = vadd.f32 %v6828, %v6840
  %v6842 = vpop.f32.mrf.mxu0
  %6843 = vdwg.mxu0
  %6844 = vmatpush.bf16.xpose.msra.mxu0 0
  %6845 = vmatpush.bf16.xpose.msra.mxu0 0
  %6846 = vmatpush.bf16.xpose.msra.mxu0 0
  %6847 = vmatpush.bf16.xpose.msra.mxu0 0
  %6848 = vmatpush.bf16.xpose.msra.mxu0 %v4212
  %6849 = vmatpush.bf16.xpose.msra.mxu0 %v4036
  %6850 = vmatpush.bf16.xpose.msra.mxu0 %v3860
  %6851 = vmatpush.bf16.xpose.msra.mxu0 %v3684
  %6852 = vmatmul.bf16.gmra.mxu0 %v1220
  %v6853 = vpop.f32.mrf.mxu0
  %v6854 = vadd.f32 %v6841, %v6853
  %v6855 = vpop.f32.mrf.mxu0
  %6856 = vdwg.mxu0
  %6857 = vmatpush.bf16.xpose.msra.mxu0 0
  %6858 = vmatpush.bf16.xpose.msra.mxu0 0
  %6859 = vmatpush.bf16.xpose.msra.mxu0 0
  %6860 = vmatpush.bf16.xpose.msra.mxu0 0
  %6861 = vmatpush.bf16.xpose.msra.mxu0 %v4213
  %6862 = vmatpush.bf16.xpose.msra.mxu0 %v4037
  %6863 = vmatpush.bf16.xpose.msra.mxu0 %v3861
  %6864 = vmatpush.bf16.xpose.msra.mxu0 %v3685
  %6865 = vmatmul.bf16.gmra.mxu0 %v1221
  %v6866 = vpop.f32.mrf.mxu0
  %v6867 = vadd.f32 %v6854, %v6866
  %v6868 = vpop.f32.mrf.mxu0
  %6869 = vdwg.mxu0
  %6870 = vmatpush.bf16.xpose.msra.mxu0 0
  %6871 = vmatpush.bf16.xpose.msra.mxu0 0
  %6872 = vmatpush.bf16.xpose.msra.mxu0 0
  %6873 = vmatpush.bf16.xpose.msra.mxu0 0
  %6874 = vmatpush.bf16.xpose.msra.mxu0 %v4214
  %6875 = vmatpush.bf16.xpose.msra.mxu0 %v4038
  %6876 = vmatpush.bf16.xpose.msra.mxu0 %v3862
  %6877 = vmatpush.bf16.xpose.msra.mxu0 %v3686
  %6878 = vmatmul.bf16.gmra.mxu0 %v1222
  %v6879 = vpop.f32.mrf.mxu0
  %v6880 = vadd.f32 %v6867, %v6879
  %v6881 = vpop.f32.mrf.mxu0
  %6882 = vdwg.mxu0
  %6883 = vmatpush.bf16.xpose.msra.mxu0 0
  %6884 = vmatpush.bf16.xpose.msra.mxu0 0
  %6885 = vmatpush.bf16.xpose.msra.mxu0 0
  %6886 = vmatpush.bf16.xpose.msra.mxu0 0
  %6887 = vmatpush.bf16.xpose.msra.mxu0 %v4215
  %6888 = vmatpush.bf16.xpose.msra.mxu0 %v4039
  %6889 = vmatpush.bf16.xpose.msra.mxu0 %v3863
  %6890 = vmatpush.bf16.xpose.msra.mxu0 %v3687
  %6891 = vmatmul.bf16.gmra.mxu0 %v1223
  %v6892 = vpop.f32.mrf.mxu0
  %v6893 = vadd.f32 %v6880, %v6892
  %v6894 = vpop.f32.mrf.mxu0
  %6895 = vdwg.mxu0
  %6896 = vmatpush.bf16.xpose.msra.mxu0 0
  %6897 = vmatpush.bf16.xpose.msra.mxu0 0
  %6898 = vmatpush.bf16.xpose.msra.mxu0 0
  %6899 = vmatpush.bf16.xpose.msra.mxu0 0
  %6900 = vmatpush.bf16.xpose.msra.mxu0 %v4216
  %6901 = vmatpush.bf16.xpose.msra.mxu0 %v4040
  %6902 = vmatpush.bf16.xpose.msra.mxu0 %v3864
  %6903 = vmatpush.bf16.xpose.msra.mxu0 %v3688
  %6904 = vmatmul.bf16.gmra.mxu0 %v1224
  %v6905 = vpop.f32.mrf.mxu0
  %v6906 = vadd.f32 %v6893, %v6905
  %v6907 = vpop.f32.mrf.mxu0
  %6908 = vdwg.mxu0
  %6909 = vmatpush.bf16.xpose.msra.mxu0 0
  %6910 = vmatpush.bf16.xpose.msra.mxu0 0
  %6911 = vmatpush.bf16.xpose.msra.mxu0 0
  %6912 = vmatpush.bf16.xpose.msra.mxu0 0
  %6913 = vmatpush.bf16.xpose.msra.mxu0 %v4217
  %6914 = vmatpush.bf16.xpose.msra.mxu0 %v4041
  %6915 = vmatpush.bf16.xpose.msra.mxu0 %v3865
  %6916 = vmatpush.bf16.xpose.msra.mxu0 %v3689
  %6917 = vmatmul.bf16.gmra.mxu0 %v1225
  %v6918 = vpop.f32.mrf.mxu0
  %v6919 = vadd.f32 %v6906, %v6918
  %v6920 = vpop.f32.mrf.mxu0
  %6921 = vdwg.mxu0
  %6922 = vmatpush.bf16.xpose.msra.mxu0 0
  %6923 = vmatpush.bf16.xpose.msra.mxu0 0
  %6924 = vmatpush.bf16.xpose.msra.mxu0 0
  %6925 = vmatpush.bf16.xpose.msra.mxu0 0
  %6926 = vmatpush.bf16.xpose.msra.mxu0 %v4218
  %6927 = vmatpush.bf16.xpose.msra.mxu0 %v4042
  %6928 = vmatpush.bf16.xpose.msra.mxu0 %v3866
  %6929 = vmatpush.bf16.xpose.msra.mxu0 %v3690
  %6930 = vmatmul.bf16.gmra.mxu0 %v1226
  %v6931 = vpop.f32.mrf.mxu0
  %v6932 = vadd.f32 %v6919, %v6931
  %v6933 = vpop.f32.mrf.mxu0
  %6934 = vdwg.mxu0
  %6935 = vmatpush.bf16.xpose.msra.mxu0 0
  %6936 = vmatpush.bf16.xpose.msra.mxu0 0
  %6937 = vmatpush.bf16.xpose.msra.mxu0 0
  %6938 = vmatpush.bf16.xpose.msra.mxu0 0
  %6939 = vmatpush.bf16.xpose.msra.mxu0 %v4219
  %6940 = vmatpush.bf16.xpose.msra.mxu0 %v4043
  %6941 = vmatpush.bf16.xpose.msra.mxu0 %v3867
  %6942 = vmatpush.bf16.xpose.msra.mxu0 %v3691
  %6943 = vmatmul.bf16.gmra.mxu0 %v1227
  %v6944 = vpop.f32.mrf.mxu0
  %v6945 = vadd.f32 %v6932, %v6944
  %v6946 = vpop.f32.mrf.mxu0
  %6947 = vdwg.mxu0
  %6948 = vmatpush.bf16.xpose.msra.mxu0 0
  %6949 = vmatpush.bf16.xpose.msra.mxu0 0
  %6950 = vmatpush.bf16.xpose.msra.mxu0 0
  %6951 = vmatpush.bf16.xpose.msra.mxu0 0
  %6952 = vmatpush.bf16.xpose.msra.mxu0 %v4220
  %6953 = vmatpush.bf16.xpose.msra.mxu0 %v4044
  %6954 = vmatpush.bf16.xpose.msra.mxu0 %v3868
  %6955 = vmatpush.bf16.xpose.msra.mxu0 %v3692
  %6956 = vmatmul.bf16.gmra.mxu0 %v1228
  %v6957 = vpop.f32.mrf.mxu0
  %v6958 = vadd.f32 %v6945, %v6957
  %v6959 = vpop.f32.mrf.mxu0
  %6960 = vdwg.mxu0
  %6961 = vmatpush.bf16.xpose.msra.mxu0 0
  %6962 = vmatpush.bf16.xpose.msra.mxu0 0
  %6963 = vmatpush.bf16.xpose.msra.mxu0 0
  %6964 = vmatpush.bf16.xpose.msra.mxu0 0
  %6965 = vmatpush.bf16.xpose.msra.mxu0 %v4221
  %6966 = vmatpush.bf16.xpose.msra.mxu0 %v4045
  %6967 = vmatpush.bf16.xpose.msra.mxu0 %v3869
  %6968 = vmatpush.bf16.xpose.msra.mxu0 %v3693
  %6969 = vmatmul.bf16.gmra.mxu0 %v1229
  %v6970 = vpop.f32.mrf.mxu0
  %v6971 = vadd.f32 %v6958, %v6970
  %v6972 = vpop.f32.mrf.mxu0
  %6973 = vdwg.mxu0
  %6974 = vmatpush.bf16.xpose.msra.mxu0 0
  %6975 = vmatpush.bf16.xpose.msra.mxu0 0
  %6976 = vmatpush.bf16.xpose.msra.mxu0 0
  %6977 = vmatpush.bf16.xpose.msra.mxu0 0
  %6978 = vmatpush.bf16.xpose.msra.mxu0 %v4222
  %6979 = vmatpush.bf16.xpose.msra.mxu0 %v4046
  %6980 = vmatpush.bf16.xpose.msra.mxu0 %v3870
  %6981 = vmatpush.bf16.xpose.msra.mxu0 %v3694
  %6982 = vmatmul.bf16.gmra.mxu0 %v1230
  %v6983 = vpop.f32.mrf.mxu0
  %v6984 = vadd.f32 %v6971, %v6983
  %v6985 = vpop.f32.mrf.mxu0
  %6986 = vdwg.mxu0
  %6987 = vmatpush.bf16.xpose.msra.mxu0 0
  %6988 = vmatpush.bf16.xpose.msra.mxu0 0
  %6989 = vmatpush.bf16.xpose.msra.mxu0 0
  %6990 = vmatpush.bf16.xpose.msra.mxu0 0
  %6991 = vmatpush.bf16.xpose.msra.mxu0 %v4223
  %6992 = vmatpush.bf16.xpose.msra.mxu0 %v4047
  %6993 = vmatpush.bf16.xpose.msra.mxu0 %v3871
  %6994 = vmatpush.bf16.xpose.msra.mxu0 %v3695
  %6995 = vmatmul.bf16.gmra.mxu0 %v1231
  %v6996 = vpop.f32.mrf.mxu0
  %v6997 = vadd.f32 %v6984, %v6996
  %v6998 = vpop.f32.mrf.mxu0
  %6999 = vdwg.mxu0
  %7000 = vmatpush.bf16.xpose.msra.mxu0 0
  %7001 = vmatpush.bf16.xpose.msra.mxu0 0
  %7002 = vmatpush.bf16.xpose.msra.mxu0 0
  %7003 = vmatpush.bf16.xpose.msra.mxu0 0
  %7004 = vmatpush.bf16.xpose.msra.mxu0 %v4224
  %7005 = vmatpush.bf16.xpose.msra.mxu0 %v4048
  %7006 = vmatpush.bf16.xpose.msra.mxu0 %v3872
  %7007 = vmatpush.bf16.xpose.msra.mxu0 %v3696
  %7008 = vmatmul.bf16.gmra.mxu0 %v1232
  %v7009 = vpop.f32.mrf.mxu0
  %v7010 = vadd.f32 %v6997, %v7009
  %v7011 = vpop.f32.mrf.mxu0
  %7012 = vdwg.mxu0
  %7013 = vmatpush.bf16.xpose.msra.mxu0 0
  %7014 = vmatpush.bf16.xpose.msra.mxu0 0
  %7015 = vmatpush.bf16.xpose.msra.mxu0 0
  %7016 = vmatpush.bf16.xpose.msra.mxu0 0
  %7017 = vmatpush.bf16.xpose.msra.mxu0 %v4225
  %7018 = vmatpush.bf16.xpose.msra.mxu0 %v4049
  %7019 = vmatpush.bf16.xpose.msra.mxu0 %v3873
  %7020 = vmatpush.bf16.xpose.msra.mxu0 %v3697
  %7021 = vmatmul.bf16.gmra.mxu0 %v1233
  %v7022 = vpop.f32.mrf.mxu0
  %v7023 = vadd.f32 %v7010, %v7022
  %v7024 = vpop.f32.mrf.mxu0
  %7025 = vdwg.mxu0
  %7026 = vmatpush.bf16.xpose.msra.mxu0 0
  %7027 = vmatpush.bf16.xpose.msra.mxu0 0
  %7028 = vmatpush.bf16.xpose.msra.mxu0 0
  %7029 = vmatpush.bf16.xpose.msra.mxu0 0
  %7030 = vmatpush.bf16.xpose.msra.mxu0 %v4226
  %7031 = vmatpush.bf16.xpose.msra.mxu0 %v4050
  %7032 = vmatpush.bf16.xpose.msra.mxu0 %v3874
  %7033 = vmatpush.bf16.xpose.msra.mxu0 %v3698
  %7034 = vmatmul.bf16.gmra.mxu0 %v1234
  %v7035 = vpop.f32.mrf.mxu0
  %v7036 = vadd.f32 %v7023, %v7035
  %v7037 = vpop.f32.mrf.mxu0
  %7038 = vdwg.mxu0
  %7039 = vmatpush.bf16.xpose.msra.mxu0 0
  %7040 = vmatpush.bf16.xpose.msra.mxu0 0
  %7041 = vmatpush.bf16.xpose.msra.mxu0 0
  %7042 = vmatpush.bf16.xpose.msra.mxu0 0
  %7043 = vmatpush.bf16.xpose.msra.mxu0 %v4227
  %7044 = vmatpush.bf16.xpose.msra.mxu0 %v4051
  %7045 = vmatpush.bf16.xpose.msra.mxu0 %v3875
  %7046 = vmatpush.bf16.xpose.msra.mxu0 %v3699
  %7047 = vmatmul.bf16.gmra.mxu0 %v1235
  %v7048 = vpop.f32.mrf.mxu0
  %v7049 = vadd.f32 %v7036, %v7048
  %v7050 = vpop.f32.mrf.mxu0
  %7051 = vdwg.mxu0
  %7052 = vmatpush.bf16.xpose.msra.mxu0 0
  %7053 = vmatpush.bf16.xpose.msra.mxu0 0
  %7054 = vmatpush.bf16.xpose.msra.mxu0 0
  %7055 = vmatpush.bf16.xpose.msra.mxu0 0
  %7056 = vmatpush.bf16.xpose.msra.mxu0 %v4228
  %7057 = vmatpush.bf16.xpose.msra.mxu0 %v4052
  %7058 = vmatpush.bf16.xpose.msra.mxu0 %v3876
  %7059 = vmatpush.bf16.xpose.msra.mxu0 %v3700
  %7060 = vmatmul.bf16.gmra.mxu0 %v1236
  %v7061 = vpop.f32.mrf.mxu0
  %v7062 = vadd.f32 %v7049, %v7061
  %v7063 = vpop.f32.mrf.mxu0
  %7064 = vdwg.mxu0
  %7065 = vmatpush.bf16.xpose.msra.mxu0 0
  %7066 = vmatpush.bf16.xpose.msra.mxu0 0
  %7067 = vmatpush.bf16.xpose.msra.mxu0 0
  %7068 = vmatpush.bf16.xpose.msra.mxu0 0
  %7069 = vmatpush.bf16.xpose.msra.mxu0 %v4229
  %7070 = vmatpush.bf16.xpose.msra.mxu0 %v4053
  %7071 = vmatpush.bf16.xpose.msra.mxu0 %v3877
  %7072 = vmatpush.bf16.xpose.msra.mxu0 %v3701
  %7073 = vmatmul.bf16.gmra.mxu0 %v1237
  %v7074 = vpop.f32.mrf.mxu0
  %v7075 = vadd.f32 %v7062, %v7074
  %v7076 = vpop.f32.mrf.mxu0
  %7077 = vdwg.mxu0
  %7078 = vmatpush.bf16.xpose.msra.mxu0 0
  %7079 = vmatpush.bf16.xpose.msra.mxu0 0
  %7080 = vmatpush.bf16.xpose.msra.mxu0 0
  %7081 = vmatpush.bf16.xpose.msra.mxu0 0
  %7082 = vmatpush.bf16.xpose.msra.mxu0 %v4230
  %7083 = vmatpush.bf16.xpose.msra.mxu0 %v4054
  %7084 = vmatpush.bf16.xpose.msra.mxu0 %v3878
  %7085 = vmatpush.bf16.xpose.msra.mxu0 %v3702
  %7086 = vmatmul.bf16.gmra.mxu0 %v1238
  %v7087 = vpop.f32.mrf.mxu0
  %v7088 = vadd.f32 %v7075, %v7087
  %v7089 = vpop.f32.mrf.mxu0
  %7090 = vdwg.mxu0
  %7091 = vmatpush.bf16.xpose.msra.mxu0 0
  %7092 = vmatpush.bf16.xpose.msra.mxu0 0
  %7093 = vmatpush.bf16.xpose.msra.mxu0 0
  %7094 = vmatpush.bf16.xpose.msra.mxu0 0
  %7095 = vmatpush.bf16.xpose.msra.mxu0 %v4231
  %7096 = vmatpush.bf16.xpose.msra.mxu0 %v4055
  %7097 = vmatpush.bf16.xpose.msra.mxu0 %v3879
  %7098 = vmatpush.bf16.xpose.msra.mxu0 %v3703
  %7099 = vmatmul.bf16.gmra.mxu0 %v1239
  %v7100 = vpop.f32.mrf.mxu0
  %v7101 = vadd.f32 %v7088, %v7100
  %v7102 = vpop.f32.mrf.mxu0
  %7103 = vdwg.mxu0
  %7104 = vmatpush.bf16.xpose.msra.mxu0 0
  %7105 = vmatpush.bf16.xpose.msra.mxu0 0
  %7106 = vmatpush.bf16.xpose.msra.mxu0 0
  %7107 = vmatpush.bf16.xpose.msra.mxu0 0
  %7108 = vmatpush.bf16.xpose.msra.mxu0 %v4232
  %7109 = vmatpush.bf16.xpose.msra.mxu0 %v4056
  %7110 = vmatpush.bf16.xpose.msra.mxu0 %v3880
  %7111 = vmatpush.bf16.xpose.msra.mxu0 %v3704
  %7112 = vmatmul.bf16.gmra.mxu0 %v1240
  %v7113 = vpop.f32.mrf.mxu0
  %v7114 = vadd.f32 %v7101, %v7113
  %v7115 = vpop.f32.mrf.mxu0
  %7116 = vdwg.mxu0
  %7117 = vmatpush.bf16.xpose.msra.mxu0 0
  %7118 = vmatpush.bf16.xpose.msra.mxu0 0
  %7119 = vmatpush.bf16.xpose.msra.mxu0 0
  %7120 = vmatpush.bf16.xpose.msra.mxu0 0
  %7121 = vmatpush.bf16.xpose.msra.mxu0 %v4233
  %7122 = vmatpush.bf16.xpose.msra.mxu0 %v4057
  %7123 = vmatpush.bf16.xpose.msra.mxu0 %v3881
  %7124 = vmatpush.bf16.xpose.msra.mxu0 %v3705
  %7125 = vmatmul.bf16.gmra.mxu0 %v1241
  %v7126 = vpop.f32.mrf.mxu0
  %v7127 = vadd.f32 %v7114, %v7126
  %v7128 = vpop.f32.mrf.mxu0
  %7129 = vdwg.mxu0
  %7130 = vmatpush.bf16.xpose.msra.mxu0 0
  %7131 = vmatpush.bf16.xpose.msra.mxu0 0
  %7132 = vmatpush.bf16.xpose.msra.mxu0 0
  %7133 = vmatpush.bf16.xpose.msra.mxu0 0
  %7134 = vmatpush.bf16.xpose.msra.mxu0 %v4234
  %7135 = vmatpush.bf16.xpose.msra.mxu0 %v4058
  %7136 = vmatpush.bf16.xpose.msra.mxu0 %v3882
  %7137 = vmatpush.bf16.xpose.msra.mxu0 %v3706
  %7138 = vmatmul.bf16.gmra.mxu0 %v1242
  %v7139 = vpop.f32.mrf.mxu0
  %v7140 = vadd.f32 %v7127, %v7139
  %v7141 = vpop.f32.mrf.mxu0
  %7142 = vdwg.mxu0
  %7143 = vmatpush.bf16.xpose.msra.mxu0 0
  %7144 = vmatpush.bf16.xpose.msra.mxu0 0
  %7145 = vmatpush.bf16.xpose.msra.mxu0 0
  %7146 = vmatpush.bf16.xpose.msra.mxu0 0
  %7147 = vmatpush.bf16.xpose.msra.mxu0 %v4235
  %7148 = vmatpush.bf16.xpose.msra.mxu0 %v4059
  %7149 = vmatpush.bf16.xpose.msra.mxu0 %v3883
  %7150 = vmatpush.bf16.xpose.msra.mxu0 %v3707
  %7151 = vmatmul.bf16.gmra.mxu0 %v1243
  %v7152 = vpop.f32.mrf.mxu0
  %v7153 = vadd.f32 %v7140, %v7152
  %v7154 = vpop.f32.mrf.mxu0
  %7155 = vdwg.mxu0
  %7156 = vmatpush.bf16.xpose.msra.mxu0 0
  %7157 = vmatpush.bf16.xpose.msra.mxu0 0
  %7158 = vmatpush.bf16.xpose.msra.mxu0 0
  %7159 = vmatpush.bf16.xpose.msra.mxu0 0
  %7160 = vmatpush.bf16.xpose.msra.mxu0 %v4236
  %7161 = vmatpush.bf16.xpose.msra.mxu0 %v4060
  %7162 = vmatpush.bf16.xpose.msra.mxu0 %v3884
  %7163 = vmatpush.bf16.xpose.msra.mxu0 %v3708
  %7164 = vmatmul.bf16.gmra.mxu0 %v1244
  %v7165 = vpop.f32.mrf.mxu0
  %v7166 = vadd.f32 %v7153, %v7165
  %v7167 = vpop.f32.mrf.mxu0
  %7168 = vdwg.mxu0
  %7169 = vmatpush.bf16.xpose.msra.mxu0 0
  %7170 = vmatpush.bf16.xpose.msra.mxu0 0
  %7171 = vmatpush.bf16.xpose.msra.mxu0 0
  %7172 = vmatpush.bf16.xpose.msra.mxu0 0
  %7173 = vmatpush.bf16.xpose.msra.mxu0 %v4237
  %7174 = vmatpush.bf16.xpose.msra.mxu0 %v4061
  %7175 = vmatpush.bf16.xpose.msra.mxu0 %v3885
  %7176 = vmatpush.bf16.xpose.msra.mxu0 %v3709
  %7177 = vmatmul.bf16.gmra.mxu0 %v1245
  %v7178 = vpop.f32.mrf.mxu0
  %v7179 = vadd.f32 %v7166, %v7178
  %v7180 = vpop.f32.mrf.mxu0
  %7181 = vdwg.mxu0
  %7182 = vmatpush.bf16.xpose.msra.mxu0 0
  %7183 = vmatpush.bf16.xpose.msra.mxu0 0
  %7184 = vmatpush.bf16.xpose.msra.mxu0 0
  %7185 = vmatpush.bf16.xpose.msra.mxu0 0
  %7186 = vmatpush.bf16.xpose.msra.mxu0 %v4238
  %7187 = vmatpush.bf16.xpose.msra.mxu0 %v4062
  %7188 = vmatpush.bf16.xpose.msra.mxu0 %v3886
  %7189 = vmatpush.bf16.xpose.msra.mxu0 %v3710
  %7190 = vmatmul.bf16.gmra.mxu0 %v1246
  %v7191 = vpop.f32.mrf.mxu0
  %v7192 = vadd.f32 %v7179, %v7191
  %v7193 = vpop.f32.mrf.mxu0
  %7194 = vdwg.mxu0
  %7195 = vmatpush.bf16.xpose.msra.mxu0 0
  %7196 = vmatpush.bf16.xpose.msra.mxu0 0
  %7197 = vmatpush.bf16.xpose.msra.mxu0 0
  %7198 = vmatpush.bf16.xpose.msra.mxu0 0
  %7199 = vmatpush.bf16.xpose.msra.mxu0 %v4239
  %7200 = vmatpush.bf16.xpose.msra.mxu0 %v4063
  %7201 = vmatpush.bf16.xpose.msra.mxu0 %v3887
  %7202 = vmatpush.bf16.xpose.msra.mxu0 %v3711
  %7203 = vmatmul.bf16.gmra.mxu0 %v1247
  %v7204 = vpop.f32.mrf.mxu0
  %v7205 = vadd.f32 %v7192, %v7204
  %v7206 = vpop.f32.mrf.mxu0
  %7207 = vdwg.mxu0
  %7208 = vmatpush.bf16.xpose.msra.mxu0 0
  %7209 = vmatpush.bf16.xpose.msra.mxu0 0
  %7210 = vmatpush.bf16.xpose.msra.mxu0 0
  %7211 = vmatpush.bf16.xpose.msra.mxu0 0
  %7212 = vmatpush.bf16.xpose.msra.mxu0 %v4240
  %7213 = vmatpush.bf16.xpose.msra.mxu0 %v4064
  %7214 = vmatpush.bf16.xpose.msra.mxu0 %v3888
  %7215 = vmatpush.bf16.xpose.msra.mxu0 %v3712
  %7216 = vmatmul.bf16.gmra.mxu0 %v1248
  %v7217 = vpop.f32.mrf.mxu0
  %v7218 = vadd.f32 %v7205, %v7217
  %v7219 = vpop.f32.mrf.mxu0
  %7220 = vdwg.mxu0
  %7221 = vmatpush.bf16.xpose.msra.mxu0 0
  %7222 = vmatpush.bf16.xpose.msra.mxu0 0
  %7223 = vmatpush.bf16.xpose.msra.mxu0 0
  %7224 = vmatpush.bf16.xpose.msra.mxu0 0
  %7225 = vmatpush.bf16.xpose.msra.mxu0 %v4241
  %7226 = vmatpush.bf16.xpose.msra.mxu0 %v4065
  %7227 = vmatpush.bf16.xpose.msra.mxu0 %v3889
  %7228 = vmatpush.bf16.xpose.msra.mxu0 %v3713
  %7229 = vmatmul.bf16.gmra.mxu0 %v1249
  %v7230 = vpop.f32.mrf.mxu0
  %v7231 = vadd.f32 %v7218, %v7230
  %v7232 = vpop.f32.mrf.mxu0
  %7233 = vdwg.mxu0
  %v7234 = vpack.c.bf16 %v7231, %v7231
  %v7235 = vld [vmem:[%s2] sm:$0xff]
  %v7236 = vld [vmem:[%s2 + $0x8] sm:$0xff]
  %v7237 = vld [vmem:[%s2 + $0x10] sm:$0xff]
  %v7238 = vld [vmem:[%s2 + $0x18] sm:$0xff]
  %v7239 = vld [vmem:[%s2 + $0x20] sm:$0xff]
  %v7240 = vld [vmem:[%s2 + $0x28] sm:$0xff]
  %v7241 = vld [vmem:[%s2 + $0x30] sm:$0xff]
  %v7242 = vld [vmem:[%s2 + $0x38] sm:$0xff]
  %v7243 = vld [vmem:[%s3] sm:$0x3]
  %v7245 = vperm.slane %v7243, 0
  %v7246 = vperm.slane %v7243, 1
  %v7257 = vunpack.c.l.b16 %v7235
  %v7258 = vunpack.c.h.b16 %v7235
  %v7259 = vunpack.c.l.b16 %v7236
  %v7260 = vunpack.c.h.b16 %v7236
  %v7261 = vunpack.c.l.b16 %v7237
  %v7262 = vunpack.c.h.b16 %v7237
  %v7263 = vunpack.c.l.b16 %v7238
  %v7264 = vunpack.c.h.b16 %v7238
  %v7265 = vunpack.c.l.b16 %v7239
  %v7266 = vunpack.c.h.b16 %v7239
  %v7267 = vunpack.c.l.b16 %v7240
  %v7268 = vunpack.c.h.b16 %v7240
  %v7269 = vunpack.c.l.b16 %v7241
  %v7270 = vunpack.c.h.b16 %v7241
  %v7271 = vunpack.c.l.b16 %v7242
  %v7272 = vunpack.c.h.b16 %v7242
  %v7273 = vpack.c.b16 %v7259, %v7257
  %v7274 = vpack.c.b16 %v7260, %v7258
  %v7275 = vpack.c.b16 %v7263, %v7261
  %v7276 = vpack.c.b16 %v7264, %v7262
  %v7277 = vpack.c.b16 %v7267, %v7265
  %v7278 = vpack.c.b16 %v7268, %v7266
  %v7279 = vpack.c.b16 %v7271, %v7269
  %v7280 = vpack.c.b16 %v7272, %v7270
  %vm7289 = vcmask 523264
  %v7291 = vsel %vm7289, %v7234, 0
  %7293 = vmatpush.bf16.msra.mxu0 0
  %7294 = vmatpush.bf16.msra.mxu0 0
  %7295 = vmatpush.bf16.msra.mxu0 0
  %7296 = vmatpush.bf16.msra.mxu0 0
  %7297 = vmatpush.bf16.msra.mxu0 %v7279
  %7298 = vmatpush.bf16.msra.mxu0 %v7277
  %7299 = vmatpush.bf16.msra.mxu0 %v7275
  %7300 = vmatpush.bf16.msra.mxu0 %v7273
  %7301 = vmatmul.bf16.gmra.mxu0 %v7291
  %v7302 = vpop.f32.mrf.mxu0
  %v7303 = vadd.f32 %v7245, %v7302
  %v7304 = vpop.f32.mrf.mxu0
  %7305 = vdwg.mxu0
  %7306 = vmatpush.bf16.msra.mxu0 0
  %7307 = vmatpush.bf16.msra.mxu0 0
  %7308 = vmatpush.bf16.msra.mxu0 0
  %7309 = vmatpush.bf16.msra.mxu0 0
  %7310 = vmatpush.bf16.msra.mxu0 %v7280
  %7311 = vmatpush.bf16.msra.mxu0 %v7278
  %7312 = vmatpush.bf16.msra.mxu0 %v7276
  %7313 = vmatpush.bf16.msra.mxu0 %v7274
  %7314 = vmatmul.bf16.gmra.mxu0 %v7291
  %v7315 = vpop.f32.mrf.mxu0
  %v7316 = vadd.f32 %v7246, %v7315
  %v7317 = vpop.f32.mrf.mxu0
  %7318 = vdwg.mxu0
  %7319 = vst [vmem:[%s4] sm:$0xff] %v7303
  %7320 = vst [vmem:[%s4 + $0x8] sm:$0xff] %v7316
  // Predicated region
  $region18: #{model_forward.1} parent=0 // pred_check
    _
  $region19: #{model_forward.1} parent=0 // pred_check_branch
    %7322 = sbr.rel (0) target = $region21
  $region20: #{model_forward.1} parent=0 // pred_region
    _
  $region21: #{model_forward.1} parent=0 // pred_fallthru
    _
  // Predicated region
  $region22: #{model_forward.1} parent=0 // pred_check
    _
  $region23: #{model_forward.1} parent=0 // pred_check_branch
    %7324 = sbr.rel (0) target = $region25
  $region24: #{model_forward.1} parent=0 // pred_region
    _
  $region25: #{model_forward.1} parent=0 // pred_fallthru
    _

</llo_original>
